<compile_context>
chip_gen: v7x
topology: tpu7x:2x2x1
jax: 0.10.0
libtpu: 0.0.40
codegen_flags: <defaults>
</compile_context>

<pallas_src>
import functools

import jax
import jax.numpy as jnp
import numpy as np
from jax.experimental import pallas as pl
from jax.experimental.pallas import tpu as pltpu

BN_EPS = 1e-5
# MXU-native input precision for the two 1x1x1 convs (accumulation stays f32).
MXU_DTYPE = jnp.bfloat16


def _round_up(x, m):
    return (x + m - 1) // m * m


# ------------------------------ fused kernel --------------------------------


def _fused_ir_kernel(*refs, stride, wo_r, has_expand, add_residual):
    """One grid step = one batch sample of the fused InvertedResidual block."""
    if has_expand:
        (x_ref, we_ref, s1_ref, b1_ref, wd_ref, s2_ref, b2_ref,
         wp_ref, s3_ref, b3_ref, o_ref, hid_ref) = refs
    else:
        (x_ref, wd_ref, s2_ref, b2_ref,
         wp_ref, s3_ref, b3_ref, o_ref, hid_ref) = refs

    sd, sh, sw = stride
    D, H, W, Cin = x_ref.shape            # leading N dim is squeezed (None block dim)
    Do, Ho, Wo, Cout = o_ref.shape
    Ch = wd_ref.shape[-1]

    # ---- stage 1: expand 1x1x1 conv + BN + ReLU6, written into a zero-padded
    #      VMEM scratch (the zero border implements padding=1; no HBM jnp.pad).
    #      Re-zeroed every step so it is safe under megacore 'parallel' grids. ----
    hid_ref[...] = jnp.zeros(hid_ref.shape, hid_ref.dtype)
    if has_expand:
        x2 = x_ref[...].reshape(D * H * W, Cin)
        h = jnp.dot(x2.astype(MXU_DTYPE), we_ref[...],
                    preferred_element_type=jnp.float32)
        h = jnp.clip(h * s1_ref[...] + b1_ref[...], 0.0, 6.0)
        hid_ref[1:D + 1, 1:H + 1, 1:W + 1, :] = h.reshape(D, H, W, Ch)
    else:
        hid_ref[1:D + 1, 1:H + 1, 1:W + 1, :] = x_ref[...].astype(hid_ref.dtype)

    # ---- stage 2: 3x3x3 depthwise conv with the stride folded in (only output
    #      points are computed via strided window loads from VMEM) + BN + ReLU6. ----
    def tap(k, n, s):
        return pl.ds(k, n) if s == 1 else pl.ds(k, n, s)

    w_dw = wd_ref[...]                                     # (3, 3, 3, Ch) f32
    acc = jnp.zeros((Do, Ho, wo_r, Ch), jnp.float32)
    for kd in range(3):
        for kh in range(3):
            for kw in range(3):
                win = hid_ref[tap(kd, Do, sd), tap(kh, Ho, sh), tap(kw, wo_r, sw), :]
                acc = acc + win * w_dw[kd:kd + 1, kh:kh + 1, kw:kw + 1, :]
    z = jnp.clip(acc * s2_ref[...].reshape(1, 1, 1, Ch)
                 + b2_ref[...].reshape(1, 1, 1, Ch), 0.0, 6.0)

    # ---- stage 3: project 1x1x1 conv + BN (+ residual), store the output. ----
    y = jnp.dot(z.reshape(Do * Ho * wo_r, Ch).astype(MXU_DTYPE),
                wp_ref[...], preferred_element_type=jnp.float32)
    y = y * s3_ref[...] + b3_ref[...]
    y = y.reshape(Do, Ho, wo_r, Cout)[:, :, :Wo, :]        # drop width pad columns
    if add_residual:
        y = y + x_ref[...]
    o_ref[...] = y.astype(o_ref.dtype)


# --------------------------------- wrapper -----------------------------------


def inverted_residual(x, params, stride, expand_ratio, inp, oup):
    """Forward pass of InvertedResidual. x: (N, D, H, W, inp) float32 (NDHWC)."""
    N, D, H, W, Cin = x.shape
    assert Cin == inp
    sd, sh, sw = stride
    use_res = (stride == (1, 1, 1)) and (inp == oup)
    has_expand = expand_ratio != 1
    Ch = params["hidden"]

    # Output spatial dims for kernel=3, padding=1.
    Do = (D - 1) // sd + 1
    Ho = (H - 1) // sh + 1
    Wo = (W - 1) // sw + 1
    # Work on a width padded to a multiple of 8 inside the kernel so the
    # (.., W, C) <-> (rows, C) reshapes stay sublane-tile aligned; the extra
    # columns read zeros from the scratch halo and are sliced off before store.
    Wo_r = Wo if Wo % 8 == 0 else _round_up(Wo, 8)

    # VMEM scratch for the (zero-padded) hidden activation of one sample.
    Dp = max(D + 2, (Do - 1) * sd + 3)
    Hp = max(H + 2, (Ho - 1) * sh + 3)
    Wp = max(W + 2, (Wo_r - 1) * sw + 3)

    s2, b2 = params["bn2"]
    s3, b3 = params["bn3"]

    args = [x]
    in_specs = [pl.BlockSpec((None, D, H, W, Cin), lambda n: (n, 0, 0, 0, 0))]
    if has_expand:
        s1, b1 = params["bn1"]
        args += [params["w_expand"].astype(MXU_DTYPE),
                 s1.reshape(1, Ch), b1.reshape(1, Ch)]
        in_specs += [
            pl.BlockSpec((Cin, Ch), lambda n: (0, 0)),
            pl.BlockSpec((1, Ch), lambda n: (0, 0)),
            pl.BlockSpec((1, Ch), lambda n: (0, 0)),
        ]
    args += [params["w_dw"], s2.reshape(1, Ch), b2.reshape(1, Ch),
             params["w_proj"].astype(MXU_DTYPE),
             s3.reshape(1, oup), b3.reshape(1, oup)]
    in_specs += [
        pl.BlockSpec((3, 3, 3, Ch), lambda n: (0, 0, 0, 0)),
        pl.BlockSpec((1, Ch), lambda n: (0, 0)),
        pl.BlockSpec((1, Ch), lambda n: (0, 0)),
        pl.BlockSpec((Ch, oup), lambda n: (0, 0)),
        pl.BlockSpec((1, oup), lambda n: (0, 0)),
        pl.BlockSpec((1, oup), lambda n: (0, 0)),
    ]

    kernel = functools.partial(
        _fused_ir_kernel, stride=stride, wo_r=Wo_r,
        has_expand=has_expand, add_residual=use_res)

    return pl.pallas_call(
        kernel,
        grid=(N,),  # one sample per step; 'parallel' shards across v7x's 2 TCs
        in_specs=in_specs,
        out_specs=pl.BlockSpec((None, Do, Ho, Wo, oup), lambda n: (n, 0, 0, 0, 0)),
        out_shape=jax.ShapeDtypeStruct((N, Do, Ho, Wo, oup), jnp.float32),
        scratch_shapes=[pltpu.VMEM((Dp, Hp, Wp, Ch), jnp.float32)],
        compiler_params=pltpu.CompilerParams(
            dimension_semantics=("parallel",),
            # Raise the scoped-VMEM cap (v5e default is 16 MiB) while staying
            # well under v7x's 64 MiB physical VMEM.  For real MobileNet3D
            # shapes re-derive per generation (128 MiB on v5e/v6e, 64 on v7x).
            vmem_limit_bytes=32 * 1024 * 1024,
        ),
    )(*args)


# --------------------------- parameters & reference --------------------------


def _bn_fold(key, c):
    k1, k2, k3, k4 = jax.random.split(key, 4)
    gamma = 1.0 + 0.1 * jax.random.normal(k1, (c,), jnp.float32)
    beta = 0.1 * jax.random.normal(k2, (c,), jnp.float32)
    mean = 0.1 * jax.random.normal(k3, (c,), jnp.float32)
    var = 1.0 + 0.1 * jax.random.uniform(k4, (c,), jnp.float32)
    scale = gamma / jnp.sqrt(var + BN_EPS)
    shift = beta - mean * scale
    return scale, shift


def init_params(key, inp, oup, expand_ratio):
    hidden = int(round(inp * expand_ratio))
    ks = jax.random.split(key, 6)
    p = {"hidden": hidden}
    if expand_ratio != 1:
        p["w_expand"] = 0.2 * jax.random.normal(ks[0], (inp, hidden), jnp.float32)
        p["bn1"] = _bn_fold(ks[1], hidden)
    p["w_dw"] = 0.2 * jax.random.normal(ks[2], (3, 3, 3, hidden), jnp.float32)
    p["bn2"] = _bn_fold(ks[3], hidden)
    p["w_proj"] = 0.2 * jax.random.normal(ks[4], (hidden, oup), jnp.float32)
    p["bn3"] = _bn_fold(ks[5], oup)
    return p


def ref_inverted_residual(x, params, stride, expand_ratio, inp, oup):
    """Pure-JAX f32 reference with identical semantics."""
    def pw(h, w, scale, shift, relu6):
        z = jnp.einsum("ndhwc,ce->ndhwe", h, w) * scale + shift
        return jnp.clip(z, 0.0, 6.0) if relu6 else z

    def dw(h, w, scale, shift, stride):
        N, D, H, W, C = h.shape
        xp = jnp.pad(h, ((0, 0), (1, 1), (1, 1), (1, 1), (0, 0)))
        acc = jnp.zeros_like(h)
        for kd in range(3):
            for kh in range(3):
                for kw in range(3):
                    acc = acc + xp[:, kd:kd + D, kh:kh + H, kw:kw + W, :] * w[kd, kh, kw]
        z = jnp.clip(acc * scale + shift, 0.0, 6.0)
        sd, sh, sw = stride
        return z[:, ::sd, ::sh, ::sw, :]

    use_res = (stride == (1, 1, 1)) and (inp == oup)
    h = x
    if expand_ratio != 1:
        h = pw(h, params["w_expand"], *params["bn1"], True)
    h = dw(h, params["w_dw"], *params["bn2"], stride)
    out = pw(h, params["w_proj"], *params["bn3"], False)
    if use_res:
        out = out + x
    return out


# ----------------------------------- main ------------------------------------


if __name__ == "__main__":
    key = jax.random.PRNGKey(0)
    kx, kp1, kp2, kp3 = jax.random.split(key, 4)

    # Small shapes: N=2, inp=4, D=4, H=W=8 (NDHWC layout).
    N, D, H, W = 2, 4, 8, 8
    inp = 4
    x = jax.random.normal(kx, (N, D, H, W, inp), jnp.float32)

    # bf16 MXU inputs (f32 accumulate) -> compare against f32 reference at 2e-2.
    TOL = dict(rtol=2e-2, atol=2e-2)

    # Case 1: stride=(1,1,1), inp==oup, expand_ratio=2 -> residual connection.
    oup1 = 4
    params1 = init_params(kp1, inp, oup1, 2)
    out1 = jax.block_until_ready(inverted_residual(x, params1, (1, 1, 1), 2, inp, oup1))
    ref1 = ref_inverted_residual(x, params1, (1, 1, 1), 2, inp, oup1)
    assert out1.shape == (N, D, H, W, oup1)
    np.testing.assert_allclose(np.asarray(out1), np.asarray(ref1), **TOL)

    # Case 2: stride=(1,2,2), inp!=oup, expand_ratio=2 -> strided, no residual.
    oup2 = 6
    params2 = init_params(kp2, inp, oup2, 2)
    out2 = jax.block_until_ready(inverted_residual(x, params2, (1, 2, 2), 2, inp, oup2))
    ref2 = ref_inverted_residual(x, params2, (1, 2, 2), 2, inp, oup2)
    assert out2.shape == (N, 4, 4, 4, oup2)
    np.testing.assert_allclose(np.asarray(out2), np.asarray(ref2), **TOL)

    # Case 3: expand_ratio=1 (no expand conv), stride=(1,1,1), inp==oup -> residual.
    oup3 = 4
    params3 = init_params(kp3, inp, oup3, 1)
    out3 = jax.block_until_ready(inverted_residual(x, params3, (1, 1, 1), 1, inp, oup3))
    ref3 = ref_inverted_residual(x, params3, (1, 1, 1), 1, inp, oup3)
    assert out3.shape == (N, D, H, W, oup3)
    np.testing.assert_allclose(np.asarray(out3), np.asarray(ref3), **TOL)

    print("KERNEL_OK")
</pallas_src>

<mosaic_0001>
module attributes {stable_mosaic.version = 11 : i64} {
  func.func @_fused_ir_kernel(%arg0: i32, %arg1: memref<1x4x8x8x4xf32, #tpu.memory_space<vmem>>, %arg2: memref<4x8xbf16, #tpu.memory_space<vmem>>, %arg3: memref<1x8xf32, #tpu.memory_space<vmem>>, %arg4: memref<1x8xf32, #tpu.memory_space<vmem>>, %arg5: memref<3x3x3x8xf32, #tpu.memory_space<vmem>>, %arg6: memref<1x8xf32, #tpu.memory_space<vmem>>, %arg7: memref<1x8xf32, #tpu.memory_space<vmem>>, %arg8: memref<8x4xbf16, #tpu.memory_space<vmem>>, %arg9: memref<1x4xf32, #tpu.memory_space<vmem>>, %arg10: memref<1x4xf32, #tpu.memory_space<vmem>>, %arg11: memref<1x4x8x8x4xf32, #tpu.memory_space<vmem>>, %arg12: memref<6x10x10x8xf32, #tpu.memory_space<vmem>>) attributes {dimension_semantics = [#tpu.dimension_semantics<parallel>], iteration_bounds = array<i64: 2>, scalar_prefetch = 0 : i64, scratch_operands = 1 : i64, tpu.core_type = #tpu.core_type<tc>, window_params = [{transform_indices = @transform_0, window_bounds = array<i64: 1, 4, 8, 8, 4>}, {pipeline_mode = #tpu.pipeline_mode<synchronous>, transform_indices = @transform_1, window_bounds = array<i64: 4, 8>}, {pipeline_mode = #tpu.pipeline_mode<synchronous>, transform_indices = @transform_2, window_bounds = array<i64: 1, 8>}, {pipeline_mode = #tpu.pipeline_mode<synchronous>, transform_indices = @transform_3, window_bounds = array<i64: 1, 8>}, {pipeline_mode = #tpu.pipeline_mode<synchronous>, transform_indices = @transform_4, window_bounds = array<i64: 3, 3, 3, 8>}, {pipeline_mode = #tpu.pipeline_mode<synchronous>, transform_indices = @transform_5, window_bounds = array<i64: 1, 8>}, {pipeline_mode = #tpu.pipeline_mode<synchronous>, transform_indices = @transform_6, window_bounds = array<i64: 1, 8>}, {pipeline_mode = #tpu.pipeline_mode<synchronous>, transform_indices = @transform_7, window_bounds = array<i64: 8, 4>}, {pipeline_mode = #tpu.pipeline_mode<synchronous>, transform_indices = @transform_8, window_bounds = array<i64: 1, 4>}, {pipeline_mode = #tpu.pipeline_mode<synchronous>, transform_indices = @transform_9, window_bounds = array<i64: 1, 4>}, {transform_indices = @transform_10, window_bounds = array<i64: 1, 4, 8, 8, 4>}]} {
    %cst = arith.constant 0.000000e+00 : f32
    %0 = vector.broadcast %cst : f32 to vector<6x10x10x8xf32>
    %c0 = arith.constant 0 : index
    %c0_0 = arith.constant 0 : index
    %c0_1 = arith.constant 0 : index
    %c0_2 = arith.constant 0 : index
    %1 = vector.load %arg12[%c0, %c0_0, %c0_1, %c0_2] : memref<6x10x10x8xf32, #tpu.memory_space<vmem>>, vector<6x10x10x8xf32>
    tpu.vector_store %arg12[%c0, %c0_0, %c0_1, %c0_2], %0 {strides = array<i32>} : memref<6x10x10x8xf32, #tpu.memory_space<vmem>>, vector<6x10x10x8xf32>,
    %c0_3 = arith.constant 0 : index
    %c0_4 = arith.constant 0 : index
    %c0_5 = arith.constant 0 : index
    %c0_6 = arith.constant 0 : index
    %c0_7 = arith.constant 0 : index
    %2 = vector.load %arg1[%c0_3, %c0_4, %c0_5, %c0_6, %c0_7] : memref<1x4x8x8x4xf32, #tpu.memory_space<vmem>>, vector<1x4x8x8x4xf32>
    %3 = vector.shape_cast %2 : vector<1x4x8x8x4xf32> to vector<4x8x8x4xf32>
    %4 = vector.shape_cast %3 : vector<4x8x8x4xf32> to vector<256x4xf32>
    %5 = arith.truncf %4 : vector<256x4xf32> to vector<256x4xbf16>
    %c0_8 = arith.constant 0 : index
    %c0_9 = arith.constant 0 : index
    %6 = vector.load %arg2[%c0_8, %c0_9] : memref<4x8xbf16, #tpu.memory_space<vmem>>, vector<4x8xbf16>
    %cst_10 = arith.constant dense<0.000000e+00> : vector<256x8xf32>
    %7 = tpu.matmul %5, %6, %cst_10 {dimension_numbers = #tpu.dot_dimension_numbers<[1], [0], [0], [1], [0, 0, 1, 1], [], []>} : vector<256x4xbf16>, vector<4x8xbf16>, vector<256x8xf32> -> vector<256x8xf32>
    %c0_11 = arith.constant 0 : index
    %c0_12 = arith.constant 0 : index
    %8 = vector.load %arg3[%c0_11, %c0_12] : memref<1x8xf32, #tpu.memory_space<vmem>>, vector<1x8xf32>
    %9 = vector.broadcast %8 : vector<1x8xf32> to vector<256x8xf32>
    %10 = arith.mulf %7, %9 : vector<256x8xf32>
    %c0_13 = arith.constant 0 : index
    %c0_14 = arith.constant 0 : index
    %11 = vector.load %arg4[%c0_13, %c0_14] : memref<1x8xf32, #tpu.memory_space<vmem>>, vector<1x8xf32>
    %12 = vector.broadcast %11 : vector<1x8xf32> to vector<256x8xf32>
    %13 = arith.addf %10, %12 : vector<256x8xf32>
    %cst_15 = arith.constant 0.000000e+00 : f32
    %cst_16 = arith.constant 6.000000e+00 : f32
    %14 = vector.broadcast %cst_15 : f32 to vector<256x8xf32>
    %15 = arith.maximumf %14, %13 : vector<256x8xf32>
    %16 = vector.broadcast %cst_16 : f32 to vector<256x8xf32>
    %17 = arith.minimumf %16, %15 : vector<256x8xf32>
    %18 = vector.shape_cast %17 : vector<256x8xf32> to vector<4x8x8x8xf32>
    %c1 = arith.constant 1 : index
    %c1_17 = arith.constant 1 : index
    %c1_18 = arith.constant 1 : index
    %c0_19 = arith.constant 0 : index
    %19 = vector.load %arg12[%c1, %c1_17, %c1_18, %c0_19] : memref<6x10x10x8xf32, #tpu.memory_space<vmem>>, vector<4x8x8x8xf32>
    tpu.vector_store %arg12[%c1, %c1_17, %c1_18, %c0_19], %18 {strides = array<i32>} : memref<6x10x10x8xf32, #tpu.memory_space<vmem>>, vector<4x8x8x8xf32>,
    %c0_20 = arith.constant 0 : index
    %c0_21 = arith.constant 0 : index
    %c0_22 = arith.constant 0 : index
    %c0_23 = arith.constant 0 : index
    %20 = vector.load %arg5[%c0_20, %c0_21, %c0_22, %c0_23] : memref<3x3x3x8xf32, #tpu.memory_space<vmem>>, vector<3x3x3x8xf32>
    %cst_24 = arith.constant 0.000000e+00 : f32
    %21 = vector.broadcast %cst_24 : f32 to vector<4x8x8x8xf32>
    %c0_25 = arith.constant 0 : index
    %c0_26 = arith.constant 0 : index
    %c0_27 = arith.constant 0 : index
    %c0_28 = arith.constant 0 : index
    %22 = vector.load %arg12[%c0_25, %c0_26, %c0_27, %c0_28] : memref<6x10x10x8xf32, #tpu.memory_space<vmem>>, vector<4x8x8x8xf32>
    %23 = vector.extract_strided_slice %20 {offsets = [0, 0, 0, 0], sizes = [1, 1, 1, 8], strides = [1, 1, 1, 1]} : vector<3x3x3x8xf32> to vector<1x1x1x8xf32>
    %24 = vector.broadcast %23 : vector<1x1x1x8xf32> to vector<4x8x8x8xf32>
    %25 = arith.mulf %22, %24 : vector<4x8x8x8xf32>
    %26 = arith.addf %21, %25 : vector<4x8x8x8xf32>
    %c0_29 = arith.constant 0 : index
    %c0_30 = arith.constant 0 : index
    %c1_31 = arith.constant 1 : index
    %c0_32 = arith.constant 0 : index
    %27 = vector.load %arg12[%c0_29, %c0_30, %c1_31, %c0_32] : memref<6x10x10x8xf32, #tpu.memory_space<vmem>>, vector<4x8x8x8xf32>
    %28 = vector.extract_strided_slice %20 {offsets = [0, 0, 1, 0], sizes = [1, 1, 1, 8], strides = [1, 1, 1, 1]} : vector<3x3x3x8xf32> to vector<1x1x1x8xf32>
    %29 = vector.broadcast %28 : vector<1x1x1x8xf32> to vector<4x8x8x8xf32>
    %30 = arith.mulf %27, %29 : vector<4x8x8x8xf32>
    %31 = arith.addf %26, %30 : vector<4x8x8x8xf32>
    %c0_33 = arith.constant 0 : index
    %c0_34 = arith.constant 0 : index
    %c2 = arith.constant 2 : index
    %c0_35 = arith.constant 0 : index
    %32 = vector.load %arg12[%c0_33, %c0_34, %c2, %c0_35] : memref<6x10x10x8xf32, #tpu.memory_space<vmem>>, vector<4x8x8x8xf32>
    %33 = vector.extract_strided_slice %20 {offsets = [0, 0, 2, 0], sizes = [1, 1, 1, 8], strides = [1, 1, 1, 1]} : vector<3x3x3x8xf32> to vector<1x1x1x8xf32>
    %34 = vector.broadcast %33 : vector<1x1x1x8xf32> to vector<4x8x8x8xf32>
    %35 = arith.mulf %32, %34 : vector<4x8x8x8xf32>
    %36 = arith.addf %31, %35 : vector<4x8x8x8xf32>
    %c0_36 = arith.constant 0 : index
    %c1_37 = arith.constant 1 : index
    %c0_38 = arith.constant 0 : index
    %c0_39 = arith.constant 0 : index
    %37 = vector.load %arg12[%c0_36, %c1_37, %c0_38, %c0_39] : memref<6x10x10x8xf32, #tpu.memory_space<vmem>>, vector<4x8x8x8xf32>
    %38 = vector.extract_strided_slice %20 {offsets = [0, 1, 0, 0], sizes = [1, 1, 1, 8], strides = [1, 1, 1, 1]} : vector<3x3x3x8xf32> to vector<1x1x1x8xf32>
    %39 = vector.broadcast %38 : vector<1x1x1x8xf32> to vector<4x8x8x8xf32>
    %40 = arith.mulf %37, %39 : vector<4x8x8x8xf32>
    %41 = arith.addf %36, %40 : vector<4x8x8x8xf32>
    %c0_40 = arith.constant 0 : index
    %c1_41 = arith.constant 1 : index
    %c1_42 = arith.constant 1 : index
    %c0_43 = arith.constant 0 : index
    %42 = vector.load %arg12[%c0_40, %c1_41, %c1_42, %c0_43] : memref<6x10x10x8xf32, #tpu.memory_space<vmem>>, vector<4x8x8x8xf32>
    %43 = vector.extract_strided_slice %20 {offsets = [0, 1, 1, 0], sizes = [1, 1, 1, 8], strides = [1, 1, 1, 1]} : vector<3x3x3x8xf32> to vector<1x1x1x8xf32>
    %44 = vector.broadcast %43 : vector<1x1x1x8xf32> to vector<4x8x8x8xf32>
    %45 = arith.mulf %42, %44 : vector<4x8x8x8xf32>
    %46 = arith.addf %41, %45 : vector<4x8x8x8xf32>
    %c0_44 = arith.constant 0 : index
    %c1_45 = arith.constant 1 : index
    %c2_46 = arith.constant 2 : index
    %c0_47 = arith.constant 0 : index
    %47 = vector.load %arg12[%c0_44, %c1_45, %c2_46, %c0_47] : memref<6x10x10x8xf32, #tpu.memory_space<vmem>>, vector<4x8x8x8xf32>
    %48 = vector.extract_strided_slice %20 {offsets = [0, 1, 2, 0], sizes = [1, 1, 1, 8], strides = [1, 1, 1, 1]} : vector<3x3x3x8xf32> to vector<1x1x1x8xf32>
    %49 = vector.broadcast %48 : vector<1x1x1x8xf32> to vector<4x8x8x8xf32>
    %50 = arith.mulf %47, %49 : vector<4x8x8x8xf32>
    %51 = arith.addf %46, %50 : vector<4x8x8x8xf32>
    %c0_48 = arith.constant 0 : index
    %c2_49 = arith.constant 2 : index
    %c0_50 = arith.constant 0 : index
    %c0_51 = arith.constant 0 : index
    %52 = vector.load %arg12[%c0_48, %c2_49, %c0_50, %c0_51] : memref<6x10x10x8xf32, #tpu.memory_space<vmem>>, vector<4x8x8x8xf32>
    %53 = vector.extract_strided_slice %20 {offsets = [0, 2, 0, 0], sizes = [1, 1, 1, 8], strides = [1, 1, 1, 1]} : vector<3x3x3x8xf32> to vector<1x1x1x8xf32>
    %54 = vector.broadcast %53 : vector<1x1x1x8xf32> to vector<4x8x8x8xf32>
    %55 = arith.mulf %52, %54 : vector<4x8x8x8xf32>
    %56 = arith.addf %51, %55 : vector<4x8x8x8xf32>
    %c0_52 = arith.constant 0 : index
    %c2_53 = arith.constant 2 : index
    %c1_54 = arith.constant 1 : index
    %c0_55 = arith.constant 0 : index
    %57 = vector.load %arg12[%c0_52, %c2_53, %c1_54, %c0_55] : memref<6x10x10x8xf32, #tpu.memory_space<vmem>>, vector<4x8x8x8xf32>
    %58 = vector.extract_strided_slice %20 {offsets = [0, 2, 1, 0], sizes = [1, 1, 1, 8], strides = [1, 1, 1, 1]} : vector<3x3x3x8xf32> to vector<1x1x1x8xf32>
    %59 = vector.broadcast %58 : vector<1x1x1x8xf32> to vector<4x8x8x8xf32>
    %60 = arith.mulf %57, %59 : vector<4x8x8x8xf32>
    %61 = arith.addf %56, %60 : vector<4x8x8x8xf32>
    %c0_56 = arith.constant 0 : index
    %c2_57 = arith.constant 2 : index
    %c2_58 = arith.constant 2 : index
    %c0_59 = arith.constant 0 : index
    %62 = vector.load %arg12[%c0_56, %c2_57, %c2_58, %c0_59] : memref<6x10x10x8xf32, #tpu.memory_space<vmem>>, vector<4x8x8x8xf32>
    %63 = vector.extract_strided_slice %20 {offsets = [0, 2, 2, 0], sizes = [1, 1, 1, 8], strides = [1, 1, 1, 1]} : vector<3x3x3x8xf32> to vector<1x1x1x8xf32>
    %64 = vector.broadcast %63 : vector<1x1x1x8xf32> to vector<4x8x8x8xf32>
    %65 = arith.mulf %62, %64 : vector<4x8x8x8xf32>
    %66 = arith.addf %61, %65 : vector<4x8x8x8xf32>
    %c1_60 = arith.constant 1 : index
    %c0_61 = arith.constant 0 : index
    %c0_62 = arith.constant 0 : index
    %c0_63 = arith.constant 0 : index
    %67 = vector.load %arg12[%c1_60, %c0_61, %c0_62, %c0_63] : memref<6x10x10x8xf32, #tpu.memory_space<vmem>>, vector<4x8x8x8xf32>
    %68 = vector.extract_strided_slice %20 {offsets = [1, 0, 0, 0], sizes = [1, 1, 1, 8], strides = [1, 1, 1, 1]} : vector<3x3x3x8xf32> to vector<1x1x1x8xf32>
    %69 = vector.broadcast %68 : vector<1x1x1x8xf32> to vector<4x8x8x8xf32>
    %70 = arith.mulf %67, %69 : vector<4x8x8x8xf32>
    %71 = arith.addf %66, %70 : vector<4x8x8x8xf32>
    %c1_64 = arith.constant 1 : index
    %c0_65 = arith.constant 0 : index
    %c1_66 = arith.constant 1 : index
    %c0_67 = arith.constant 0 : index
    %72 = vector.load %arg12[%c1_64, %c0_65, %c1_66, %c0_67] : memref<6x10x10x8xf32, #tpu.memory_space<vmem>>, vector<4x8x8x8xf32>
    %73 = vector.extract_strided_slice %20 {offsets = [1, 0, 1, 0], sizes = [1, 1, 1, 8], strides = [1, 1, 1, 1]} : vector<3x3x3x8xf32> to vector<1x1x1x8xf32>
    %74 = vector.broadcast %73 : vector<1x1x1x8xf32> to vector<4x8x8x8xf32>
    %75 = arith.mulf %72, %74 : vector<4x8x8x8xf32>
    %76 = arith.addf %71, %75 : vector<4x8x8x8xf32>
    %c1_68 = arith.constant 1 : index
    %c0_69 = arith.constant 0 : index
    %c2_70 = arith.constant 2 : index
    %c0_71 = arith.constant 0 : index
    %77 = vector.load %arg12[%c1_68, %c0_69, %c2_70, %c0_71] : memref<6x10x10x8xf32, #tpu.memory_space<vmem>>, vector<4x8x8x8xf32>
    %78 = vector.extract_strided_slice %20 {offsets = [1, 0, 2, 0], sizes = [1, 1, 1, 8], strides = [1, 1, 1, 1]} : vector<3x3x3x8xf32> to vector<1x1x1x8xf32>
    %79 = vector.broadcast %78 : vector<1x1x1x8xf32> to vector<4x8x8x8xf32>
    %80 = arith.mulf %77, %79 : vector<4x8x8x8xf32>
    %81 = arith.addf %76, %80 : vector<4x8x8x8xf32>
    %c1_72 = arith.constant 1 : index
    %c1_73 = arith.constant 1 : index
    %c0_74 = arith.constant 0 : index
    %c0_75 = arith.constant 0 : index
    %82 = vector.load %arg12[%c1_72, %c1_73, %c0_74, %c0_75] : memref<6x10x10x8xf32, #tpu.memory_space<vmem>>, vector<4x8x8x8xf32>
    %83 = vector.extract_strided_slice %20 {offsets = [1, 1, 0, 0], sizes = [1, 1, 1, 8], strides = [1, 1, 1, 1]} : vector<3x3x3x8xf32> to vector<1x1x1x8xf32>
    %84 = vector.broadcast %83 : vector<1x1x1x8xf32> to vector<4x8x8x8xf32>
    %85 = arith.mulf %82, %84 : vector<4x8x8x8xf32>
    %86 = arith.addf %81, %85 : vector<4x8x8x8xf32>
    %c1_76 = arith.constant 1 : index
    %c1_77 = arith.constant 1 : index
    %c1_78 = arith.constant 1 : index
    %c0_79 = arith.constant 0 : index
    %87 = vector.load %arg12[%c1_76, %c1_77, %c1_78, %c0_79] : memref<6x10x10x8xf32, #tpu.memory_space<vmem>>, vector<4x8x8x8xf32>
    %88 = vector.extract_strided_slice %20 {offsets = [1, 1, 1, 0], sizes = [1, 1, 1, 8], strides = [1, 1, 1, 1]} : vector<3x3x3x8xf32> to vector<1x1x1x8xf32>
    %89 = vector.broadcast %88 : vector<1x1x1x8xf32> to vector<4x8x8x8xf32>
    %90 = arith.mulf %87, %89 : vector<4x8x8x8xf32>
    %91 = arith.addf %86, %90 : vector<4x8x8x8xf32>
    %c1_80 = arith.constant 1 : index
    %c1_81 = arith.constant 1 : index
    %c2_82 = arith.constant 2 : index
    %c0_83 = arith.constant 0 : index
    %92 = vector.load %arg12[%c1_80, %c1_81, %c2_82, %c0_83] : memref<6x10x10x8xf32, #tpu.memory_space<vmem>>, vector<4x8x8x8xf32>
    %93 = vector.extract_strided_slice %20 {offsets = [1, 1, 2, 0], sizes = [1, 1, 1, 8], strides = [1, 1, 1, 1]} : vector<3x3x3x8xf32> to vector<1x1x1x8xf32>
    %94 = vector.broadcast %93 : vector<1x1x1x8xf32> to vector<4x8x8x8xf32>
    %95 = arith.mulf %92, %94 : vector<4x8x8x8xf32>
    %96 = arith.addf %91, %95 : vector<4x8x8x8xf32>
    %c1_84 = arith.constant 1 : index
    %c2_85 = arith.constant 2 : index
    %c0_86 = arith.constant 0 : index
    %c0_87 = arith.constant 0 : index
    %97 = vector.load %arg12[%c1_84, %c2_85, %c0_86, %c0_87] : memref<6x10x10x8xf32, #tpu.memory_space<vmem>>, vector<4x8x8x8xf32>
    %98 = vector.extract_strided_slice %20 {offsets = [1, 2, 0, 0], sizes = [1, 1, 1, 8], strides = [1, 1, 1, 1]} : vector<3x3x3x8xf32> to vector<1x1x1x8xf32>
    %99 = vector.broadcast %98 : vector<1x1x1x8xf32> to vector<4x8x8x8xf32>
    %100 = arith.mulf %97, %99 : vector<4x8x8x8xf32>
    %101 = arith.addf %96, %100 : vector<4x8x8x8xf32>
    %c1_88 = arith.constant 1 : index
    %c2_89 = arith.constant 2 : index
    %c1_90 = arith.constant 1 : index
    %c0_91 = arith.constant 0 : index
    %102 = vector.load %arg12[%c1_88, %c2_89, %c1_90, %c0_91] : memref<6x10x10x8xf32, #tpu.memory_space<vmem>>, vector<4x8x8x8xf32>
    %103 = vector.extract_strided_slice %20 {offsets = [1, 2, 1, 0], sizes = [1, 1, 1, 8], strides = [1, 1, 1, 1]} : vector<3x3x3x8xf32> to vector<1x1x1x8xf32>
    %104 = vector.broadcast %103 : vector<1x1x1x8xf32> to vector<4x8x8x8xf32>
    %105 = arith.mulf %102, %104 : vector<4x8x8x8xf32>
    %106 = arith.addf %101, %105 : vector<4x8x8x8xf32>
    %c1_92 = arith.constant 1 : index
    %c2_93 = arith.constant 2 : index
    %c2_94 = arith.constant 2 : index
    %c0_95 = arith.constant 0 : index
    %107 = vector.load %arg12[%c1_92, %c2_93, %c2_94, %c0_95] : memref<6x10x10x8xf32, #tpu.memory_space<vmem>>, vector<4x8x8x8xf32>
    %108 = vector.extract_strided_slice %20 {offsets = [1, 2, 2, 0], sizes = [1, 1, 1, 8], strides = [1, 1, 1, 1]} : vector<3x3x3x8xf32> to vector<1x1x1x8xf32>
    %109 = vector.broadcast %108 : vector<1x1x1x8xf32> to vector<4x8x8x8xf32>
    %110 = arith.mulf %107, %109 : vector<4x8x8x8xf32>
    %111 = arith.addf %106, %110 : vector<4x8x8x8xf32>
    %c2_96 = arith.constant 2 : index
    %c0_97 = arith.constant 0 : index
    %c0_98 = arith.constant 0 : index
    %c0_99 = arith.constant 0 : index
    %112 = vector.load %arg12[%c2_96, %c0_97, %c0_98, %c0_99] : memref<6x10x10x8xf32, #tpu.memory_space<vmem>>, vector<4x8x8x8xf32>
    %113 = vector.extract_strided_slice %20 {offsets = [2, 0, 0, 0], sizes = [1, 1, 1, 8], strides = [1, 1, 1, 1]} : vector<3x3x3x8xf32> to vector<1x1x1x8xf32>
    %114 = vector.broadcast %113 : vector<1x1x1x8xf32> to vector<4x8x8x8xf32>
    %115 = arith.mulf %112, %114 : vector<4x8x8x8xf32>
    %116 = arith.addf %111, %115 : vector<4x8x8x8xf32>
    %c2_100 = arith.constant 2 : index
    %c0_101 = arith.constant 0 : index
    %c1_102 = arith.constant 1 : index
    %c0_103 = arith.constant 0 : index
    %117 = vector.load %arg12[%c2_100, %c0_101, %c1_102, %c0_103] : memref<6x10x10x8xf32, #tpu.memory_space<vmem>>, vector<4x8x8x8xf32>
    %118 = vector.extract_strided_slice %20 {offsets = [2, 0, 1, 0], sizes = [1, 1, 1, 8], strides = [1, 1, 1, 1]} : vector<3x3x3x8xf32> to vector<1x1x1x8xf32>
    %119 = vector.broadcast %118 : vector<1x1x1x8xf32> to vector<4x8x8x8xf32>
    %120 = arith.mulf %117, %119 : vector<4x8x8x8xf32>
    %121 = arith.addf %116, %120 : vector<4x8x8x8xf32>
    %c2_104 = arith.constant 2 : index
    %c0_105 = arith.constant 0 : index
    %c2_106 = arith.constant 2 : index
    %c0_107 = arith.constant 0 : index
    %122 = vector.load %arg12[%c2_104, %c0_105, %c2_106, %c0_107] : memref<6x10x10x8xf32, #tpu.memory_space<vmem>>, vector<4x8x8x8xf32>
    %123 = vector.extract_strided_slice %20 {offsets = [2, 0, 2, 0], sizes = [1, 1, 1, 8], strides = [1, 1, 1, 1]} : vector<3x3x3x8xf32> to vector<1x1x1x8xf32>
    %124 = vector.broadcast %123 : vector<1x1x1x8xf32> to vector<4x8x8x8xf32>
    %125 = arith.mulf %122, %124 : vector<4x8x8x8xf32>
    %126 = arith.addf %121, %125 : vector<4x8x8x8xf32>
    %c2_108 = arith.constant 2 : index
    %c1_109 = arith.constant 1 : index
    %c0_110 = arith.constant 0 : index
    %c0_111 = arith.constant 0 : index
    %127 = vector.load %arg12[%c2_108, %c1_109, %c0_110, %c0_111] : memref<6x10x10x8xf32, #tpu.memory_space<vmem>>, vector<4x8x8x8xf32>
    %128 = vector.extract_strided_slice %20 {offsets = [2, 1, 0, 0], sizes = [1, 1, 1, 8], strides = [1, 1, 1, 1]} : vector<3x3x3x8xf32> to vector<1x1x1x8xf32>
    %129 = vector.broadcast %128 : vector<1x1x1x8xf32> to vector<4x8x8x8xf32>
    %130 = arith.mulf %127, %129 : vector<4x8x8x8xf32>
    %131 = arith.addf %126, %130 : vector<4x8x8x8xf32>
    %c2_112 = arith.constant 2 : index
    %c1_113 = arith.constant 1 : index
    %c1_114 = arith.constant 1 : index
    %c0_115 = arith.constant 0 : index
    %132 = vector.load %arg12[%c2_112, %c1_113, %c1_114, %c0_115] : memref<6x10x10x8xf32, #tpu.memory_space<vmem>>, vector<4x8x8x8xf32>
    %133 = vector.extract_strided_slice %20 {offsets = [2, 1, 1, 0], sizes = [1, 1, 1, 8], strides = [1, 1, 1, 1]} : vector<3x3x3x8xf32> to vector<1x1x1x8xf32>
    %134 = vector.broadcast %133 : vector<1x1x1x8xf32> to vector<4x8x8x8xf32>
    %135 = arith.mulf %132, %134 : vector<4x8x8x8xf32>
    %136 = arith.addf %131, %135 : vector<4x8x8x8xf32>
    %c2_116 = arith.constant 2 : index
    %c1_117 = arith.constant 1 : index
    %c2_118 = arith.constant 2 : index
    %c0_119 = arith.constant 0 : index
    %137 = vector.load %arg12[%c2_116, %c1_117, %c2_118, %c0_119] : memref<6x10x10x8xf32, #tpu.memory_space<vmem>>, vector<4x8x8x8xf32>
    %138 = vector.extract_strided_slice %20 {offsets = [2, 1, 2, 0], sizes = [1, 1, 1, 8], strides = [1, 1, 1, 1]} : vector<3x3x3x8xf32> to vector<1x1x1x8xf32>
    %139 = vector.broadcast %138 : vector<1x1x1x8xf32> to vector<4x8x8x8xf32>
    %140 = arith.mulf %137, %139 : vector<4x8x8x8xf32>
    %141 = arith.addf %136, %140 : vector<4x8x8x8xf32>
    %c2_120 = arith.constant 2 : index
    %c2_121 = arith.constant 2 : index
    %c0_122 = arith.constant 0 : index
    %c0_123 = arith.constant 0 : index
    %142 = vector.load %arg12[%c2_120, %c2_121, %c0_122, %c0_123] : memref<6x10x10x8xf32, #tpu.memory_space<vmem>>, vector<4x8x8x8xf32>
    %143 = vector.extract_strided_slice %20 {offsets = [2, 2, 0, 0], sizes = [1, 1, 1, 8], strides = [1, 1, 1, 1]} : vector<3x3x3x8xf32> to vector<1x1x1x8xf32>
    %144 = vector.broadcast %143 : vector<1x1x1x8xf32> to vector<4x8x8x8xf32>
    %145 = arith.mulf %142, %144 : vector<4x8x8x8xf32>
    %146 = arith.addf %141, %145 : vector<4x8x8x8xf32>
    %c2_124 = arith.constant 2 : index
    %c2_125 = arith.constant 2 : index
    %c1_126 = arith.constant 1 : index
    %c0_127 = arith.constant 0 : index
    %147 = vector.load %arg12[%c2_124, %c2_125, %c1_126, %c0_127] : memref<6x10x10x8xf32, #tpu.memory_space<vmem>>, vector<4x8x8x8xf32>
    %148 = vector.extract_strided_slice %20 {offsets = [2, 2, 1, 0], sizes = [1, 1, 1, 8], strides = [1, 1, 1, 1]} : vector<3x3x3x8xf32> to vector<1x1x1x8xf32>
    %149 = vector.broadcast %148 : vector<1x1x1x8xf32> to vector<4x8x8x8xf32>
    %150 = arith.mulf %147, %149 : vector<4x8x8x8xf32>
    %151 = arith.addf %146, %150 : vector<4x8x8x8xf32>
    %c2_128 = arith.constant 2 : index
    %c2_129 = arith.constant 2 : index
    %c2_130 = arith.constant 2 : index
    %c0_131 = arith.constant 0 : index
    %152 = vector.load %arg12[%c2_128, %c2_129, %c2_130, %c0_131] : memref<6x10x10x8xf32, #tpu.memory_space<vmem>>, vector<4x8x8x8xf32>
    %153 = vector.extract_strided_slice %20 {offsets = [2, 2, 2, 0], sizes = [1, 1, 1, 8], strides = [1, 1, 1, 1]} : vector<3x3x3x8xf32> to vector<1x1x1x8xf32>
    %154 = vector.broadcast %153 : vector<1x1x1x8xf32> to vector<4x8x8x8xf32>
    %155 = arith.mulf %152, %154 : vector<4x8x8x8xf32>
    %156 = arith.addf %151, %155 : vector<4x8x8x8xf32>
    %c0_132 = arith.constant 0 : index
    %c0_133 = arith.constant 0 : index
    %157 = vector.load %arg6[%c0_132, %c0_133] : memref<1x8xf32, #tpu.memory_space<vmem>>, vector<1x8xf32>
    %158 = vector.shape_cast %157 : vector<1x8xf32> to vector<1x1x1x8xf32>
    %159 = vector.broadcast %158 : vector<1x1x1x8xf32> to vector<4x8x8x8xf32>
    %160 = arith.mulf %156, %159 : vector<4x8x8x8xf32>
    %c0_134 = arith.constant 0 : index
    %c0_135 = arith.constant 0 : index
    %161 = vector.load %arg7[%c0_134, %c0_135] : memref<1x8xf32, #tpu.memory_space<vmem>>, vector<1x8xf32>
    %162 = vector.shape_cast %161 : vector<1x8xf32> to vector<1x1x1x8xf32>
    %163 = vector.broadcast %162 : vector<1x1x1x8xf32> to vector<4x8x8x8xf32>
    %164 = arith.addf %160, %163 : vector<4x8x8x8xf32>
    %cst_136 = arith.constant 0.000000e+00 : f32
    %cst_137 = arith.constant 6.000000e+00 : f32
    %165 = vector.broadcast %cst_136 : f32 to vector<4x8x8x8xf32>
    %166 = arith.maximumf %165, %164 : vector<4x8x8x8xf32>
    %167 = vector.broadcast %cst_137 : f32 to vector<4x8x8x8xf32>
    %168 = arith.minimumf %167, %166 : vector<4x8x8x8xf32>
    %169 = vector.shape_cast %168 : vector<4x8x8x8xf32> to vector<256x8xf32>
    %170 = arith.truncf %169 : vector<256x8xf32> to vector<256x8xbf16>
    %c0_138 = arith.constant 0 : index
    %c0_139 = arith.constant 0 : index
    %171 = vector.load %arg8[%c0_138, %c0_139] : memref<8x4xbf16, #tpu.memory_space<vmem>>, vector<8x4xbf16>
    %cst_140 = arith.constant dense<0.000000e+00> : vector<256x4xf32>
    %172 = tpu.matmul %170, %171, %cst_140 {dimension_numbers = #tpu.dot_dimension_numbers<[1], [0], [0], [1], [0, 0, 1, 1], [], []>} : vector<256x8xbf16>, vector<8x4xbf16>, vector<256x4xf32> -> vector<256x4xf32>
    %c0_141 = arith.constant 0 : index
    %c0_142 = arith.constant 0 : index
    %173 = vector.load %arg9[%c0_141, %c0_142] : memref<1x4xf32, #tpu.memory_space<vmem>>, vector<1x4xf32>
    %174 = vector.broadcast %173 : vector<1x4xf32> to vector<256x4xf32>
    %175 = arith.mulf %172, %174 : vector<256x4xf32>
    %c0_143 = arith.constant 0 : index
    %c0_144 = arith.constant 0 : index
    %176 = vector.load %arg10[%c0_143, %c0_144] : memref<1x4xf32, #tpu.memory_space<vmem>>, vector<1x4xf32>
    %177 = vector.broadcast %176 : vector<1x4xf32> to vector<256x4xf32>
    %178 = arith.addf %175, %177 : vector<256x4xf32>
    %179 = vector.shape_cast %178 : vector<256x4xf32> to vector<4x8x8x4xf32>
    %c0_145 = arith.constant 0 : index
    %c0_146 = arith.constant 0 : index
    %c0_147 = arith.constant 0 : index
    %c0_148 = arith.constant 0 : index
    %c0_149 = arith.constant 0 : index
    %180 = vector.load %arg1[%c0_145, %c0_146, %c0_147, %c0_148, %c0_149] : memref<1x4x8x8x4xf32, #tpu.memory_space<vmem>>, vector<1x4x8x8x4xf32>
    %181 = vector.shape_cast %180 : vector<1x4x8x8x4xf32> to vector<4x8x8x4xf32>
    %182 = arith.addf %179, %181 : vector<4x8x8x4xf32>
    %c0_150 = arith.constant 0 : index
    %c0_151 = arith.constant 0 : index
    %c0_152 = arith.constant 0 : index
    %c0_153 = arith.constant 0 : index
    %c0_154 = arith.constant 0 : index
    %183 = vector.load %arg11[%c0_150, %c0_151, %c0_152, %c0_153, %c0_154] : memref<1x4x8x8x4xf32, #tpu.memory_space<vmem>>, vector<1x4x8x8x4xf32>
    %184 = vector.shape_cast %183 : vector<1x4x8x8x4xf32> to vector<4x8x8x4xf32>
    %185 = vector.shape_cast %182 : vector<4x8x8x4xf32> to vector<1x4x8x8x4xf32>
    tpu.vector_store %arg11[%c0_150, %c0_151, %c0_152, %c0_153, %c0_154], %185 {strides = array<i32>} : memref<1x4x8x8x4xf32, #tpu.memory_space<vmem>>, vector<1x4x8x8x4xf32>,
    return
  }
  func.func @transform_0(%arg0: i32) -> (i32, i32, i32, i32, i32) {
    %c0_i32 = arith.constant 0 : i32
    %c0_i32_0 = arith.constant 0 : i32
    %c0_i32_1 = arith.constant 0 : i32
    %c0_i32_2 = arith.constant 0 : i32
    %c0_i32_3 = arith.constant 0 : i32
    return %arg0, %c0_i32, %c0_i32_0, %c0_i32_1, %c0_i32_2 : i32, i32, i32, i32, i32
  }
  func.func @transform_1(%arg0: i32) -> (i32, i32) {
    %c0_i32 = arith.constant 0 : i32
    %c0_i32_0 = arith.constant 0 : i32
    %c0_i32_1 = arith.constant 0 : i32
    return %c0_i32, %c0_i32_0 : i32, i32
  }
  func.func @transform_2(%arg0: i32) -> (i32, i32) {
    %c0_i32 = arith.constant 0 : i32
    %c0_i32_0 = arith.constant 0 : i32
    %c0_i32_1 = arith.constant 0 : i32
    return %c0_i32, %c0_i32_0 : i32, i32
  }
  func.func @transform_3(%arg0: i32) -> (i32, i32) {
    %c0_i32 = arith.constant 0 : i32
    %c0_i32_0 = arith.constant 0 : i32
    %c0_i32_1 = arith.constant 0 : i32
    return %c0_i32, %c0_i32_0 : i32, i32
  }
  func.func @transform_4(%arg0: i32) -> (i32, i32, i32, i32) {
    %c0_i32 = arith.constant 0 : i32
    %c0_i32_0 = arith.constant 0 : i32
    %c0_i32_1 = arith.constant 0 : i32
    %c0_i32_2 = arith.constant 0 : i32
    %c0_i32_3 = arith.constant 0 : i32
    return %c0_i32, %c0_i32_0, %c0_i32_1, %c0_i32_2 : i32, i32, i32, i32
  }
  func.func @transform_5(%arg0: i32) -> (i32, i32) {
    %c0_i32 = arith.constant 0 : i32
    %c0_i32_0 = arith.constant 0 : i32
    %c0_i32_1 = arith.constant 0 : i32
    return %c0_i32, %c0_i32_0 : i32, i32
  }
  func.func @transform_6(%arg0: i32) -> (i32, i32) {
    %c0_i32 = arith.constant 0 : i32
    %c0_i32_0 = arith.constant 0 : i32
    %c0_i32_1 = arith.constant 0 : i32
    return %c0_i32, %c0_i32_0 : i32, i32
  }
  func.func @transform_7(%arg0: i32) -> (i32, i32) {
    %c0_i32 = arith.constant 0 : i32
    %c0_i32_0 = arith.constant 0 : i32
    %c0_i32_1 = arith.constant 0 : i32
    return %c0_i32, %c0_i32_0 : i32, i32
  }
  func.func @transform_8(%arg0: i32) -> (i32, i32) {
    %c0_i32 = arith.constant 0 : i32
    %c0_i32_0 = arith.constant 0 : i32
    %c0_i32_1 = arith.constant 0 : i32
    return %c0_i32, %c0_i32_0 : i32, i32
  }
  func.func @transform_9(%arg0: i32) -> (i32, i32) {
    %c0_i32 = arith.constant 0 : i32
    %c0_i32_0 = arith.constant 0 : i32
    %c0_i32_1 = arith.constant 0 : i32
    return %c0_i32, %c0_i32_0 : i32, i32
  }
  func.func @transform_10(%arg0: i32) -> (i32, i32, i32, i32, i32) {
    %c0_i32 = arith.constant 0 : i32
    %c0_i32_0 = arith.constant 0 : i32
    %c0_i32_1 = arith.constant 0 : i32
    %c0_i32_2 = arith.constant 0 : i32
    %c0_i32_3 = arith.constant 0 : i32
    return %arg0, %c0_i32, %c0_i32_0, %c0_i32_1, %c0_i32_2 : i32, i32, i32, i32, i32
  }
}

</mosaic_0001>

<llo_original>
// kernel: tpu_custom_call.1
$region0: #{tpu_custom_call.1}
  #allocation0 [shape = 'u32[]', space=smem, size = 0x4, offset = 0x4, fixed_abs, tag = 'smem constant byte address 0x4 - core index']
  #allocation1 [shape = 'u32[144,128]{1,0:T(1,128)}', space=vmem, size = 0x12000, scoped, tag = 'internal scratch']
  #allocation2 [shape = 'f32[6,10,10,8]{3,2,1,0:T(8,128)}', space=vmem, size = 0x78000, scoped, tag = 'scratch operand']
  %s0 = inlined_call_operand.vmem [shape: f32[2,4,8,8,4], index: 0, kind: input, shape index: {}]
  %s1 = inlined_call_operand.vmem [shape: bf16[4,8], index: 1, kind: input, shape index: {}]
  %s2 = inlined_call_operand.vmem [shape: f32[1,8], index: 2, kind: input, shape index: {}]
  %s3 = inlined_call_operand.vmem [shape: f32[1,8], index: 3, kind: input, shape index: {}]
  %s4 = inlined_call_operand.vmem [shape: f32[3,3,3,8], index: 4, kind: input, shape index: {}]
  %s5 = inlined_call_operand.vmem [shape: f32[1,8], index: 5, kind: input, shape index: {}]
  %s6 = inlined_call_operand.vmem [shape: f32[1,8], index: 6, kind: input, shape index: {}]
  %s7 = inlined_call_operand.vmem [shape: bf16[8,4], index: 7, kind: input, shape index: {}]
  %s8 = inlined_call_operand.vmem [shape: f32[1,4], index: 8, kind: input, shape index: {}]
  %s9 = inlined_call_operand.vmem [shape: f32[1,4], index: 9, kind: input, shape index: {}]
  %s10 = inlined_call_operand.vmem [shape: f32[2,4,8,8,4], index: 10, kind: output, shape index: {}]
  %s11 = sld [smem:[#allocation0]]
  $region73: #{tpu_custom_call.1} parent=0
    _
  %s13 = ssub.s32 1, %s11
  %s14 = scalar_select 0, %s13, %s11
  loop: start=0, step=1, limit=4
  $region2: #{tpu_custom_call.1} parent=0 // loop_pre_header
    _
  $region3: #{tpu_custom_call.1} parent=0 // loop_header
    %s16 = sphi 0, %s20
    %p17 = scmp.ge.s32.totalorder %s16, 4
    %s26 = sphi 0, %s28
    %s29 = sphi 0, %s26
    %s30 = sphi 0, %s29
    %s46 = sphi 0, %s30
    %s50 = sphi 0, %s50
    %s52 = sphi 0, %s50
    %s53 = sphi 0, %s52
    %s67 = sphi 0, %s53
    %s71 = sphi 0, %s71
    %s73 = sphi 0, %s71
    %s74 = sphi 0, %s73
    %s88 = sphi 0, %s74
    %s92 = sphi 0, %s92
    %s94 = sphi 0, %s92
    %s95 = sphi 0, %s94
    %s109 = sphi 0, %s95
    %s113 = sphi 0, %s113
    %s115 = sphi 0, %s113
    %s116 = sphi 0, %s115
    %s130 = sphi 0, %s116
    %s134 = sphi 0, %s134
    %s136 = sphi 0, %s134
    %s137 = sphi 0, %s136
    %s151 = sphi 0, %s137
    %s155 = sphi 0, %s155
    %s157 = sphi 0, %s155
    %s158 = sphi 0, %s157
    %s172 = sphi 0, %s158
    %s176 = sphi 0, %s176
    %s178 = sphi 0, %s176
    %s179 = sphi 0, %s178
    %s193 = sphi 0, %s179
    %s197 = sphi 0, %s197
    %s199 = sphi 0, %s197
    %s200 = sphi 0, %s199
    %s214 = sphi 0, %s200
    %s218 = sphi 0, %s218
    %s220 = sphi 0, %s218
    %s221 = sphi 0, %s220
    %s235 = sphi 0, %s221
    %s241 = sphi 0, %s243
    %s244 = sphi 0, %s241
    %s245 = sphi 0, %s244
    %s261 = sphi 0, %s245
  $region4: #{tpu_custom_call.1} parent=0 // loop_header_branch
    %19 = sbr.rel (%p17) target = $region8
  $region5: #{tpu_custom_call.1} parent=0 // loop_body
    %s21 = ssub.s32 %s16, 1
    %s22 = ssub.s32 %s16, 2
    %s23 = sadd.s32 %s16, 1
    %s24 = ssub.s32 %s16, %s23
    %p25 = scmp.eq.s32.totalorder %s24, 0
    %s27 = sadd.s32 %s26, 1
    %s28 = scalar_select %p25, %s26, %s27
    %p31 = pneg %p25
    %p32 = scmp.eq.s32.totalorder %s16, 1
    %p33 = por %p31, %p32
    %p34 = scmp.ne.s32.totalorder %s26, %s29
    %p35 = scmp.eq.s32.totalorder %s16, 0
    %p36 = por %p34, %p35
    %p37 = scmp.ne.s32.totalorder %s26, %s29
    %p38 = scmp.eq.s32.totalorder %s21, 1
    %p39 = por %p37, %p38
    %p40 = scmp.ne.s32.totalorder %s29, %s30
    %p41 = scmp.eq.s32.totalorder %s21, 0
    %p42 = por %p40, %p41
    %p43 = scmp.ne.s32.totalorder %s29, %s30
    %p44 = scmp.eq.s32.totalorder %s22, 1
    %p45 = por %p43, %p44
    %p47 = scmp.ne.s32.totalorder %s30, %s46
    %p48 = scmp.eq.s32.totalorder %s22, 0
    %p49 = por %p47, %p48
    %s51 = sadd.s32 %s50, 1
    %p54 = scmp.eq.s32.totalorder %s16, 1
    %p55 = scmp.ne.s32.totalorder %s50, %s52
    %p56 = scmp.eq.s32.totalorder %s16, 0
    %p57 = por %p55, %p56
    %p58 = scmp.ne.s32.totalorder %s50, %s52
    %p59 = scmp.eq.s32.totalorder %s21, 1
    %p60 = por %p58, %p59
    %p61 = scmp.ne.s32.totalorder %s52, %s53
    %p62 = scmp.eq.s32.totalorder %s21, 0
    %p63 = por %p61, %p62
    %p64 = scmp.ne.s32.totalorder %s52, %s53
    %p65 = scmp.eq.s32.totalorder %s22, 1
    %p66 = por %p64, %p65
    %p68 = scmp.ne.s32.totalorder %s53, %s67
    %p69 = scmp.eq.s32.totalorder %s22, 0
    %p70 = por %p68, %p69
    %s72 = sadd.s32 %s71, 1
    %p75 = scmp.eq.s32.totalorder %s16, 1
    %p76 = scmp.ne.s32.totalorder %s71, %s73
    %p77 = scmp.eq.s32.totalorder %s16, 0
    %p78 = por %p76, %p77
    %p79 = scmp.ne.s32.totalorder %s71, %s73
    %p80 = scmp.eq.s32.totalorder %s21, 1
    %p81 = por %p79, %p80
    %p82 = scmp.ne.s32.totalorder %s73, %s74
    %p83 = scmp.eq.s32.totalorder %s21, 0
    %p84 = por %p82, %p83
    %p85 = scmp.ne.s32.totalorder %s73, %s74
    %p86 = scmp.eq.s32.totalorder %s22, 1
    %p87 = por %p85, %p86
    %p89 = scmp.ne.s32.totalorder %s74, %s88
    %p90 = scmp.eq.s32.totalorder %s22, 0
    %p91 = por %p89, %p90
    %s93 = sadd.s32 %s92, 1
    %p96 = scmp.eq.s32.totalorder %s16, 1
    %p97 = scmp.ne.s32.totalorder %s92, %s94
    %p98 = scmp.eq.s32.totalorder %s16, 0
    %p99 = por %p97, %p98
    %p100 = scmp.ne.s32.totalorder %s92, %s94
    %p101 = scmp.eq.s32.totalorder %s21, 1
    %p102 = por %p100, %p101
    %p103 = scmp.ne.s32.totalorder %s94, %s95
    %p104 = scmp.eq.s32.totalorder %s21, 0
    %p105 = por %p103, %p104
    %p106 = scmp.ne.s32.totalorder %s94, %s95
    %p107 = scmp.eq.s32.totalorder %s22, 1
    %p108 = por %p106, %p107
    %p110 = scmp.ne.s32.totalorder %s95, %s109
    %p111 = scmp.eq.s32.totalorder %s22, 0
    %p112 = por %p110, %p111
    %s114 = sadd.s32 %s113, 1
    %p117 = scmp.eq.s32.totalorder %s16, 1
    %p118 = scmp.ne.s32.totalorder %s113, %s115
    %p119 = scmp.eq.s32.totalorder %s16, 0
    %p120 = por %p118, %p119
    %p121 = scmp.ne.s32.totalorder %s113, %s115
    %p122 = scmp.eq.s32.totalorder %s21, 1
    %p123 = por %p121, %p122
    %p124 = scmp.ne.s32.totalorder %s115, %s116
    %p125 = scmp.eq.s32.totalorder %s21, 0
    %p126 = por %p124, %p125
    %p127 = scmp.ne.s32.totalorder %s115, %s116
    %p128 = scmp.eq.s32.totalorder %s22, 1
    %p129 = por %p127, %p128
    %p131 = scmp.ne.s32.totalorder %s116, %s130
    %p132 = scmp.eq.s32.totalorder %s22, 0
    %p133 = por %p131, %p132
    %s135 = sadd.s32 %s134, 1
    %p138 = scmp.eq.s32.totalorder %s16, 1
    %p139 = scmp.ne.s32.totalorder %s134, %s136
    %p140 = scmp.eq.s32.totalorder %s16, 0
    %p141 = por %p139, %p140
    %p142 = scmp.ne.s32.totalorder %s134, %s136
    %p143 = scmp.eq.s32.totalorder %s21, 1
    %p144 = por %p142, %p143
    %p145 = scmp.ne.s32.totalorder %s136, %s137
    %p146 = scmp.eq.s32.totalorder %s21, 0
    %p147 = por %p145, %p146
    %p148 = scmp.ne.s32.totalorder %s136, %s137
    %p149 = scmp.eq.s32.totalorder %s22, 1
    %p150 = por %p148, %p149
    %p152 = scmp.ne.s32.totalorder %s137, %s151
    %p153 = scmp.eq.s32.totalorder %s22, 0
    %p154 = por %p152, %p153
    %s156 = sadd.s32 %s155, 1
    %p159 = scmp.eq.s32.totalorder %s16, 1
    %p160 = scmp.ne.s32.totalorder %s155, %s157
    %p161 = scmp.eq.s32.totalorder %s16, 0
    %p162 = por %p160, %p161
    %p163 = scmp.ne.s32.totalorder %s155, %s157
    %p164 = scmp.eq.s32.totalorder %s21, 1
    %p165 = por %p163, %p164
    %p166 = scmp.ne.s32.totalorder %s157, %s158
    %p167 = scmp.eq.s32.totalorder %s21, 0
    %p168 = por %p166, %p167
    %p169 = scmp.ne.s32.totalorder %s157, %s158
    %p170 = scmp.eq.s32.totalorder %s22, 1
    %p171 = por %p169, %p170
    %p173 = scmp.ne.s32.totalorder %s158, %s172
    %p174 = scmp.eq.s32.totalorder %s22, 0
    %p175 = por %p173, %p174
    %s177 = sadd.s32 %s176, 1
    %p180 = scmp.eq.s32.totalorder %s16, 1
    %p181 = scmp.ne.s32.totalorder %s176, %s178
    %p182 = scmp.eq.s32.totalorder %s16, 0
    %p183 = por %p181, %p182
    %p184 = scmp.ne.s32.totalorder %s176, %s178
    %p185 = scmp.eq.s32.totalorder %s21, 1
    %p186 = por %p184, %p185
    %p187 = scmp.ne.s32.totalorder %s178, %s179
    %p188 = scmp.eq.s32.totalorder %s21, 0
    %p189 = por %p187, %p188
    %p190 = scmp.ne.s32.totalorder %s178, %s179
    %p191 = scmp.eq.s32.totalorder %s22, 1
    %p192 = por %p190, %p191
    %p194 = scmp.ne.s32.totalorder %s179, %s193
    %p195 = scmp.eq.s32.totalorder %s22, 0
    %p196 = por %p194, %p195
    %s198 = sadd.s32 %s197, 1
    %p201 = scmp.eq.s32.totalorder %s16, 1
    %p202 = scmp.ne.s32.totalorder %s197, %s199
    %p203 = scmp.eq.s32.totalorder %s16, 0
    %p204 = por %p202, %p203
    %p205 = scmp.ne.s32.totalorder %s197, %s199
    %p206 = scmp.eq.s32.totalorder %s21, 1
    %p207 = por %p205, %p206
    %p208 = scmp.ne.s32.totalorder %s199, %s200
    %p209 = scmp.eq.s32.totalorder %s21, 0
    %p210 = por %p208, %p209
    %p211 = scmp.ne.s32.totalorder %s199, %s200
    %p212 = scmp.eq.s32.totalorder %s22, 1
    %p213 = por %p211, %p212
    %p215 = scmp.ne.s32.totalorder %s200, %s214
    %p216 = scmp.eq.s32.totalorder %s22, 0
    %p217 = por %p215, %p216
    %s219 = sadd.s32 %s218, 1
    %p222 = scmp.eq.s32.totalorder %s16, 1
    %p223 = scmp.ne.s32.totalorder %s218, %s220
    %p224 = scmp.eq.s32.totalorder %s16, 0
    %p225 = por %p223, %p224
    %p226 = scmp.ne.s32.totalorder %s218, %s220
    %p227 = scmp.eq.s32.totalorder %s21, 1
    %p228 = por %p226, %p227
    %p229 = scmp.ne.s32.totalorder %s220, %s221
    %p230 = scmp.eq.s32.totalorder %s21, 0
    %p231 = por %p229, %p230
    %p232 = scmp.ne.s32.totalorder %s220, %s221
    %p233 = scmp.eq.s32.totalorder %s22, 1
    %p234 = por %p232, %p233
    %p236 = scmp.ne.s32.totalorder %s221, %s235
    %p237 = scmp.eq.s32.totalorder %s22, 0
    %p238 = por %p236, %p237
    %s239 = ssub.s32 %s16, %s23
    %p240 = scmp.eq.s32.totalorder %s239, 0
    %s242 = sadd.s32 %s241, 1
    %s243 = scalar_select %p240, %s241, %s242
    %p246 = pneg %p240
    %p247 = scmp.eq.s32.totalorder %s16, 1
    %p248 = por %p246, %p247
    %p249 = scmp.ne.s32.totalorder %s241, %s244
    %p250 = scmp.eq.s32.totalorder %s16, 0
    %p251 = por %p249, %p250
    %p252 = scmp.ne.s32.totalorder %s241, %s244
    %p253 = scmp.eq.s32.totalorder %s21, 1
    %p254 = por %p252, %p253
    %p255 = scmp.ne.s32.totalorder %s244, %s245
    %p256 = scmp.eq.s32.totalorder %s21, 0
    %p257 = por %p255, %p256
    %p258 = scmp.ne.s32.totalorder %s244, %s245
    %p259 = scmp.eq.s32.totalorder %s22, 1
    %p260 = por %p258, %p259
    %p262 = scmp.ne.s32.totalorder %s245, %s261
    %p263 = scmp.eq.s32.totalorder %s22, 0
    %p264 = por %p262, %p263
    %p265 = scmp.le.s32.totalorder 1, %s16
    %p266 = scmp.lt.s32.totalorder %s16, 3
    %p267 = pnand %p265, %p266
    %p268 = pneg %p267
    // Predicated region
    $region9: #{tpu_custom_call.1} parent=5 // pred_check
      _
    $region10: #{tpu_custom_call.1} parent=5 // pred_check_branch
      %270 = sbr.rel (%p267) target = $region12
    $region11: #{tpu_custom_call.1} parent=5 // pred_region
      %s271 = ssub.s32 %s16, 1
      // Predicated region
      $region13: #{tpu_custom_call.1} parent=11 // pred_check
        %p272 = pneg %p63
      $region14: #{tpu_custom_call.1} parent=11 // pred_check_branch
        %274 = sbr.rel (%p272) target = $region16
      $region15: #{tpu_custom_call.1} parent=11 // pred_region
        _
      $region16: #{tpu_custom_call.1} parent=11 // pred_fallthru
        _
      // Predicated region
      $region17: #{tpu_custom_call.1} parent=11 // pred_check
        %p275 = pneg %p84
      $region18: #{tpu_custom_call.1} parent=11 // pred_check_branch
        %277 = sbr.rel (%p275) target = $region20
      $region19: #{tpu_custom_call.1} parent=11 // pred_region
        _
      $region20: #{tpu_custom_call.1} parent=11 // pred_fallthru
        _
      // Predicated region
      $region21: #{tpu_custom_call.1} parent=11 // pred_check
        %p278 = pneg %p105
      $region22: #{tpu_custom_call.1} parent=11 // pred_check_branch
        %280 = sbr.rel (%p278) target = $region24
      $region23: #{tpu_custom_call.1} parent=11 // pred_region
        _
      $region24: #{tpu_custom_call.1} parent=11 // pred_fallthru
        _
      // Predicated region
      $region25: #{tpu_custom_call.1} parent=11 // pred_check
        %p281 = pneg %p126
      $region26: #{tpu_custom_call.1} parent=11 // pred_check_branch
        %283 = sbr.rel (%p281) target = $region28
      $region27: #{tpu_custom_call.1} parent=11 // pred_region
        _
      $region28: #{tpu_custom_call.1} parent=11 // pred_fallthru
        _
      // Predicated region
      $region29: #{tpu_custom_call.1} parent=11 // pred_check
        %p284 = pneg %p147
      $region30: #{tpu_custom_call.1} parent=11 // pred_check_branch
        %286 = sbr.rel (%p284) target = $region32
      $region31: #{tpu_custom_call.1} parent=11 // pred_region
        _
      $region32: #{tpu_custom_call.1} parent=11 // pred_fallthru
        _
      // Predicated region
      $region33: #{tpu_custom_call.1} parent=11 // pred_check
        %p287 = pneg %p168
      $region34: #{tpu_custom_call.1} parent=11 // pred_check_branch
        %289 = sbr.rel (%p287) target = $region36
      $region35: #{tpu_custom_call.1} parent=11 // pred_region
        _
      $region36: #{tpu_custom_call.1} parent=11 // pred_fallthru
        _
      // Predicated region
      $region37: #{tpu_custom_call.1} parent=11 // pred_check
        %p290 = pneg %p189
      $region38: #{tpu_custom_call.1} parent=11 // pred_check_branch
        %292 = sbr.rel (%p290) target = $region40
      $region39: #{tpu_custom_call.1} parent=11 // pred_region
        _
      $region40: #{tpu_custom_call.1} parent=11 // pred_fallthru
        _
      // Predicated region
      $region41: #{tpu_custom_call.1} parent=11 // pred_check
        %p293 = pneg %p210
      $region42: #{tpu_custom_call.1} parent=11 // pred_check_branch
        %295 = sbr.rel (%p293) target = $region44
      $region43: #{tpu_custom_call.1} parent=11 // pred_region
        _
      $region44: #{tpu_custom_call.1} parent=11 // pred_fallthru
        _
      // Predicated region
      $region45: #{tpu_custom_call.1} parent=11 // pred_check
        %p296 = pneg %p231
      $region46: #{tpu_custom_call.1} parent=11 // pred_check_branch
        %298 = sbr.rel (%p296) target = $region48
      $region47: #{tpu_custom_call.1} parent=11 // pred_region
        _
      $region48: #{tpu_custom_call.1} parent=11 // pred_fallthru
        _
    $region12: #{tpu_custom_call.1} parent=5 // pred_fallthru
      _
    %p299 = scmp.lt.s32.totalorder %s16, 2
    // Predicated region
    $region49: #{tpu_custom_call.1} parent=5 // pred_check
      %p300 = pneg %p299
    $region50: #{tpu_custom_call.1} parent=5 // pred_check_branch
      %302 = sbr.rel (%p300) target = $region52
    $region51: #{tpu_custom_call.1} parent=5 // pred_region
      // Predicated region
      $region53: #{tpu_custom_call.1} parent=51 // pred_check
        %p303 = pneg %p36
      $region54: #{tpu_custom_call.1} parent=51 // pred_check_branch
        %305 = sbr.rel (%p303) target = $region56
      $region55: #{tpu_custom_call.1} parent=51 // pred_region
        %p306 = scmp.lt.s32.totalorder %s16, 1
        %s307 = scalar_select %p306, %s16, 1
        %s308 = smul.addr %s307, 32
        %s309 = smul.addr %s308, 8
        %s310 = scalar_lea.vmem %s0, %s309
      $region56: #{tpu_custom_call.1} parent=51 // pred_fallthru
        _
    $region52: #{tpu_custom_call.1} parent=5 // pred_fallthru
      _
    %p311 = scmp.le.s32.totalorder 1, %s16
    %p312 = scmp.lt.s32.totalorder %s16, 3
    %p313 = pnand %p311, %p312
    %p314 = pneg %p313
    // Predicated region
    $region57: #{tpu_custom_call.1} parent=5 // pred_check
      _
    $region58: #{tpu_custom_call.1} parent=5 // pred_check_branch
      %316 = sbr.rel (%p313) target = $region60
    $region59: #{tpu_custom_call.1} parent=5 // pred_region
      %s317 = ssub.s32 %s16, 1
      %p318 = scmp.lt.s32.totalorder %s21, 1
      %s319 = scalar_select %p318, %s21, 1
      %s320 = smul.addr %s319, 32
      %s321 = smul.addr %s320, 8
      %s322 = scalar_lea.vmem %s0, %s321
      %p323 = pneg %p42
      %p324 = pneg %p39
      %p325 = pneg %p63
      %p326 = pneg %p60
      %p327 = pneg %p84
      %p328 = pneg %p81
      %p329 = pneg %p105
      %p330 = pneg %p102
      %p331 = pneg %p126
      %p332 = pneg %p123
      %p333 = pneg %p147
      %p334 = pneg %p144
      %p335 = pneg %p168
      %p336 = pneg %p165
      %p337 = pneg %p189
      %p338 = pneg %p186
      %p339 = pneg %p210
      %p340 = pneg %p207
      %p341 = pneg %p231
      %p342 = pneg %p228
      %p343 = pneg %p257
      %p344 = pneg %p254
      %p345 = scmp.lt.s32.totalorder %s21, 1
      %s346 = scalar_select %p345, %s21, 1
      %s347 = smul.addr %s346, 32
      %s348 = smul.addr %s347, 8
      %s349 = scalar_lea.vmem %s10, %s348
      %p350 = scmp.lt.s32.totalorder %s21, 1
      %s351 = scalar_select %p350, %s21, 1
      %s352 = smul.addr %s351, 32
      %s353 = smul.addr %s352, 8
      %s354 = scalar_lea.vmem %s0, %s353
      %p355 = scmp.lt.s32.totalorder %s21, 1
      %s356 = scalar_select %p355, %s21, 1
      %s357 = smul.addr %s356, 32
      %s358 = smul.addr %s357, 8
      %s359 = scalar_lea.vmem %s10, %s358
      %vm361 = vcmask 64512
      %362 = vst.msk [vmem:[#allocation2] sm:$0xff] %vm361, 0.0
      %vm363 = vcmask 58368
      %364 = vst.msk [vmem:[#allocation2 + $0x8] sm:$0x3] %vm363, 0.0
      %365 = vst.msk [vmem:[#allocation2 + $0x10] sm:$0xff] %vm361, 0.0
      %366 = vst.msk [vmem:[#allocation2 + $0x18] sm:$0x3] %vm363, 0.0
      %367 = vst.msk [vmem:[#allocation2 + $0x20] sm:$0xff] %vm361, 0.0
      %368 = vst.msk [vmem:[#allocation2 + $0x28] sm:$0x3] %vm363, 0.0
      %369 = vst.msk [vmem:[#allocation2 + $0x30] sm:$0xff] %vm361, 0.0
      %370 = vst.msk [vmem:[#allocation2 + $0x38] sm:$0x3] %vm363, 0.0
      %371 = vst.msk [vmem:[#allocation2 + $0x40] sm:$0xff] %vm361, 0.0
      %372 = vst.msk [vmem:[#allocation2 + $0x48] sm:$0x3] %vm363, 0.0
      %373 = vst.msk [vmem:[#allocation2 + $0x50] sm:$0xff] %vm361, 0.0
      %374 = vst.msk [vmem:[#allocation2 + $0x58] sm:$0x3] %vm363, 0.0
      %375 = vst.msk [vmem:[#allocation2 + $0x60] sm:$0xff] %vm361, 0.0
      %376 = vst.msk [vmem:[#allocation2 + $0x68] sm:$0x3] %vm363, 0.0
      %377 = vst.msk [vmem:[#allocation2 + $0x70] sm:$0xff] %vm361, 0.0
      %378 = vst.msk [vmem:[#allocation2 + $0x78] sm:$0x3] %vm363, 0.0
      %379 = vst.msk [vmem:[#allocation2 + $0x80] sm:$0xff] %vm361, 0.0
      %380 = vst.msk [vmem:[#allocation2 + $0x88] sm:$0x3] %vm363, 0.0
      %381 = vst.msk [vmem:[#allocation2 + $0x90] sm:$0xff] %vm361, 0.0
      %382 = vst.msk [vmem:[#allocation2 + $0x98] sm:$0x3] %vm363, 0.0
      %383 = vst.msk [vmem:[#allocation2 + $0xa0] sm:$0xff] %vm361, 0.0
      %384 = vst.msk [vmem:[#allocation2 + $0xa8] sm:$0x3] %vm363, 0.0
      %385 = vst.msk [vmem:[#allocation2 + $0xb0] sm:$0xff] %vm361, 0.0
      %386 = vst.msk [vmem:[#allocation2 + $0xb8] sm:$0x3] %vm363, 0.0
      %387 = vst.msk [vmem:[#allocation2 + $0xc0] sm:$0xff] %vm361, 0.0
      %388 = vst.msk [vmem:[#allocation2 + $0xc8] sm:$0x3] %vm363, 0.0
      %389 = vst.msk [vmem:[#allocation2 + $0xd0] sm:$0xff] %vm361, 0.0
      %390 = vst.msk [vmem:[#allocation2 + $0xd8] sm:$0x3] %vm363, 0.0
      %391 = vst.msk [vmem:[#allocation2 + $0xe0] sm:$0xff] %vm361, 0.0
      %392 = vst.msk [vmem:[#allocation2 + $0xe8] sm:$0x3] %vm363, 0.0
      %393 = vst.msk [vmem:[#allocation2 + $0xf0] sm:$0xff] %vm361, 0.0
      %394 = vst.msk [vmem:[#allocation2 + $0xf8] sm:$0x3] %vm363, 0.0
      %395 = vst.msk [vmem:[#allocation2 + $0x100] sm:$0xff] %vm361, 0.0
      %396 = vst.msk [vmem:[#allocation2 + $0x108] sm:$0x3] %vm363, 0.0
      %397 = vst.msk [vmem:[#allocation2 + $0x110] sm:$0xff] %vm361, 0.0
      %398 = vst.msk [vmem:[#allocation2 + $0x118] sm:$0x3] %vm363, 0.0
      %399 = vst.msk [vmem:[#allocation2 + $0x120] sm:$0xff] %vm361, 0.0
      %400 = vst.msk [vmem:[#allocation2 + $0x128] sm:$0x3] %vm363, 0.0
      %401 = vst.msk [vmem:[#allocation2 + $0x130] sm:$0xff] %vm361, 0.0
      %402 = vst.msk [vmem:[#allocation2 + $0x138] sm:$0x3] %vm363, 0.0
      %403 = vst.msk [vmem:[#allocation2 + $0x140] sm:$0xff] %vm361, 0.0
      %404 = vst.msk [vmem:[#allocation2 + $0x148] sm:$0x3] %vm363, 0.0
      %405 = vst.msk [vmem:[#allocation2 + $0x150] sm:$0xff] %vm361, 0.0
      %406 = vst.msk [vmem:[#allocation2 + $0x158] sm:$0x3] %vm363, 0.0
      %407 = vst.msk [vmem:[#allocation2 + $0x160] sm:$0xff] %vm361, 0.0
      %408 = vst.msk [vmem:[#allocation2 + $0x168] sm:$0x3] %vm363, 0.0
      %409 = vst.msk [vmem:[#allocation2 + $0x170] sm:$0xff] %vm361, 0.0
      %410 = vst.msk [vmem:[#allocation2 + $0x178] sm:$0x3] %vm363, 0.0
      %411 = vst.msk [vmem:[#allocation2 + $0x180] sm:$0xff] %vm361, 0.0
      %412 = vst.msk [vmem:[#allocation2 + $0x188] sm:$0x3] %vm363, 0.0
      %413 = vst.msk [vmem:[#allocation2 + $0x190] sm:$0xff] %vm361, 0.0
      %414 = vst.msk [vmem:[#allocation2 + $0x198] sm:$0x3] %vm363, 0.0
      %415 = vst.msk [vmem:[#allocation2 + $0x1a0] sm:$0xff] %vm361, 0.0
      %416 = vst.msk [vmem:[#allocation2 + $0x1a8] sm:$0x3] %vm363, 0.0
      %417 = vst.msk [vmem:[#allocation2 + $0x1b0] sm:$0xff] %vm361, 0.0
      %418 = vst.msk [vmem:[#allocation2 + $0x1b8] sm:$0x3] %vm363, 0.0
      %419 = vst.msk [vmem:[#allocation2 + $0x1c0] sm:$0xff] %vm361, 0.0
      %420 = vst.msk [vmem:[#allocation2 + $0x1c8] sm:$0x3] %vm363, 0.0
      %421 = vst.msk [vmem:[#allocation2 + $0x1d0] sm:$0xff] %vm361, 0.0
      %422 = vst.msk [vmem:[#allocation2 + $0x1d8] sm:$0x3] %vm363, 0.0
      %423 = vst.msk [vmem:[#allocation2 + $0x1e0] sm:$0xff] %vm361, 0.0
      %424 = vst.msk [vmem:[#allocation2 + $0x1e8] sm:$0x3] %vm363, 0.0
      %425 = vst.msk [vmem:[#allocation2 + $0x1f0] sm:$0xff] %vm361, 0.0
      %426 = vst.msk [vmem:[#allocation2 + $0x1f8] sm:$0x3] %vm363, 0.0
      %427 = vst.msk [vmem:[#allocation2 + $0x200] sm:$0xff] %vm361, 0.0
      %428 = vst.msk [vmem:[#allocation2 + $0x208] sm:$0x3] %vm363, 0.0
      %429 = vst.msk [vmem:[#allocation2 + $0x210] sm:$0xff] %vm361, 0.0
      %430 = vst.msk [vmem:[#allocation2 + $0x218] sm:$0x3] %vm363, 0.0
      %431 = vst.msk [vmem:[#allocation2 + $0x220] sm:$0xff] %vm361, 0.0
      %432 = vst.msk [vmem:[#allocation2 + $0x228] sm:$0x3] %vm363, 0.0
      %433 = vst.msk [vmem:[#allocation2 + $0x230] sm:$0xff] %vm361, 0.0
      %434 = vst.msk [vmem:[#allocation2 + $0x238] sm:$0x3] %vm363, 0.0
      %435 = vst.msk [vmem:[#allocation2 + $0x240] sm:$0xff] %vm361, 0.0
      %436 = vst.msk [vmem:[#allocation2 + $0x248] sm:$0x3] %vm363, 0.0
      %437 = vst.msk [vmem:[#allocation2 + $0x250] sm:$0xff] %vm361, 0.0
      %438 = vst.msk [vmem:[#allocation2 + $0x258] sm:$0x3] %vm363, 0.0
      %439 = vst.msk [vmem:[#allocation2 + $0x260] sm:$0xff] %vm361, 0.0
      %440 = vst.msk [vmem:[#allocation2 + $0x268] sm:$0x3] %vm363, 0.0
      %441 = vst.msk [vmem:[#allocation2 + $0x270] sm:$0xff] %vm361, 0.0
      %442 = vst.msk [vmem:[#allocation2 + $0x278] sm:$0x3] %vm363, 0.0
      %443 = vst.msk [vmem:[#allocation2 + $0x280] sm:$0xff] %vm361, 0.0
      %444 = vst.msk [vmem:[#allocation2 + $0x288] sm:$0x3] %vm363, 0.0
      %445 = vst.msk [vmem:[#allocation2 + $0x290] sm:$0xff] %vm361, 0.0
      %446 = vst.msk [vmem:[#allocation2 + $0x298] sm:$0x3] %vm363, 0.0
      %447 = vst.msk [vmem:[#allocation2 + $0x2a0] sm:$0xff] %vm361, 0.0
      %448 = vst.msk [vmem:[#allocation2 + $0x2a8] sm:$0x3] %vm363, 0.0
      %449 = vst.msk [vmem:[#allocation2 + $0x2b0] sm:$0xff] %vm361, 0.0
      %450 = vst.msk [vmem:[#allocation2 + $0x2b8] sm:$0x3] %vm363, 0.0
      %451 = vst.msk [vmem:[#allocation2 + $0x2c0] sm:$0xff] %vm361, 0.0
      %452 = vst.msk [vmem:[#allocation2 + $0x2c8] sm:$0x3] %vm363, 0.0
      %453 = vst.msk [vmem:[#allocation2 + $0x2d0] sm:$0xff] %vm361, 0.0
      %454 = vst.msk [vmem:[#allocation2 + $0x2d8] sm:$0x3] %vm363, 0.0
      %455 = vst.msk [vmem:[#allocation2 + $0x2e0] sm:$0xff] %vm361, 0.0
      %456 = vst.msk [vmem:[#allocation2 + $0x2e8] sm:$0x3] %vm363, 0.0
      %457 = vst.msk [vmem:[#allocation2 + $0x2f0] sm:$0xff] %vm361, 0.0
      %458 = vst.msk [vmem:[#allocation2 + $0x2f8] sm:$0x3] %vm363, 0.0
      %459 = vst.msk [vmem:[#allocation2 + $0x300] sm:$0xff] %vm361, 0.0
      %460 = vst.msk [vmem:[#allocation2 + $0x308] sm:$0x3] %vm363, 0.0
      %461 = vst.msk [vmem:[#allocation2 + $0x310] sm:$0xff] %vm361, 0.0
      %462 = vst.msk [vmem:[#allocation2 + $0x318] sm:$0x3] %vm363, 0.0
      %463 = vst.msk [vmem:[#allocation2 + $0x320] sm:$0xff] %vm361, 0.0
      %464 = vst.msk [vmem:[#allocation2 + $0x328] sm:$0x3] %vm363, 0.0
      %465 = vst.msk [vmem:[#allocation2 + $0x330] sm:$0xff] %vm361, 0.0
      %466 = vst.msk [vmem:[#allocation2 + $0x338] sm:$0x3] %vm363, 0.0
      %467 = vst.msk [vmem:[#allocation2 + $0x340] sm:$0xff] %vm361, 0.0
      %468 = vst.msk [vmem:[#allocation2 + $0x348] sm:$0x3] %vm363, 0.0
      %469 = vst.msk [vmem:[#allocation2 + $0x350] sm:$0xff] %vm361, 0.0
      %470 = vst.msk [vmem:[#allocation2 + $0x358] sm:$0x3] %vm363, 0.0
      %471 = vst.msk [vmem:[#allocation2 + $0x360] sm:$0xff] %vm361, 0.0
      %472 = vst.msk [vmem:[#allocation2 + $0x368] sm:$0x3] %vm363, 0.0
      %473 = vst.msk [vmem:[#allocation2 + $0x370] sm:$0xff] %vm361, 0.0
      %474 = vst.msk [vmem:[#allocation2 + $0x378] sm:$0x3] %vm363, 0.0
      %475 = vst.msk [vmem:[#allocation2 + $0x380] sm:$0xff] %vm361, 0.0
      %476 = vst.msk [vmem:[#allocation2 + $0x388] sm:$0x3] %vm363, 0.0
      %477 = vst.msk [vmem:[#allocation2 + $0x390] sm:$0xff] %vm361, 0.0
      %478 = vst.msk [vmem:[#allocation2 + $0x398] sm:$0x3] %vm363, 0.0
      %479 = vst.msk [vmem:[#allocation2 + $0x3a0] sm:$0xff] %vm361, 0.0
      %480 = vst.msk [vmem:[#allocation2 + $0x3a8] sm:$0x3] %vm363, 0.0
      %481 = vst.msk [vmem:[#allocation2 + $0x3b0] sm:$0xff] %vm361, 0.0
      %482 = vst.msk [vmem:[#allocation2 + $0x3b8] sm:$0x3] %vm363, 0.0
      %v483 = vld [vmem:[%s354] sm:$0xff]
      %v484 = vld [vmem:[%s354 + $0x8] sm:$0xff]
      %v485 = vld [vmem:[%s354 + $0x10] sm:$0xff]
      %v486 = vld [vmem:[%s354 + $0x18] sm:$0xff]
      %v487 = vld [vmem:[%s354 + $0x20] sm:$0xff]
      %v488 = vld [vmem:[%s354 + $0x28] sm:$0xff]
      %v489 = vld [vmem:[%s354 + $0x30] sm:$0xff]
      %v490 = vld [vmem:[%s354 + $0x38] sm:$0xff]
      %v491 = vld [vmem:[%s354 + $0x40] sm:$0xff]
      %v492 = vld [vmem:[%s354 + $0x48] sm:$0xff]
      %v493 = vld [vmem:[%s354 + $0x50] sm:$0xff]
      %v494 = vld [vmem:[%s354 + $0x58] sm:$0xff]
      %v495 = vld [vmem:[%s354 + $0x60] sm:$0xff]
      %v496 = vld [vmem:[%s354 + $0x68] sm:$0xff]
      %v497 = vld [vmem:[%s354 + $0x70] sm:$0xff]
      %v498 = vld [vmem:[%s354 + $0x78] sm:$0xff]
      %v499 = vld [vmem:[%s354 + $0x80] sm:$0xff]
      %v500 = vld [vmem:[%s354 + $0x88] sm:$0xff]
      %v501 = vld [vmem:[%s354 + $0x90] sm:$0xff]
      %v502 = vld [vmem:[%s354 + $0x98] sm:$0xff]
      %v503 = vld [vmem:[%s354 + $0xa0] sm:$0xff]
      %v504 = vld [vmem:[%s354 + $0xa8] sm:$0xff]
      %v505 = vld [vmem:[%s354 + $0xb0] sm:$0xff]
      %v506 = vld [vmem:[%s354 + $0xb8] sm:$0xff]
      %v507 = vld [vmem:[%s354 + $0xc0] sm:$0xff]
      %v508 = vld [vmem:[%s354 + $0xc8] sm:$0xff]
      %v509 = vld [vmem:[%s354 + $0xd0] sm:$0xff]
      %v510 = vld [vmem:[%s354 + $0xd8] sm:$0xff]
      %v511 = vld [vmem:[%s354 + $0xe0] sm:$0xff]
      %v512 = vld [vmem:[%s354 + $0xe8] sm:$0xff]
      %v513 = vld [vmem:[%s354 + $0xf0] sm:$0xff]
      %v514 = vld [vmem:[%s354 + $0xf8] sm:$0xff]
      %v515 = vpack.c.bf16 %v484, %v483
      %v516 = vpack.c.bf16 %v486, %v485
      %v517 = vpack.c.bf16 %v488, %v487
      %v518 = vpack.c.bf16 %v490, %v489
      %v519 = vpack.c.bf16 %v492, %v491
      %v520 = vpack.c.bf16 %v494, %v493
      %v521 = vpack.c.bf16 %v496, %v495
      %v522 = vpack.c.bf16 %v498, %v497
      %v523 = vpack.c.bf16 %v500, %v499
      %v524 = vpack.c.bf16 %v502, %v501
      %v525 = vpack.c.bf16 %v504, %v503
      %v526 = vpack.c.bf16 %v506, %v505
      %v527 = vpack.c.bf16 %v508, %v507
      %v528 = vpack.c.bf16 %v510, %v509
      %v529 = vpack.c.bf16 %v512, %v511
      %v530 = vpack.c.bf16 %v514, %v513
      %v531 = vld [vmem:[%s1] sm:$0x3]
      %vm532 = vcmask 31744
      %v534 = vsel %vm532, %v515, 0
      %v537 = vsel %vm532, %v516, 0
      %v540 = vsel %vm532, %v517, 0
      %v543 = vsel %vm532, %v518, 0
      %v546 = vsel %vm532, %v519, 0
      %v549 = vsel %vm532, %v520, 0
      %v552 = vsel %vm532, %v521, 0
      %v555 = vsel %vm532, %v522, 0
      %v558 = vsel %vm532, %v523, 0
      %v561 = vsel %vm532, %v524, 0
      %v564 = vsel %vm532, %v525, 0
      %v567 = vsel %vm532, %v526, 0
      %v570 = vsel %vm532, %v527, 0
      %v573 = vsel %vm532, %v528, 0
      %v576 = vsel %vm532, %v529, 0
      %v579 = vsel %vm532, %v530, 0
      %vm581 = vcmask 1041408
      %v583 = vsel %vm581, %v531, 0
      %585 = vmatprep.subr.bf16.mxu0 0
      %586 = vmatpush1.bf16.msra.mxu0 %v583
      %587 = vmatprep.subr.bf16.mxu0 0
      %588 = vmatpush1.bf16.msra.mxu0 0
      %589 = vmatprep.subr.bf16.mxu0 0
      %590 = vmatpush1.bf16.msra.mxu0 0
      %591 = vmatprep.subr.bf16.mxu0 0
      %592 = vmatpush1.bf16.msra.mxu0 0
      %593 = vmatprep.subr.bf16.mxu0 0
      %594 = vmatpush1.bf16.msra.mxu0 0
      %595 = vmatprep.subr.bf16.mxu0 0
      %596 = vmatpush1.bf16.msra.mxu0 0
      %597 = vmatprep.subr.bf16.mxu0 0
      %598 = vmatpush1.bf16.msra.mxu0 0
      %599 = vmatprep.subr.bf16.mxu0 0
      %600 = vmatpush1.bf16.msra.mxu0 0
      %601 = vmatprep.subr.bf16.mxu0 0
      %602 = vmatpush1.bf16.msra.mxu0 0
      %603 = vmatprep.subr.bf16.mxu0 0
      %604 = vmatpush1.bf16.msra.mxu0 0
      %605 = vmatprep.subr.bf16.mxu0 0
      %606 = vmatpush1.bf16.msra.mxu0 0
      %607 = vmatprep.subr.bf16.mxu0 0
      %608 = vmatpush1.bf16.msra.mxu0 0
      %609 = vmatprep.subr.bf16.mxu0 0
      %610 = vmatpush1.bf16.msra.mxu0 0
      %611 = vmatprep.subr.bf16.mxu0 0
      %612 = vmatpush1.bf16.msra.mxu0 0
      %613 = vmatprep.subr.bf16.mxu0 0
      %614 = vmatpush1.bf16.msra.mxu0 0
      %615 = vmatprep.subr.bf16.mxu0 0
      %616 = vmatpush1.bf16.msra.mxu0 0
      %617 = vmatprep.mubr.bf16.mxu0 0
      %618 = vmatmul.mubr.bf16.gmra.mrb[0].mxu0 %v534
      %v619 = vpop.f32.mrb[0].mxu0
      %v620 = vadd.f32 0.0, %v619
      %v621 = vpop.f32.mrb[0].mxu0
      %v622 = vpop.f32.mrb[0].mxu0
      %v623 = vadd.f32 0.0, %v622
      %v624 = vpop.f32.mrb[0].mxu0
      %625 = vmatprep.mubr.bf16.mxu0 0
      %626 = vmatmul.mubr.bf16.gmra.mrb[0].mxu0 %v537
      %v627 = vpop.f32.mrb[0].mxu0
      %v628 = vadd.f32 0.0, %v627
      %v629 = vpop.f32.mrb[0].mxu0
      %v630 = vpop.f32.mrb[0].mxu0
      %v631 = vadd.f32 0.0, %v630
      %v632 = vpop.f32.mrb[0].mxu0
      %633 = vmatprep.mubr.bf16.mxu0 0
      %634 = vmatmul.mubr.bf16.gmra.mrb[0].mxu0 %v540
      %v635 = vpop.f32.mrb[0].mxu0
      %v636 = vadd.f32 0.0, %v635
      %v637 = vpop.f32.mrb[0].mxu0
      %v638 = vpop.f32.mrb[0].mxu0
      %v639 = vadd.f32 0.0, %v638
      %v640 = vpop.f32.mrb[0].mxu0
      %641 = vmatprep.mubr.bf16.mxu0 0
      %642 = vmatmul.mubr.bf16.gmra.mrb[0].mxu0 %v543
      %v643 = vpop.f32.mrb[0].mxu0
      %v644 = vadd.f32 0.0, %v643
      %v645 = vpop.f32.mrb[0].mxu0
      %v646 = vpop.f32.mrb[0].mxu0
      %v647 = vadd.f32 0.0, %v646
      %v648 = vpop.f32.mrb[0].mxu0
      %649 = vmatprep.mubr.bf16.mxu0 0
      %650 = vmatmul.mubr.bf16.gmra.mrb[0].mxu0 %v546
      %v651 = vpop.f32.mrb[0].mxu0
      %v652 = vadd.f32 0.0, %v651
      %v653 = vpop.f32.mrb[0].mxu0
      %v654 = vpop.f32.mrb[0].mxu0
      %v655 = vadd.f32 0.0, %v654
      %v656 = vpop.f32.mrb[0].mxu0
      %657 = vmatprep.mubr.bf16.mxu0 0
      %658 = vmatmul.mubr.bf16.gmra.mrb[0].mxu0 %v549
      %v659 = vpop.f32.mrb[0].mxu0
      %v660 = vadd.f32 0.0, %v659
      %v661 = vpop.f32.mrb[0].mxu0
      %v662 = vpop.f32.mrb[0].mxu0
      %v663 = vadd.f32 0.0, %v662
      %v664 = vpop.f32.mrb[0].mxu0
      %665 = vmatprep.mubr.bf16.mxu0 0
      %666 = vmatmul.mubr.bf16.gmra.mrb[0].mxu0 %v552
      %v667 = vpop.f32.mrb[0].mxu0
      %v668 = vadd.f32 0.0, %v667
      %v669 = vpop.f32.mrb[0].mxu0
      %v670 = vpop.f32.mrb[0].mxu0
      %v671 = vadd.f32 0.0, %v670
      %v672 = vpop.f32.mrb[0].mxu0
      %673 = vmatprep.mubr.bf16.mxu0 0
      %674 = vmatmul.mubr.bf16.gmra.mrb[0].mxu0 %v555
      %v675 = vpop.f32.mrb[0].mxu0
      %v676 = vadd.f32 0.0, %v675
      %v677 = vpop.f32.mrb[0].mxu0
      %v678 = vpop.f32.mrb[0].mxu0
      %v679 = vadd.f32 0.0, %v678
      %v680 = vpop.f32.mrb[0].mxu0
      %681 = vmatprep.mubr.bf16.mxu0 0
      %682 = vmatmul.mubr.bf16.gmra.mrb[0].mxu0 %v558
      %v683 = vpop.f32.mrb[0].mxu0
      %v684 = vadd.f32 0.0, %v683
      %v685 = vpop.f32.mrb[0].mxu0
      %v686 = vpop.f32.mrb[0].mxu0
      %v687 = vadd.f32 0.0, %v686
      %v688 = vpop.f32.mrb[0].mxu0
      %689 = vmatprep.mubr.bf16.mxu0 0
      %690 = vmatmul.mubr.bf16.gmra.mrb[0].mxu0 %v561
      %v691 = vpop.f32.mrb[0].mxu0
      %v692 = vadd.f32 0.0, %v691
      %v693 = vpop.f32.mrb[0].mxu0
      %v694 = vpop.f32.mrb[0].mxu0
      %v695 = vadd.f32 0.0, %v694
      %v696 = vpop.f32.mrb[0].mxu0
      %697 = vmatprep.mubr.bf16.mxu0 0
      %698 = vmatmul.mubr.bf16.gmra.mrb[0].mxu0 %v564
      %v699 = vpop.f32.mrb[0].mxu0
      %v700 = vadd.f32 0.0, %v699
      %v701 = vpop.f32.mrb[0].mxu0
      %v702 = vpop.f32.mrb[0].mxu0
      %v703 = vadd.f32 0.0, %v702
      %v704 = vpop.f32.mrb[0].mxu0
      %705 = vmatprep.mubr.bf16.mxu0 0
      %706 = vmatmul.mubr.bf16.gmra.mrb[0].mxu0 %v567
      %v707 = vpop.f32.mrb[0].mxu0
      %v708 = vadd.f32 0.0, %v707
      %v709 = vpop.f32.mrb[0].mxu0
      %v710 = vpop.f32.mrb[0].mxu0
      %v711 = vadd.f32 0.0, %v710
      %v712 = vpop.f32.mrb[0].mxu0
      %713 = vmatprep.mubr.bf16.mxu0 0
      %714 = vmatmul.mubr.bf16.gmra.mrb[0].mxu0 %v570
      %v715 = vpop.f32.mrb[0].mxu0
      %v716 = vadd.f32 0.0, %v715
      %v717 = vpop.f32.mrb[0].mxu0
      %v718 = vpop.f32.mrb[0].mxu0
      %v719 = vadd.f32 0.0, %v718
      %v720 = vpop.f32.mrb[0].mxu0
      %721 = vmatprep.mubr.bf16.mxu0 0
      %722 = vmatmul.mubr.bf16.gmra.mrb[0].mxu0 %v573
      %v723 = vpop.f32.mrb[0].mxu0
      %v724 = vadd.f32 0.0, %v723
      %v725 = vpop.f32.mrb[0].mxu0
      %v726 = vpop.f32.mrb[0].mxu0
      %v727 = vadd.f32 0.0, %v726
      %v728 = vpop.f32.mrb[0].mxu0
      %729 = vmatprep.mubr.bf16.mxu0 0
      %730 = vmatmul.mubr.bf16.gmra.mrb[0].mxu0 %v576
      %v731 = vpop.f32.mrb[0].mxu0
      %v732 = vadd.f32 0.0, %v731
      %v733 = vpop.f32.mrb[0].mxu0
      %v734 = vpop.f32.mrb[0].mxu0
      %v735 = vadd.f32 0.0, %v734
      %v736 = vpop.f32.mrb[0].mxu0
      %737 = vmatprep.mubr.bf16.mxu0 0
      %738 = vmatmul.mubr.bf16.gmra.mrb[0].mxu0 %v579
      %v739 = vpop.f32.mrb[0].mxu0
      %v740 = vadd.f32 0.0, %v739
      %v741 = vpop.f32.mrb[0].mxu0
      %v742 = vpop.f32.mrb[0].mxu0
      %v743 = vadd.f32 0.0, %v742
      %v744 = vpop.f32.mrb[0].mxu0
      %745 = vdwg.mxu0
      %v746 = vld [vmem:[%s2] sm:$0x1]
      %v748 = vlaneseq
      %v749 = vshrl.u32 %v748, 7
      %v750 = vsub.s32 0, %v749
      %v751 = vrot.slane %v746, %v750
      %v753 = vmul.f32 %v620, %v751
      %v754 = vmul.f32 %v623, %v751
      %v755 = vmul.f32 %v628, %v751
      %v756 = vmul.f32 %v631, %v751
      %v757 = vmul.f32 %v636, %v751
      %v758 = vmul.f32 %v639, %v751
      %v759 = vmul.f32 %v644, %v751
      %v760 = vmul.f32 %v647, %v751
      %v761 = vmul.f32 %v652, %v751
      %v762 = vmul.f32 %v655, %v751
      %v763 = vmul.f32 %v660, %v751
      %v764 = vmul.f32 %v663, %v751
      %v765 = vmul.f32 %v668, %v751
      %v766 = vmul.f32 %v671, %v751
      %v767 = vmul.f32 %v676, %v751
      %v768 = vmul.f32 %v679, %v751
      %v769 = vmul.f32 %v684, %v751
      %v770 = vmul.f32 %v687, %v751
      %v771 = vmul.f32 %v692, %v751
      %v772 = vmul.f32 %v695, %v751
      %v773 = vmul.f32 %v700, %v751
      %v774 = vmul.f32 %v703, %v751
      %v775 = vmul.f32 %v708, %v751
      %v776 = vmul.f32 %v711, %v751
      %v777 = vmul.f32 %v716, %v751
      %v778 = vmul.f32 %v719, %v751
      %v779 = vmul.f32 %v724, %v751
      %v780 = vmul.f32 %v727, %v751
      %v781 = vmul.f32 %v732, %v751
      %v782 = vmul.f32 %v735, %v751
      %v783 = vmul.f32 %v740, %v751
      %v784 = vmul.f32 %v743, %v751
      %v785 = vld [vmem:[%s3] sm:$0x1]
      %v787 = vlaneseq
      %v788 = vshrl.u32 %v787, 7
      %v789 = vsub.s32 0, %v788
      %v790 = vrot.slane %v785, %v789
      %v792 = vadd.f32 %v753, %v790
      %v793 = vadd.f32 %v754, %v790
      %v794 = vadd.f32 %v755, %v790
      %v795 = vadd.f32 %v756, %v790
      %v796 = vadd.f32 %v757, %v790
      %v797 = vadd.f32 %v758, %v790
      %v798 = vadd.f32 %v759, %v790
      %v799 = vadd.f32 %v760, %v790
      %v800 = vadd.f32 %v761, %v790
      %v801 = vadd.f32 %v762, %v790
      %v802 = vadd.f32 %v763, %v790
      %v803 = vadd.f32 %v764, %v790
      %v804 = vadd.f32 %v765, %v790
      %v805 = vadd.f32 %v766, %v790
      %v806 = vadd.f32 %v767, %v790
      %v807 = vadd.f32 %v768, %v790
      %v808 = vadd.f32 %v769, %v790
      %v809 = vadd.f32 %v770, %v790
      %v810 = vadd.f32 %v771, %v790
      %v811 = vadd.f32 %v772, %v790
      %v812 = vadd.f32 %v773, %v790
      %v813 = vadd.f32 %v774, %v790
      %v814 = vadd.f32 %v775, %v790
      %v815 = vadd.f32 %v776, %v790
      %v816 = vadd.f32 %v777, %v790
      %v817 = vadd.f32 %v778, %v790
      %v818 = vadd.f32 %v779, %v790
      %v819 = vadd.f32 %v780, %v790
      %v820 = vadd.f32 %v781, %v790
      %v821 = vadd.f32 %v782, %v790
      %v822 = vadd.f32 %v783, %v790
      %v823 = vadd.f32 %v784, %v790
      %v824 = vmax.f32 %v792, 0.0
      %v825 = vmax.f32 %v793, 0.0
      %v826 = vmax.f32 %v794, 0.0
      %v827 = vmax.f32 %v795, 0.0
      %v828 = vmax.f32 %v796, 0.0
      %v829 = vmax.f32 %v797, 0.0
      %v830 = vmax.f32 %v798, 0.0
      %v831 = vmax.f32 %v799, 0.0
      %v832 = vmax.f32 %v800, 0.0
      %v833 = vmax.f32 %v801, 0.0
      %v834 = vmax.f32 %v802, 0.0
      %v835 = vmax.f32 %v803, 0.0
      %v836 = vmax.f32 %v804, 0.0
      %v837 = vmax.f32 %v805, 0.0
      %v838 = vmax.f32 %v806, 0.0
      %v839 = vmax.f32 %v807, 0.0
      %v840 = vmax.f32 %v808, 0.0
      %v841 = vmax.f32 %v809, 0.0
      %v842 = vmax.f32 %v810, 0.0
      %v843 = vmax.f32 %v811, 0.0
      %v844 = vmax.f32 %v812, 0.0
      %v845 = vmax.f32 %v813, 0.0
      %v846 = vmax.f32 %v814, 0.0
      %v847 = vmax.f32 %v815, 0.0
      %v848 = vmax.f32 %v816, 0.0
      %v849 = vmax.f32 %v817, 0.0
      %v850 = vmax.f32 %v818, 0.0
      %v851 = vmax.f32 %v819, 0.0
      %v852 = vmax.f32 %v820, 0.0
      %v853 = vmax.f32 %v821, 0.0
      %v854 = vmax.f32 %v822, 0.0
      %v855 = vmax.f32 %v823, 0.0
      %v856 = vmin.f32 %v824, 6.0
      %v857 = vmin.f32 %v825, 6.0
      %v858 = vmin.f32 %v826, 6.0
      %v859 = vmin.f32 %v827, 6.0
      %v860 = vmin.f32 %v828, 6.0
      %v861 = vmin.f32 %v829, 6.0
      %v862 = vmin.f32 %v830, 6.0
      %v863 = vmin.f32 %v831, 6.0
      %v864 = vmin.f32 %v832, 6.0
      %v865 = vmin.f32 %v833, 6.0
      %v866 = vmin.f32 %v834, 6.0
      %v867 = vmin.f32 %v835, 6.0
      %v868 = vmin.f32 %v836, 6.0
      %v869 = vmin.f32 %v837, 6.0
      %v870 = vmin.f32 %v838, 6.0
      %v871 = vmin.f32 %v839, 6.0
      %v872 = vmin.f32 %v840, 6.0
      %v873 = vmin.f32 %v841, 6.0
      %v874 = vmin.f32 %v842, 6.0
      %v875 = vmin.f32 %v843, 6.0
      %v876 = vmin.f32 %v844, 6.0
      %v877 = vmin.f32 %v845, 6.0
      %v878 = vmin.f32 %v846, 6.0
      %v879 = vmin.f32 %v847, 6.0
      %v880 = vmin.f32 %v848, 6.0
      %v881 = vmin.f32 %v849, 6.0
      %v882 = vmin.f32 %v850, 6.0
      %v883 = vmin.f32 %v851, 6.0
      %v884 = vmin.f32 %v852, 6.0
      %v885 = vmin.f32 %v853, 6.0
      %v886 = vmin.f32 %v854, 6.0
      %v887 = vmin.f32 %v855, 6.0
      %s888 = scalar_lea.vmem [#allocation2], 176
      %889 = vst.msk [vmem:[%s888 + $0x1] sm:$0xff] %vm361, %v856
      %890 = vst.msk [vmem:[%s888 + $0x11] sm:$0xff] %vm361, %v857
      %891 = vst.msk [vmem:[%s888 + $0x21] sm:$0xff] %vm361, %v858
      %892 = vst.msk [vmem:[%s888 + $0x31] sm:$0xff] %vm361, %v859
      %893 = vst.msk [vmem:[%s888 + $0x41] sm:$0xff] %vm361, %v860
      %894 = vst.msk [vmem:[%s888 + $0x51] sm:$0xff] %vm361, %v861
      %895 = vst.msk [vmem:[%s888 + $0x61] sm:$0xff] %vm361, %v862
      %896 = vst.msk [vmem:[%s888 + $0x71] sm:$0xff] %vm361, %v863
      %897 = vst.msk [vmem:[%s888 + $0xa1] sm:$0xff] %vm361, %v864
      %898 = vst.msk [vmem:[%s888 + $0xb1] sm:$0xff] %vm361, %v865
      %899 = vst.msk [vmem:[%s888 + $0xc1] sm:$0xff] %vm361, %v866
      %900 = vst.msk [vmem:[%s888 + $0xd1] sm:$0xff] %vm361, %v867
      %901 = vst.msk [vmem:[%s888 + $0xe1] sm:$0xff] %vm361, %v868
      %902 = vst.msk [vmem:[%s888 + $0xf1] sm:$0xff] %vm361, %v869
      %903 = vst.msk [vmem:[%s888 + $0x101] sm:$0xff] %vm361, %v870
      %904 = vst.msk [vmem:[%s888 + $0x111] sm:$0xff] %vm361, %v871
      %905 = vst.msk [vmem:[%s888 + $0x141] sm:$0xff] %vm361, %v872
      %906 = vst.msk [vmem:[%s888 + $0x151] sm:$0xff] %vm361, %v873
      %907 = vst.msk [vmem:[%s888 + $0x161] sm:$0xff] %vm361, %v874
      %908 = vst.msk [vmem:[%s888 + $0x171] sm:$0xff] %vm361, %v875
      %909 = vst.msk [vmem:[%s888 + $0x181] sm:$0xff] %vm361, %v876
      %910 = vst.msk [vmem:[%s888 + $0x191] sm:$0xff] %vm361, %v877
      %911 = vst.msk [vmem:[%s888 + $0x1a1] sm:$0xff] %vm361, %v878
      %912 = vst.msk [vmem:[%s888 + $0x1b1] sm:$0xff] %vm361, %v879
      %913 = vst.msk [vmem:[%s888 + $0x1e1] sm:$0xff] %vm361, %v880
      %914 = vst.msk [vmem:[%s888 + $0x1f1] sm:$0xff] %vm361, %v881
      %915 = vst.msk [vmem:[%s888 + $0x201] sm:$0xff] %vm361, %v882
      %916 = vst.msk [vmem:[%s888 + $0x211] sm:$0xff] %vm361, %v883
      %917 = vst.msk [vmem:[%s888 + $0x221] sm:$0xff] %vm361, %v884
      %918 = vst.msk [vmem:[%s888 + $0x231] sm:$0xff] %vm361, %v885
      %919 = vst.msk [vmem:[%s888 + $0x241] sm:$0xff] %vm361, %v886
      %920 = vst.msk [vmem:[%s888 + $0x251] sm:$0xff] %vm361, %v887
      %v921 = vld [vmem:[%s4] sm:$0x7]
      %v922 = vld [vmem:[%s4 + $0x4] sm:$0x7]
      %v923 = vld [vmem:[%s4 + $0x8] sm:$0x7]
      %v924 = vld [vmem:[%s4 + $0xc] sm:$0x7]
      %v925 = vld [vmem:[%s4 + $0x10] sm:$0x7]
      %v926 = vld [vmem:[%s4 + $0x14] sm:$0x7]
      %v927 = vld [vmem:[%s4 + $0x18] sm:$0x7]
      %v928 = vld [vmem:[%s4 + $0x1c] sm:$0x7]
      %v929 = vld [vmem:[%s4 + $0x20] sm:$0x7]
      %v930 = vld [vmem:[#allocation2] sm:$0xff]
      %v931 = vld [vmem:[#allocation2 + $0x10] sm:$0xff]
      %v932 = vld [vmem:[#allocation2 + $0x20] sm:$0xff]
      %v933 = vld [vmem:[#allocation2 + $0x30] sm:$0xff]
      %v934 = vld [vmem:[#allocation2 + $0x40] sm:$0xff]
      %v935 = vld [vmem:[#allocation2 + $0x50] sm:$0xff]
      %v936 = vld [vmem:[#allocation2 + $0x60] sm:$0xff]
      %v937 = vld [vmem:[#allocation2 + $0x70] sm:$0xff]
      %v938 = vld [vmem:[#allocation2 + $0xa0] sm:$0xff]
      %v939 = vld [vmem:[#allocation2 + $0xb0] sm:$0xff]
      %v940 = vld [vmem:[#allocation2 + $0xc0] sm:$0xff]
      %v941 = vld [vmem:[#allocation2 + $0xd0] sm:$0xff]
      %v942 = vld [vmem:[#allocation2 + $0xe0] sm:$0xff]
      %v943 = vld [vmem:[#allocation2 + $0xf0] sm:$0xff]
      %v944 = vld [vmem:[#allocation2 + $0x100] sm:$0xff]
      %v945 = vld [vmem:[#allocation2 + $0x110] sm:$0xff]
      %v946 = vld [vmem:[#allocation2 + $0x140] sm:$0xff]
      %v947 = vld [vmem:[#allocation2 + $0x150] sm:$0xff]
      %v948 = vld [vmem:[#allocation2 + $0x160] sm:$0xff]
      %v949 = vld [vmem:[#allocation2 + $0x170] sm:$0xff]
      %v950 = vld [vmem:[#allocation2 + $0x180] sm:$0xff]
      %v951 = vld [vmem:[#allocation2 + $0x190] sm:$0xff]
      %v952 = vld [vmem:[#allocation2 + $0x1a0] sm:$0xff]
      %v953 = vld [vmem:[#allocation2 + $0x1b0] sm:$0xff]
      %v954 = vld [vmem:[#allocation2 + $0x1e0] sm:$0xff]
      %v955 = vld [vmem:[#allocation2 + $0x1f0] sm:$0xff]
      %v956 = vld [vmem:[#allocation2 + $0x200] sm:$0xff]
      %v957 = vld [vmem:[#allocation2 + $0x210] sm:$0xff]
      %v958 = vld [vmem:[#allocation2 + $0x220] sm:$0xff]
      %v959 = vld [vmem:[#allocation2 + $0x230] sm:$0xff]
      %v960 = vld [vmem:[#allocation2 + $0x240] sm:$0xff]
      %v961 = vld [vmem:[#allocation2 + $0x250] sm:$0xff]
      %v962 = vlaneseq
      %v963 = vshrl.u32 %v962, 7
      %v964 = vsub.s32 0, %v963
      %v965 = vrot.slane %v921, %v964
      %v966 = vmul.f32 %v930, %v965
      %v967 = vmul.f32 %v931, %v965
      %v968 = vmul.f32 %v932, %v965
      %v969 = vmul.f32 %v933, %v965
      %v970 = vmul.f32 %v934, %v965
      %v971 = vmul.f32 %v935, %v965
      %v972 = vmul.f32 %v936, %v965
      %v973 = vmul.f32 %v937, %v965
      %v974 = vmul.f32 %v938, %v965
      %v975 = vmul.f32 %v939, %v965
      %v976 = vmul.f32 %v940, %v965
      %v977 = vmul.f32 %v941, %v965
      %v978 = vmul.f32 %v942, %v965
      %v979 = vmul.f32 %v943, %v965
      %v980 = vmul.f32 %v944, %v965
      %v981 = vmul.f32 %v945, %v965
      %v982 = vmul.f32 %v946, %v965
      %v983 = vmul.f32 %v947, %v965
      %v984 = vmul.f32 %v948, %v965
      %v985 = vmul.f32 %v949, %v965
      %v986 = vmul.f32 %v950, %v965
      %v987 = vmul.f32 %v951, %v965
      %v988 = vmul.f32 %v952, %v965
      %v989 = vmul.f32 %v953, %v965
      %v990 = vmul.f32 %v954, %v965
      %v991 = vmul.f32 %v955, %v965
      %v992 = vmul.f32 %v956, %v965
      %v993 = vmul.f32 %v957, %v965
      %v994 = vmul.f32 %v958, %v965
      %v995 = vmul.f32 %v959, %v965
      %v996 = vmul.f32 %v960, %v965
      %v997 = vmul.f32 %v961, %v965
      %v998 = vadd.f32 %v966, 0.0
      %v999 = vadd.f32 %v967, 0.0
      %v1000 = vadd.f32 %v968, 0.0
      %v1001 = vadd.f32 %v969, 0.0
      %v1002 = vadd.f32 %v970, 0.0
      %v1003 = vadd.f32 %v971, 0.0
      %v1004 = vadd.f32 %v972, 0.0
      %v1005 = vadd.f32 %v973, 0.0
      %v1006 = vadd.f32 %v974, 0.0
      %v1007 = vadd.f32 %v975, 0.0
      %v1008 = vadd.f32 %v976, 0.0
      %v1009 = vadd.f32 %v977, 0.0
      %v1010 = vadd.f32 %v978, 0.0
      %v1011 = vadd.f32 %v979, 0.0
      %v1012 = vadd.f32 %v980, 0.0
      %v1013 = vadd.f32 %v981, 0.0
      %v1014 = vadd.f32 %v982, 0.0
      %v1015 = vadd.f32 %v983, 0.0
      %v1016 = vadd.f32 %v984, 0.0
      %v1017 = vadd.f32 %v985, 0.0
      %v1018 = vadd.f32 %v986, 0.0
      %v1019 = vadd.f32 %v987, 0.0
      %v1020 = vadd.f32 %v988, 0.0
      %v1021 = vadd.f32 %v989, 0.0
      %v1022 = vadd.f32 %v990, 0.0
      %v1023 = vadd.f32 %v991, 0.0
      %v1024 = vadd.f32 %v992, 0.0
      %v1025 = vadd.f32 %v993, 0.0
      %v1026 = vadd.f32 %v994, 0.0
      %v1027 = vadd.f32 %v995, 0.0
      %v1028 = vadd.f32 %v996, 0.0
      %v1029 = vadd.f32 %v997, 0.0
      %v1030 = vld [vmem:[#allocation2 + $0x1] sm:$0xff]
      %v1031 = vld [vmem:[#allocation2 + $0x11] sm:$0xff]
      %v1032 = vld [vmem:[#allocation2 + $0x21] sm:$0xff]
      %v1033 = vld [vmem:[#allocation2 + $0x31] sm:$0xff]
      %v1034 = vld [vmem:[#allocation2 + $0x41] sm:$0xff]
      %v1035 = vld [vmem:[#allocation2 + $0x51] sm:$0xff]
      %v1036 = vld [vmem:[#allocation2 + $0x61] sm:$0xff]
      %v1037 = vld [vmem:[#allocation2 + $0x71] sm:$0xff]
      %v1038 = vld [vmem:[#allocation2 + $0xa1] sm:$0xff]
      %v1039 = vld [vmem:[#allocation2 + $0xb1] sm:$0xff]
      %v1040 = vld [vmem:[#allocation2 + $0xc1] sm:$0xff]
      %v1041 = vld [vmem:[#allocation2 + $0xd1] sm:$0xff]
      %v1042 = vld [vmem:[#allocation2 + $0xe1] sm:$0xff]
      %v1043 = vld [vmem:[#allocation2 + $0xf1] sm:$0xff]
      %v1044 = vld [vmem:[#allocation2 + $0x101] sm:$0xff]
      %v1045 = vld [vmem:[#allocation2 + $0x111] sm:$0xff]
      %v1046 = vld [vmem:[#allocation2 + $0x141] sm:$0xff]
      %v1047 = vld [vmem:[#allocation2 + $0x151] sm:$0xff]
      %v1048 = vld [vmem:[#allocation2 + $0x161] sm:$0xff]
      %v1049 = vld [vmem:[#allocation2 + $0x171] sm:$0xff]
      %v1050 = vld [vmem:[#allocation2 + $0x181] sm:$0xff]
      %v1051 = vld [vmem:[#allocation2 + $0x191] sm:$0xff]
      %v1052 = vld [vmem:[#allocation2 + $0x1a1] sm:$0xff]
      %v1053 = vld [vmem:[#allocation2 + $0x1b1] sm:$0xff]
      %v1054 = vld [vmem:[#allocation2 + $0x1e1] sm:$0xff]
      %v1055 = vld [vmem:[#allocation2 + $0x1f1] sm:$0xff]
      %v1056 = vld [vmem:[#allocation2 + $0x201] sm:$0xff]
      %v1057 = vld [vmem:[#allocation2 + $0x211] sm:$0xff]
      %v1058 = vld [vmem:[#allocation2 + $0x221] sm:$0xff]
      %v1059 = vld [vmem:[#allocation2 + $0x231] sm:$0xff]
      %v1060 = vld [vmem:[#allocation2 + $0x241] sm:$0xff]
      %v1061 = vld [vmem:[#allocation2 + $0x251] sm:$0xff]
      %v1062 = vlaneseq
      %v1063 = vshrl.u32 %v1062, 7
      %v1064 = vsub.s32 1, %v1063
      %v1065 = vrot.slane %v921, %v1064
      %v1066 = vmul.f32 %v1030, %v1065
      %v1067 = vmul.f32 %v1031, %v1065
      %v1068 = vmul.f32 %v1032, %v1065
      %v1069 = vmul.f32 %v1033, %v1065
      %v1070 = vmul.f32 %v1034, %v1065
      %v1071 = vmul.f32 %v1035, %v1065
      %v1072 = vmul.f32 %v1036, %v1065
      %v1073 = vmul.f32 %v1037, %v1065
      %v1074 = vmul.f32 %v1038, %v1065
      %v1075 = vmul.f32 %v1039, %v1065
      %v1076 = vmul.f32 %v1040, %v1065
      %v1077 = vmul.f32 %v1041, %v1065
      %v1078 = vmul.f32 %v1042, %v1065
      %v1079 = vmul.f32 %v1043, %v1065
      %v1080 = vmul.f32 %v1044, %v1065
      %v1081 = vmul.f32 %v1045, %v1065
      %v1082 = vmul.f32 %v1046, %v1065
      %v1083 = vmul.f32 %v1047, %v1065
      %v1084 = vmul.f32 %v1048, %v1065
      %v1085 = vmul.f32 %v1049, %v1065
      %v1086 = vmul.f32 %v1050, %v1065
      %v1087 = vmul.f32 %v1051, %v1065
      %v1088 = vmul.f32 %v1052, %v1065
      %v1089 = vmul.f32 %v1053, %v1065
      %v1090 = vmul.f32 %v1054, %v1065
      %v1091 = vmul.f32 %v1055, %v1065
      %v1092 = vmul.f32 %v1056, %v1065
      %v1093 = vmul.f32 %v1057, %v1065
      %v1094 = vmul.f32 %v1058, %v1065
      %v1095 = vmul.f32 %v1059, %v1065
      %v1096 = vmul.f32 %v1060, %v1065
      %v1097 = vmul.f32 %v1061, %v1065
      %v1098 = vadd.f32 %v998, %v1066
      %v1099 = vadd.f32 %v999, %v1067
      %v1100 = vadd.f32 %v1000, %v1068
      %v1101 = vadd.f32 %v1001, %v1069
      %v1102 = vadd.f32 %v1002, %v1070
      %v1103 = vadd.f32 %v1003, %v1071
      %v1104 = vadd.f32 %v1004, %v1072
      %v1105 = vadd.f32 %v1005, %v1073
      %v1106 = vadd.f32 %v1006, %v1074
      %v1107 = vadd.f32 %v1007, %v1075
      %v1108 = vadd.f32 %v1008, %v1076
      %v1109 = vadd.f32 %v1009, %v1077
      %v1110 = vadd.f32 %v1010, %v1078
      %v1111 = vadd.f32 %v1011, %v1079
      %v1112 = vadd.f32 %v1012, %v1080
      %v1113 = vadd.f32 %v1013, %v1081
      %v1114 = vadd.f32 %v1014, %v1082
      %v1115 = vadd.f32 %v1015, %v1083
      %v1116 = vadd.f32 %v1016, %v1084
      %v1117 = vadd.f32 %v1017, %v1085
      %v1118 = vadd.f32 %v1018, %v1086
      %v1119 = vadd.f32 %v1019, %v1087
      %v1120 = vadd.f32 %v1020, %v1088
      %v1121 = vadd.f32 %v1021, %v1089
      %v1122 = vadd.f32 %v1022, %v1090
      %v1123 = vadd.f32 %v1023, %v1091
      %v1124 = vadd.f32 %v1024, %v1092
      %v1125 = vadd.f32 %v1025, %v1093
      %v1126 = vadd.f32 %v1026, %v1094
      %v1127 = vadd.f32 %v1027, %v1095
      %v1128 = vadd.f32 %v1028, %v1096
      %v1129 = vadd.f32 %v1029, %v1097
      %v1130 = vld [vmem:[#allocation2 + $0x2] sm:$0xff]
      %v1131 = vld [vmem:[#allocation2 + $0x12] sm:$0xff]
      %v1132 = vld [vmem:[#allocation2 + $0x22] sm:$0xff]
      %v1133 = vld [vmem:[#allocation2 + $0x32] sm:$0xff]
      %v1134 = vld [vmem:[#allocation2 + $0x42] sm:$0xff]
      %v1135 = vld [vmem:[#allocation2 + $0x52] sm:$0xff]
      %v1136 = vld [vmem:[#allocation2 + $0x62] sm:$0xff]
      %v1137 = vld [vmem:[#allocation2 + $0x72] sm:$0xff]
      %v1138 = vld [vmem:[#allocation2 + $0xa2] sm:$0xff]
      %v1139 = vld [vmem:[#allocation2 + $0xb2] sm:$0xff]
      %v1140 = vld [vmem:[#allocation2 + $0xc2] sm:$0xff]
      %v1141 = vld [vmem:[#allocation2 + $0xd2] sm:$0xff]
      %v1142 = vld [vmem:[#allocation2 + $0xe2] sm:$0xff]
      %v1143 = vld [vmem:[#allocation2 + $0xf2] sm:$0xff]
      %v1144 = vld [vmem:[#allocation2 + $0x102] sm:$0xff]
      %v1145 = vld [vmem:[#allocation2 + $0x112] sm:$0xff]
      %v1146 = vld [vmem:[#allocation2 + $0x142] sm:$0xff]
      %v1147 = vld [vmem:[#allocation2 + $0x152] sm:$0xff]
      %v1148 = vld [vmem:[#allocation2 + $0x162] sm:$0xff]
      %v1149 = vld [vmem:[#allocation2 + $0x172] sm:$0xff]
      %v1150 = vld [vmem:[#allocation2 + $0x182] sm:$0xff]
      %v1151 = vld [vmem:[#allocation2 + $0x192] sm:$0xff]
      %v1152 = vld [vmem:[#allocation2 + $0x1a2] sm:$0xff]
      %v1153 = vld [vmem:[#allocation2 + $0x1b2] sm:$0xff]
      %v1154 = vld [vmem:[#allocation2 + $0x1e2] sm:$0xff]
      %v1155 = vld [vmem:[#allocation2 + $0x1f2] sm:$0xff]
      %v1156 = vld [vmem:[#allocation2 + $0x202] sm:$0xff]
      %v1157 = vld [vmem:[#allocation2 + $0x212] sm:$0xff]
      %v1158 = vld [vmem:[#allocation2 + $0x222] sm:$0xff]
      %v1159 = vld [vmem:[#allocation2 + $0x232] sm:$0xff]
      %v1160 = vld [vmem:[#allocation2 + $0x242] sm:$0xff]
      %v1161 = vld [vmem:[#allocation2 + $0x252] sm:$0xff]
      %v1162 = vlaneseq
      %v1163 = vshrl.u32 %v1162, 7
      %v1164 = vsub.s32 2, %v1163
      %v1165 = vrot.slane %v921, %v1164
      %v1166 = vmul.f32 %v1130, %v1165
      %v1167 = vmul.f32 %v1131, %v1165
      %v1168 = vmul.f32 %v1132, %v1165
      %v1169 = vmul.f32 %v1133, %v1165
      %v1170 = vmul.f32 %v1134, %v1165
      %v1171 = vmul.f32 %v1135, %v1165
      %v1172 = vmul.f32 %v1136, %v1165
      %v1173 = vmul.f32 %v1137, %v1165
      %v1174 = vmul.f32 %v1138, %v1165
      %v1175 = vmul.f32 %v1139, %v1165
      %v1176 = vmul.f32 %v1140, %v1165
      %v1177 = vmul.f32 %v1141, %v1165
      %v1178 = vmul.f32 %v1142, %v1165
      %v1179 = vmul.f32 %v1143, %v1165
      %v1180 = vmul.f32 %v1144, %v1165
      %v1181 = vmul.f32 %v1145, %v1165
      %v1182 = vmul.f32 %v1146, %v1165
      %v1183 = vmul.f32 %v1147, %v1165
      %v1184 = vmul.f32 %v1148, %v1165
      %v1185 = vmul.f32 %v1149, %v1165
      %v1186 = vmul.f32 %v1150, %v1165
      %v1187 = vmul.f32 %v1151, %v1165
      %v1188 = vmul.f32 %v1152, %v1165
      %v1189 = vmul.f32 %v1153, %v1165
      %v1190 = vmul.f32 %v1154, %v1165
      %v1191 = vmul.f32 %v1155, %v1165
      %v1192 = vmul.f32 %v1156, %v1165
      %v1193 = vmul.f32 %v1157, %v1165
      %v1194 = vmul.f32 %v1158, %v1165
      %v1195 = vmul.f32 %v1159, %v1165
      %v1196 = vmul.f32 %v1160, %v1165
      %v1197 = vmul.f32 %v1161, %v1165
      %v1198 = vadd.f32 %v1098, %v1166
      %v1199 = vadd.f32 %v1099, %v1167
      %v1200 = vadd.f32 %v1100, %v1168
      %v1201 = vadd.f32 %v1101, %v1169
      %v1202 = vadd.f32 %v1102, %v1170
      %v1203 = vadd.f32 %v1103, %v1171
      %v1204 = vadd.f32 %v1104, %v1172
      %v1205 = vadd.f32 %v1105, %v1173
      %v1206 = vadd.f32 %v1106, %v1174
      %v1207 = vadd.f32 %v1107, %v1175
      %v1208 = vadd.f32 %v1108, %v1176
      %v1209 = vadd.f32 %v1109, %v1177
      %v1210 = vadd.f32 %v1110, %v1178
      %v1211 = vadd.f32 %v1111, %v1179
      %v1212 = vadd.f32 %v1112, %v1180
      %v1213 = vadd.f32 %v1113, %v1181
      %v1214 = vadd.f32 %v1114, %v1182
      %v1215 = vadd.f32 %v1115, %v1183
      %v1216 = vadd.f32 %v1116, %v1184
      %v1217 = vadd.f32 %v1117, %v1185
      %v1218 = vadd.f32 %v1118, %v1186
      %v1219 = vadd.f32 %v1119, %v1187
      %v1220 = vadd.f32 %v1120, %v1188
      %v1221 = vadd.f32 %v1121, %v1189
      %v1222 = vadd.f32 %v1122, %v1190
      %v1223 = vadd.f32 %v1123, %v1191
      %v1224 = vadd.f32 %v1124, %v1192
      %v1225 = vadd.f32 %v1125, %v1193
      %v1226 = vadd.f32 %v1126, %v1194
      %v1227 = vadd.f32 %v1127, %v1195
      %v1228 = vadd.f32 %v1128, %v1196
      %v1229 = vadd.f32 %v1129, %v1197
      %s1230 = scalar_lea.vmem [#allocation2], 16
      %v1231 = vld [vmem:[%s1230] sm:$0xff]
      %v1232 = vld [vmem:[%s1230 + $0x10] sm:$0xff]
      %v1233 = vld [vmem:[%s1230 + $0x20] sm:$0xff]
      %v1234 = vld [vmem:[%s1230 + $0x30] sm:$0xff]
      %v1235 = vld [vmem:[%s1230 + $0x40] sm:$0xff]
      %v1236 = vld [vmem:[%s1230 + $0x50] sm:$0xff]
      %v1237 = vld [vmem:[%s1230 + $0x60] sm:$0xff]
      %v1238 = vld [vmem:[%s1230 + $0x70] sm:$0xff]
      %v1239 = vld [vmem:[%s1230 + $0xa0] sm:$0xff]
      %v1240 = vld [vmem:[%s1230 + $0xb0] sm:$0xff]
      %v1241 = vld [vmem:[%s1230 + $0xc0] sm:$0xff]
      %v1242 = vld [vmem:[%s1230 + $0xd0] sm:$0xff]
      %v1243 = vld [vmem:[%s1230 + $0xe0] sm:$0xff]
      %v1244 = vld [vmem:[%s1230 + $0xf0] sm:$0xff]
      %v1245 = vld [vmem:[%s1230 + $0x100] sm:$0xff]
      %v1246 = vld [vmem:[%s1230 + $0x110] sm:$0xff]
      %v1247 = vld [vmem:[%s1230 + $0x140] sm:$0xff]
      %v1248 = vld [vmem:[%s1230 + $0x150] sm:$0xff]
      %v1249 = vld [vmem:[%s1230 + $0x160] sm:$0xff]
      %v1250 = vld [vmem:[%s1230 + $0x170] sm:$0xff]
      %v1251 = vld [vmem:[%s1230 + $0x180] sm:$0xff]
      %v1252 = vld [vmem:[%s1230 + $0x190] sm:$0xff]
      %v1253 = vld [vmem:[%s1230 + $0x1a0] sm:$0xff]
      %v1254 = vld [vmem:[%s1230 + $0x1b0] sm:$0xff]
      %v1255 = vld [vmem:[%s1230 + $0x1e0] sm:$0xff]
      %v1256 = vld [vmem:[%s1230 + $0x1f0] sm:$0xff]
      %v1257 = vld [vmem:[%s1230 + $0x200] sm:$0xff]
      %v1258 = vld [vmem:[%s1230 + $0x210] sm:$0xff]
      %v1259 = vld [vmem:[%s1230 + $0x220] sm:$0xff]
      %v1260 = vld [vmem:[%s1230 + $0x230] sm:$0xff]
      %v1261 = vld [vmem:[%s1230 + $0x240] sm:$0xff]
      %v1262 = vld [vmem:[%s1230 + $0x250] sm:$0xff]
      %v1263 = vlaneseq
      %v1264 = vshrl.u32 %v1263, 7
      %v1265 = vsub.s32 0, %v1264
      %v1266 = vrot.slane %v922, %v1265
      %v1267 = vmul.f32 %v1231, %v1266
      %v1268 = vmul.f32 %v1232, %v1266
      %v1269 = vmul.f32 %v1233, %v1266
      %v1270 = vmul.f32 %v1234, %v1266
      %v1271 = vmul.f32 %v1235, %v1266
      %v1272 = vmul.f32 %v1236, %v1266
      %v1273 = vmul.f32 %v1237, %v1266
      %v1274 = vmul.f32 %v1238, %v1266
      %v1275 = vmul.f32 %v1239, %v1266
      %v1276 = vmul.f32 %v1240, %v1266
      %v1277 = vmul.f32 %v1241, %v1266
      %v1278 = vmul.f32 %v1242, %v1266
      %v1279 = vmul.f32 %v1243, %v1266
      %v1280 = vmul.f32 %v1244, %v1266
      %v1281 = vmul.f32 %v1245, %v1266
      %v1282 = vmul.f32 %v1246, %v1266
      %v1283 = vmul.f32 %v1247, %v1266
      %v1284 = vmul.f32 %v1248, %v1266
      %v1285 = vmul.f32 %v1249, %v1266
      %v1286 = vmul.f32 %v1250, %v1266
      %v1287 = vmul.f32 %v1251, %v1266
      %v1288 = vmul.f32 %v1252, %v1266
      %v1289 = vmul.f32 %v1253, %v1266
      %v1290 = vmul.f32 %v1254, %v1266
      %v1291 = vmul.f32 %v1255, %v1266
      %v1292 = vmul.f32 %v1256, %v1266
      %v1293 = vmul.f32 %v1257, %v1266
      %v1294 = vmul.f32 %v1258, %v1266
      %v1295 = vmul.f32 %v1259, %v1266
      %v1296 = vmul.f32 %v1260, %v1266
      %v1297 = vmul.f32 %v1261, %v1266
      %v1298 = vmul.f32 %v1262, %v1266
      %v1299 = vadd.f32 %v1198, %v1267
      %v1300 = vadd.f32 %v1199, %v1268
      %v1301 = vadd.f32 %v1200, %v1269
      %v1302 = vadd.f32 %v1201, %v1270
      %v1303 = vadd.f32 %v1202, %v1271
      %v1304 = vadd.f32 %v1203, %v1272
      %v1305 = vadd.f32 %v1204, %v1273
      %v1306 = vadd.f32 %v1205, %v1274
      %v1307 = vadd.f32 %v1206, %v1275
      %v1308 = vadd.f32 %v1207, %v1276
      %v1309 = vadd.f32 %v1208, %v1277
      %v1310 = vadd.f32 %v1209, %v1278
      %v1311 = vadd.f32 %v1210, %v1279
      %v1312 = vadd.f32 %v1211, %v1280
      %v1313 = vadd.f32 %v1212, %v1281
      %v1314 = vadd.f32 %v1213, %v1282
      %v1315 = vadd.f32 %v1214, %v1283
      %v1316 = vadd.f32 %v1215, %v1284
      %v1317 = vadd.f32 %v1216, %v1285
      %v1318 = vadd.f32 %v1217, %v1286
      %v1319 = vadd.f32 %v1218, %v1287
      %v1320 = vadd.f32 %v1219, %v1288
      %v1321 = vadd.f32 %v1220, %v1289
      %v1322 = vadd.f32 %v1221, %v1290
      %v1323 = vadd.f32 %v1222, %v1291
      %v1324 = vadd.f32 %v1223, %v1292
      %v1325 = vadd.f32 %v1224, %v1293
      %v1326 = vadd.f32 %v1225, %v1294
      %v1327 = vadd.f32 %v1226, %v1295
      %v1328 = vadd.f32 %v1227, %v1296
      %v1329 = vadd.f32 %v1228, %v1297
      %v1330 = vadd.f32 %v1229, %v1298
      %v1331 = vld [vmem:[%s1230 + $0x1] sm:$0xff]
      %v1332 = vld [vmem:[%s1230 + $0x11] sm:$0xff]
      %v1333 = vld [vmem:[%s1230 + $0x21] sm:$0xff]
      %v1334 = vld [vmem:[%s1230 + $0x31] sm:$0xff]
      %v1335 = vld [vmem:[%s1230 + $0x41] sm:$0xff]
      %v1336 = vld [vmem:[%s1230 + $0x51] sm:$0xff]
      %v1337 = vld [vmem:[%s1230 + $0x61] sm:$0xff]
      %v1338 = vld [vmem:[%s1230 + $0x71] sm:$0xff]
      %v1339 = vld [vmem:[%s1230 + $0xa1] sm:$0xff]
      %v1340 = vld [vmem:[%s1230 + $0xb1] sm:$0xff]
      %v1341 = vld [vmem:[%s1230 + $0xc1] sm:$0xff]
      %v1342 = vld [vmem:[%s1230 + $0xd1] sm:$0xff]
      %v1343 = vld [vmem:[%s1230 + $0xe1] sm:$0xff]
      %v1344 = vld [vmem:[%s1230 + $0xf1] sm:$0xff]
      %v1345 = vld [vmem:[%s1230 + $0x101] sm:$0xff]
      %v1346 = vld [vmem:[%s1230 + $0x111] sm:$0xff]
      %v1347 = vld [vmem:[%s1230 + $0x141] sm:$0xff]
      %v1348 = vld [vmem:[%s1230 + $0x151] sm:$0xff]
      %v1349 = vld [vmem:[%s1230 + $0x161] sm:$0xff]
      %v1350 = vld [vmem:[%s1230 + $0x171] sm:$0xff]
      %v1351 = vld [vmem:[%s1230 + $0x181] sm:$0xff]
      %v1352 = vld [vmem:[%s1230 + $0x191] sm:$0xff]
      %v1353 = vld [vmem:[%s1230 + $0x1a1] sm:$0xff]
      %v1354 = vld [vmem:[%s1230 + $0x1b1] sm:$0xff]
      %v1355 = vld [vmem:[%s1230 + $0x1e1] sm:$0xff]
      %v1356 = vld [vmem:[%s1230 + $0x1f1] sm:$0xff]
      %v1357 = vld [vmem:[%s1230 + $0x201] sm:$0xff]
      %v1358 = vld [vmem:[%s1230 + $0x211] sm:$0xff]
      %v1359 = vld [vmem:[%s1230 + $0x221] sm:$0xff]
      %v1360 = vld [vmem:[%s1230 + $0x231] sm:$0xff]
      %v1361 = vld [vmem:[%s1230 + $0x241] sm:$0xff]
      %v1362 = vld [vmem:[%s1230 + $0x251] sm:$0xff]
      %v1363 = vlaneseq
      %v1364 = vshrl.u32 %v1363, 7
      %v1365 = vsub.s32 1, %v1364
      %v1366 = vrot.slane %v922, %v1365
      %v1367 = vmul.f32 %v1331, %v1366
      %v1368 = vmul.f32 %v1332, %v1366
      %v1369 = vmul.f32 %v1333, %v1366
      %v1370 = vmul.f32 %v1334, %v1366
      %v1371 = vmul.f32 %v1335, %v1366
      %v1372 = vmul.f32 %v1336, %v1366
      %v1373 = vmul.f32 %v1337, %v1366
      %v1374 = vmul.f32 %v1338, %v1366
      %v1375 = vmul.f32 %v1339, %v1366
      %v1376 = vmul.f32 %v1340, %v1366
      %v1377 = vmul.f32 %v1341, %v1366
      %v1378 = vmul.f32 %v1342, %v1366
      %v1379 = vmul.f32 %v1343, %v1366
      %v1380 = vmul.f32 %v1344, %v1366
      %v1381 = vmul.f32 %v1345, %v1366
      %v1382 = vmul.f32 %v1346, %v1366
      %v1383 = vmul.f32 %v1347, %v1366
      %v1384 = vmul.f32 %v1348, %v1366
      %v1385 = vmul.f32 %v1349, %v1366
      %v1386 = vmul.f32 %v1350, %v1366
      %v1387 = vmul.f32 %v1351, %v1366
      %v1388 = vmul.f32 %v1352, %v1366
      %v1389 = vmul.f32 %v1353, %v1366
      %v1390 = vmul.f32 %v1354, %v1366
      %v1391 = vmul.f32 %v1355, %v1366
      %v1392 = vmul.f32 %v1356, %v1366
      %v1393 = vmul.f32 %v1357, %v1366
      %v1394 = vmul.f32 %v1358, %v1366
      %v1395 = vmul.f32 %v1359, %v1366
      %v1396 = vmul.f32 %v1360, %v1366
      %v1397 = vmul.f32 %v1361, %v1366
      %v1398 = vmul.f32 %v1362, %v1366
      %v1399 = vadd.f32 %v1299, %v1367
      %v1400 = vadd.f32 %v1300, %v1368
      %v1401 = vadd.f32 %v1301, %v1369
      %v1402 = vadd.f32 %v1302, %v1370
      %v1403 = vadd.f32 %v1303, %v1371
      %v1404 = vadd.f32 %v1304, %v1372
      %v1405 = vadd.f32 %v1305, %v1373
      %v1406 = vadd.f32 %v1306, %v1374
      %v1407 = vadd.f32 %v1307, %v1375
      %v1408 = vadd.f32 %v1308, %v1376
      %v1409 = vadd.f32 %v1309, %v1377
      %v1410 = vadd.f32 %v1310, %v1378
      %v1411 = vadd.f32 %v1311, %v1379
      %v1412 = vadd.f32 %v1312, %v1380
      %v1413 = vadd.f32 %v1313, %v1381
      %v1414 = vadd.f32 %v1314, %v1382
      %v1415 = vadd.f32 %v1315, %v1383
      %v1416 = vadd.f32 %v1316, %v1384
      %v1417 = vadd.f32 %v1317, %v1385
      %v1418 = vadd.f32 %v1318, %v1386
      %v1419 = vadd.f32 %v1319, %v1387
      %v1420 = vadd.f32 %v1320, %v1388
      %v1421 = vadd.f32 %v1321, %v1389
      %v1422 = vadd.f32 %v1322, %v1390
      %v1423 = vadd.f32 %v1323, %v1391
      %v1424 = vadd.f32 %v1324, %v1392
      %v1425 = vadd.f32 %v1325, %v1393
      %v1426 = vadd.f32 %v1326, %v1394
      %v1427 = vadd.f32 %v1327, %v1395
      %v1428 = vadd.f32 %v1328, %v1396
      %v1429 = vadd.f32 %v1329, %v1397
      %v1430 = vadd.f32 %v1330, %v1398
      %v1431 = vld [vmem:[%s1230 + $0x2] sm:$0xff]
      %v1432 = vld [vmem:[%s1230 + $0x12] sm:$0xff]
      %v1433 = vld [vmem:[%s1230 + $0x22] sm:$0xff]
      %v1434 = vld [vmem:[%s1230 + $0x32] sm:$0xff]
      %v1435 = vld [vmem:[%s1230 + $0x42] sm:$0xff]
      %v1436 = vld [vmem:[%s1230 + $0x52] sm:$0xff]
      %v1437 = vld [vmem:[%s1230 + $0x62] sm:$0xff]
      %v1438 = vld [vmem:[%s1230 + $0x72] sm:$0xff]
      %v1439 = vld [vmem:[%s1230 + $0xa2] sm:$0xff]
      %v1440 = vld [vmem:[%s1230 + $0xb2] sm:$0xff]
      %v1441 = vld [vmem:[%s1230 + $0xc2] sm:$0xff]
      %v1442 = vld [vmem:[%s1230 + $0xd2] sm:$0xff]
      %v1443 = vld [vmem:[%s1230 + $0xe2] sm:$0xff]
      %v1444 = vld [vmem:[%s1230 + $0xf2] sm:$0xff]
      %v1445 = vld [vmem:[%s1230 + $0x102] sm:$0xff]
      %v1446 = vld [vmem:[%s1230 + $0x112] sm:$0xff]
      %v1447 = vld [vmem:[%s1230 + $0x142] sm:$0xff]
      %v1448 = vld [vmem:[%s1230 + $0x152] sm:$0xff]
      %v1449 = vld [vmem:[%s1230 + $0x162] sm:$0xff]
      %v1450 = vld [vmem:[%s1230 + $0x172] sm:$0xff]
      %v1451 = vld [vmem:[%s1230 + $0x182] sm:$0xff]
      %v1452 = vld [vmem:[%s1230 + $0x192] sm:$0xff]
      %v1453 = vld [vmem:[%s1230 + $0x1a2] sm:$0xff]
      %v1454 = vld [vmem:[%s1230 + $0x1b2] sm:$0xff]
      %v1455 = vld [vmem:[%s1230 + $0x1e2] sm:$0xff]
      %v1456 = vld [vmem:[%s1230 + $0x1f2] sm:$0xff]
      %v1457 = vld [vmem:[%s1230 + $0x202] sm:$0xff]
      %v1458 = vld [vmem:[%s1230 + $0x212] sm:$0xff]
      %v1459 = vld [vmem:[%s1230 + $0x222] sm:$0xff]
      %v1460 = vld [vmem:[%s1230 + $0x232] sm:$0xff]
      %v1461 = vld [vmem:[%s1230 + $0x242] sm:$0xff]
      %v1462 = vld [vmem:[%s1230 + $0x252] sm:$0xff]
      %v1463 = vlaneseq
      %v1464 = vshrl.u32 %v1463, 7
      %v1465 = vsub.s32 2, %v1464
      %v1466 = vrot.slane %v922, %v1465
      %v1467 = vmul.f32 %v1431, %v1466
      %v1468 = vmul.f32 %v1432, %v1466
      %v1469 = vmul.f32 %v1433, %v1466
      %v1470 = vmul.f32 %v1434, %v1466
      %v1471 = vmul.f32 %v1435, %v1466
      %v1472 = vmul.f32 %v1436, %v1466
      %v1473 = vmul.f32 %v1437, %v1466
      %v1474 = vmul.f32 %v1438, %v1466
      %v1475 = vmul.f32 %v1439, %v1466
      %v1476 = vmul.f32 %v1440, %v1466
      %v1477 = vmul.f32 %v1441, %v1466
      %v1478 = vmul.f32 %v1442, %v1466
      %v1479 = vmul.f32 %v1443, %v1466
      %v1480 = vmul.f32 %v1444, %v1466
      %v1481 = vmul.f32 %v1445, %v1466
      %v1482 = vmul.f32 %v1446, %v1466
      %v1483 = vmul.f32 %v1447, %v1466
      %v1484 = vmul.f32 %v1448, %v1466
      %v1485 = vmul.f32 %v1449, %v1466
      %v1486 = vmul.f32 %v1450, %v1466
      %v1487 = vmul.f32 %v1451, %v1466
      %v1488 = vmul.f32 %v1452, %v1466
      %v1489 = vmul.f32 %v1453, %v1466
      %v1490 = vmul.f32 %v1454, %v1466
      %v1491 = vmul.f32 %v1455, %v1466
      %v1492 = vmul.f32 %v1456, %v1466
      %v1493 = vmul.f32 %v1457, %v1466
      %v1494 = vmul.f32 %v1458, %v1466
      %v1495 = vmul.f32 %v1459, %v1466
      %v1496 = vmul.f32 %v1460, %v1466
      %v1497 = vmul.f32 %v1461, %v1466
      %v1498 = vmul.f32 %v1462, %v1466
      %v1499 = vadd.f32 %v1399, %v1467
      %v1500 = vadd.f32 %v1400, %v1468
      %v1501 = vadd.f32 %v1401, %v1469
      %v1502 = vadd.f32 %v1402, %v1470
      %v1503 = vadd.f32 %v1403, %v1471
      %v1504 = vadd.f32 %v1404, %v1472
      %v1505 = vadd.f32 %v1405, %v1473
      %v1506 = vadd.f32 %v1406, %v1474
      %v1507 = vadd.f32 %v1407, %v1475
      %v1508 = vadd.f32 %v1408, %v1476
      %v1509 = vadd.f32 %v1409, %v1477
      %v1510 = vadd.f32 %v1410, %v1478
      %v1511 = vadd.f32 %v1411, %v1479
      %v1512 = vadd.f32 %v1412, %v1480
      %v1513 = vadd.f32 %v1413, %v1481
      %v1514 = vadd.f32 %v1414, %v1482
      %v1515 = vadd.f32 %v1415, %v1483
      %v1516 = vadd.f32 %v1416, %v1484
      %v1517 = vadd.f32 %v1417, %v1485
      %v1518 = vadd.f32 %v1418, %v1486
      %v1519 = vadd.f32 %v1419, %v1487
      %v1520 = vadd.f32 %v1420, %v1488
      %v1521 = vadd.f32 %v1421, %v1489
      %v1522 = vadd.f32 %v1422, %v1490
      %v1523 = vadd.f32 %v1423, %v1491
      %v1524 = vadd.f32 %v1424, %v1492
      %v1525 = vadd.f32 %v1425, %v1493
      %v1526 = vadd.f32 %v1426, %v1494
      %v1527 = vadd.f32 %v1427, %v1495
      %v1528 = vadd.f32 %v1428, %v1496
      %v1529 = vadd.f32 %v1429, %v1497
      %v1530 = vadd.f32 %v1430, %v1498
      %s1531 = scalar_lea.vmem [#allocation2], 32
      %v1532 = vld [vmem:[%s1531] sm:$0xff]
      %v1533 = vld [vmem:[%s1531 + $0x10] sm:$0xff]
      %v1534 = vld [vmem:[%s1531 + $0x20] sm:$0xff]
      %v1535 = vld [vmem:[%s1531 + $0x30] sm:$0xff]
      %v1536 = vld [vmem:[%s1531 + $0x40] sm:$0xff]
      %v1537 = vld [vmem:[%s1531 + $0x50] sm:$0xff]
      %v1538 = vld [vmem:[%s1531 + $0x60] sm:$0xff]
      %v1539 = vld [vmem:[%s1531 + $0x70] sm:$0xff]
      %v1540 = vld [vmem:[%s1531 + $0xa0] sm:$0xff]
      %v1541 = vld [vmem:[%s1531 + $0xb0] sm:$0xff]
      %v1542 = vld [vmem:[%s1531 + $0xc0] sm:$0xff]
      %v1543 = vld [vmem:[%s1531 + $0xd0] sm:$0xff]
      %v1544 = vld [vmem:[%s1531 + $0xe0] sm:$0xff]
      %v1545 = vld [vmem:[%s1531 + $0xf0] sm:$0xff]
      %v1546 = vld [vmem:[%s1531 + $0x100] sm:$0xff]
      %v1547 = vld [vmem:[%s1531 + $0x110] sm:$0xff]
      %v1548 = vld [vmem:[%s1531 + $0x140] sm:$0xff]
      %v1549 = vld [vmem:[%s1531 + $0x150] sm:$0xff]
      %v1550 = vld [vmem:[%s1531 + $0x160] sm:$0xff]
      %v1551 = vld [vmem:[%s1531 + $0x170] sm:$0xff]
      %v1552 = vld [vmem:[%s1531 + $0x180] sm:$0xff]
      %v1553 = vld [vmem:[%s1531 + $0x190] sm:$0xff]
      %v1554 = vld [vmem:[%s1531 + $0x1a0] sm:$0xff]
      %v1555 = vld [vmem:[%s1531 + $0x1b0] sm:$0xff]
      %v1556 = vld [vmem:[%s1531 + $0x1e0] sm:$0xff]
      %v1557 = vld [vmem:[%s1531 + $0x1f0] sm:$0xff]
      %v1558 = vld [vmem:[%s1531 + $0x200] sm:$0xff]
      %v1559 = vld [vmem:[%s1531 + $0x210] sm:$0xff]
      %v1560 = vld [vmem:[%s1531 + $0x220] sm:$0xff]
      %v1561 = vld [vmem:[%s1531 + $0x230] sm:$0xff]
      %v1562 = vld [vmem:[%s1531 + $0x240] sm:$0xff]
      %v1563 = vld [vmem:[%s1531 + $0x250] sm:$0xff]
      %v1564 = vlaneseq
      %v1565 = vshrl.u32 %v1564, 7
      %v1566 = vsub.s32 0, %v1565
      %v1567 = vrot.slane %v923, %v1566
      %v1568 = vmul.f32 %v1532, %v1567
      %v1569 = vmul.f32 %v1533, %v1567
      %v1570 = vmul.f32 %v1534, %v1567
      %v1571 = vmul.f32 %v1535, %v1567
      %v1572 = vmul.f32 %v1536, %v1567
      %v1573 = vmul.f32 %v1537, %v1567
      %v1574 = vmul.f32 %v1538, %v1567
      %v1575 = vmul.f32 %v1539, %v1567
      %v1576 = vmul.f32 %v1540, %v1567
      %v1577 = vmul.f32 %v1541, %v1567
      %v1578 = vmul.f32 %v1542, %v1567
      %v1579 = vmul.f32 %v1543, %v1567
      %v1580 = vmul.f32 %v1544, %v1567
      %v1581 = vmul.f32 %v1545, %v1567
      %v1582 = vmul.f32 %v1546, %v1567
      %v1583 = vmul.f32 %v1547, %v1567
      %v1584 = vmul.f32 %v1548, %v1567
      %v1585 = vmul.f32 %v1549, %v1567
      %v1586 = vmul.f32 %v1550, %v1567
      %v1587 = vmul.f32 %v1551, %v1567
      %v1588 = vmul.f32 %v1552, %v1567
      %v1589 = vmul.f32 %v1553, %v1567
      %v1590 = vmul.f32 %v1554, %v1567
      %v1591 = vmul.f32 %v1555, %v1567
      %v1592 = vmul.f32 %v1556, %v1567
      %v1593 = vmul.f32 %v1557, %v1567
      %v1594 = vmul.f32 %v1558, %v1567
      %v1595 = vmul.f32 %v1559, %v1567
      %v1596 = vmul.f32 %v1560, %v1567
      %v1597 = vmul.f32 %v1561, %v1567
      %v1598 = vmul.f32 %v1562, %v1567
      %v1599 = vmul.f32 %v1563, %v1567
      %v1600 = vadd.f32 %v1499, %v1568
      %v1601 = vadd.f32 %v1500, %v1569
      %v1602 = vadd.f32 %v1501, %v1570
      %v1603 = vadd.f32 %v1502, %v1571
      %v1604 = vadd.f32 %v1503, %v1572
      %v1605 = vadd.f32 %v1504, %v1573
      %v1606 = vadd.f32 %v1505, %v1574
      %v1607 = vadd.f32 %v1506, %v1575
      %v1608 = vadd.f32 %v1507, %v1576
      %v1609 = vadd.f32 %v1508, %v1577
      %v1610 = vadd.f32 %v1509, %v1578
      %v1611 = vadd.f32 %v1510, %v1579
      %v1612 = vadd.f32 %v1511, %v1580
      %v1613 = vadd.f32 %v1512, %v1581
      %v1614 = vadd.f32 %v1513, %v1582
      %v1615 = vadd.f32 %v1514, %v1583
      %v1616 = vadd.f32 %v1515, %v1584
      %v1617 = vadd.f32 %v1516, %v1585
      %v1618 = vadd.f32 %v1517, %v1586
      %v1619 = vadd.f32 %v1518, %v1587
      %v1620 = vadd.f32 %v1519, %v1588
      %v1621 = vadd.f32 %v1520, %v1589
      %v1622 = vadd.f32 %v1521, %v1590
      %v1623 = vadd.f32 %v1522, %v1591
      %v1624 = vadd.f32 %v1523, %v1592
      %v1625 = vadd.f32 %v1524, %v1593
      %v1626 = vadd.f32 %v1525, %v1594
      %v1627 = vadd.f32 %v1526, %v1595
      %v1628 = vadd.f32 %v1527, %v1596
      %v1629 = vadd.f32 %v1528, %v1597
      %v1630 = vadd.f32 %v1529, %v1598
      %v1631 = vadd.f32 %v1530, %v1599
      %v1632 = vld [vmem:[%s1531 + $0x1] sm:$0xff]
      %v1633 = vld [vmem:[%s1531 + $0x11] sm:$0xff]
      %v1634 = vld [vmem:[%s1531 + $0x21] sm:$0xff]
      %v1635 = vld [vmem:[%s1531 + $0x31] sm:$0xff]
      %v1636 = vld [vmem:[%s1531 + $0x41] sm:$0xff]
      %v1637 = vld [vmem:[%s1531 + $0x51] sm:$0xff]
      %v1638 = vld [vmem:[%s1531 + $0x61] sm:$0xff]
      %v1639 = vld [vmem:[%s1531 + $0x71] sm:$0xff]
      %v1640 = vld [vmem:[%s1531 + $0xa1] sm:$0xff]
      %v1641 = vld [vmem:[%s1531 + $0xb1] sm:$0xff]
      %v1642 = vld [vmem:[%s1531 + $0xc1] sm:$0xff]
      %v1643 = vld [vmem:[%s1531 + $0xd1] sm:$0xff]
      %v1644 = vld [vmem:[%s1531 + $0xe1] sm:$0xff]
      %v1645 = vld [vmem:[%s1531 + $0xf1] sm:$0xff]
      %v1646 = vld [vmem:[%s1531 + $0x101] sm:$0xff]
      %v1647 = vld [vmem:[%s1531 + $0x111] sm:$0xff]
      %v1648 = vld [vmem:[%s1531 + $0x141] sm:$0xff]
      %v1649 = vld [vmem:[%s1531 + $0x151] sm:$0xff]
      %v1650 = vld [vmem:[%s1531 + $0x161] sm:$0xff]
      %v1651 = vld [vmem:[%s1531 + $0x171] sm:$0xff]
      %v1652 = vld [vmem:[%s1531 + $0x181] sm:$0xff]
      %v1653 = vld [vmem:[%s1531 + $0x191] sm:$0xff]
      %v1654 = vld [vmem:[%s1531 + $0x1a1] sm:$0xff]
      %v1655 = vld [vmem:[%s1531 + $0x1b1] sm:$0xff]
      %v1656 = vld [vmem:[%s1531 + $0x1e1] sm:$0xff]
      %v1657 = vld [vmem:[%s1531 + $0x1f1] sm:$0xff]
      %v1658 = vld [vmem:[%s1531 + $0x201] sm:$0xff]
      %v1659 = vld [vmem:[%s1531 + $0x211] sm:$0xff]
      %v1660 = vld [vmem:[%s1531 + $0x221] sm:$0xff]
      %v1661 = vld [vmem:[%s1531 + $0x231] sm:$0xff]
      %v1662 = vld [vmem:[%s1531 + $0x241] sm:$0xff]
      %v1663 = vld [vmem:[%s1531 + $0x251] sm:$0xff]
      %v1664 = vlaneseq
      %v1665 = vshrl.u32 %v1664, 7
      %v1666 = vsub.s32 1, %v1665
      %v1667 = vrot.slane %v923, %v1666
      %v1668 = vmul.f32 %v1632, %v1667
      %v1669 = vmul.f32 %v1633, %v1667
      %v1670 = vmul.f32 %v1634, %v1667
      %v1671 = vmul.f32 %v1635, %v1667
      %v1672 = vmul.f32 %v1636, %v1667
      %v1673 = vmul.f32 %v1637, %v1667
      %v1674 = vmul.f32 %v1638, %v1667
      %v1675 = vmul.f32 %v1639, %v1667
      %v1676 = vmul.f32 %v1640, %v1667
      %v1677 = vmul.f32 %v1641, %v1667
      %v1678 = vmul.f32 %v1642, %v1667
      %v1679 = vmul.f32 %v1643, %v1667
      %v1680 = vmul.f32 %v1644, %v1667
      %v1681 = vmul.f32 %v1645, %v1667
      %v1682 = vmul.f32 %v1646, %v1667
      %v1683 = vmul.f32 %v1647, %v1667
      %v1684 = vmul.f32 %v1648, %v1667
      %v1685 = vmul.f32 %v1649, %v1667
      %v1686 = vmul.f32 %v1650, %v1667
      %v1687 = vmul.f32 %v1651, %v1667
      %v1688 = vmul.f32 %v1652, %v1667
      %v1689 = vmul.f32 %v1653, %v1667
      %v1690 = vmul.f32 %v1654, %v1667
      %v1691 = vmul.f32 %v1655, %v1667
      %v1692 = vmul.f32 %v1656, %v1667
      %v1693 = vmul.f32 %v1657, %v1667
      %v1694 = vmul.f32 %v1658, %v1667
      %v1695 = vmul.f32 %v1659, %v1667
      %v1696 = vmul.f32 %v1660, %v1667
      %v1697 = vmul.f32 %v1661, %v1667
      %v1698 = vmul.f32 %v1662, %v1667
      %v1699 = vmul.f32 %v1663, %v1667
      %v1700 = vadd.f32 %v1600, %v1668
      %v1701 = vadd.f32 %v1601, %v1669
      %v1702 = vadd.f32 %v1602, %v1670
      %v1703 = vadd.f32 %v1603, %v1671
      %v1704 = vadd.f32 %v1604, %v1672
      %v1705 = vadd.f32 %v1605, %v1673
      %v1706 = vadd.f32 %v1606, %v1674
      %v1707 = vadd.f32 %v1607, %v1675
      %v1708 = vadd.f32 %v1608, %v1676
      %v1709 = vadd.f32 %v1609, %v1677
      %v1710 = vadd.f32 %v1610, %v1678
      %v1711 = vadd.f32 %v1611, %v1679
      %v1712 = vadd.f32 %v1612, %v1680
      %v1713 = vadd.f32 %v1613, %v1681
      %v1714 = vadd.f32 %v1614, %v1682
      %v1715 = vadd.f32 %v1615, %v1683
      %v1716 = vadd.f32 %v1616, %v1684
      %v1717 = vadd.f32 %v1617, %v1685
      %v1718 = vadd.f32 %v1618, %v1686
      %v1719 = vadd.f32 %v1619, %v1687
      %v1720 = vadd.f32 %v1620, %v1688
      %v1721 = vadd.f32 %v1621, %v1689
      %v1722 = vadd.f32 %v1622, %v1690
      %v1723 = vadd.f32 %v1623, %v1691
      %v1724 = vadd.f32 %v1624, %v1692
      %v1725 = vadd.f32 %v1625, %v1693
      %v1726 = vadd.f32 %v1626, %v1694
      %v1727 = vadd.f32 %v1627, %v1695
      %v1728 = vadd.f32 %v1628, %v1696
      %v1729 = vadd.f32 %v1629, %v1697
      %v1730 = vadd.f32 %v1630, %v1698
      %v1731 = vadd.f32 %v1631, %v1699
      %v1732 = vld [vmem:[%s1531 + $0x2] sm:$0xff]
      %v1733 = vld [vmem:[%s1531 + $0x12] sm:$0xff]
      %v1734 = vld [vmem:[%s1531 + $0x22] sm:$0xff]
      %v1735 = vld [vmem:[%s1531 + $0x32] sm:$0xff]
      %v1736 = vld [vmem:[%s1531 + $0x42] sm:$0xff]
      %v1737 = vld [vmem:[%s1531 + $0x52] sm:$0xff]
      %v1738 = vld [vmem:[%s1531 + $0x62] sm:$0xff]
      %v1739 = vld [vmem:[%s1531 + $0x72] sm:$0xff]
      %v1740 = vld [vmem:[%s1531 + $0xa2] sm:$0xff]
      %v1741 = vld [vmem:[%s1531 + $0xb2] sm:$0xff]
      %v1742 = vld [vmem:[%s1531 + $0xc2] sm:$0xff]
      %v1743 = vld [vmem:[%s1531 + $0xd2] sm:$0xff]
      %v1744 = vld [vmem:[%s1531 + $0xe2] sm:$0xff]
      %v1745 = vld [vmem:[%s1531 + $0xf2] sm:$0xff]
      %v1746 = vld [vmem:[%s1531 + $0x102] sm:$0xff]
      %v1747 = vld [vmem:[%s1531 + $0x112] sm:$0xff]
      %v1748 = vld [vmem:[%s1531 + $0x142] sm:$0xff]
      %v1749 = vld [vmem:[%s1531 + $0x152] sm:$0xff]
      %v1750 = vld [vmem:[%s1531 + $0x162] sm:$0xff]
      %v1751 = vld [vmem:[%s1531 + $0x172] sm:$0xff]
      %v1752 = vld [vmem:[%s1531 + $0x182] sm:$0xff]
      %v1753 = vld [vmem:[%s1531 + $0x192] sm:$0xff]
      %v1754 = vld [vmem:[%s1531 + $0x1a2] sm:$0xff]
      %v1755 = vld [vmem:[%s1531 + $0x1b2] sm:$0xff]
      %v1756 = vld [vmem:[%s1531 + $0x1e2] sm:$0xff]
      %v1757 = vld [vmem:[%s1531 + $0x1f2] sm:$0xff]
      %v1758 = vld [vmem:[%s1531 + $0x202] sm:$0xff]
      %v1759 = vld [vmem:[%s1531 + $0x212] sm:$0xff]
      %v1760 = vld [vmem:[%s1531 + $0x222] sm:$0xff]
      %v1761 = vld [vmem:[%s1531 + $0x232] sm:$0xff]
      %v1762 = vld [vmem:[%s1531 + $0x242] sm:$0xff]
      %v1763 = vld [vmem:[%s1531 + $0x252] sm:$0xff]
      %v1764 = vlaneseq
      %v1765 = vshrl.u32 %v1764, 7
      %v1766 = vsub.s32 2, %v1765
      %v1767 = vrot.slane %v923, %v1766
      %v1768 = vmul.f32 %v1732, %v1767
      %v1769 = vmul.f32 %v1733, %v1767
      %v1770 = vmul.f32 %v1734, %v1767
      %v1771 = vmul.f32 %v1735, %v1767
      %v1772 = vmul.f32 %v1736, %v1767
      %v1773 = vmul.f32 %v1737, %v1767
      %v1774 = vmul.f32 %v1738, %v1767
      %v1775 = vmul.f32 %v1739, %v1767
      %v1776 = vmul.f32 %v1740, %v1767
      %v1777 = vmul.f32 %v1741, %v1767
      %v1778 = vmul.f32 %v1742, %v1767
      %v1779 = vmul.f32 %v1743, %v1767
      %v1780 = vmul.f32 %v1744, %v1767
      %v1781 = vmul.f32 %v1745, %v1767
      %v1782 = vmul.f32 %v1746, %v1767
      %v1783 = vmul.f32 %v1747, %v1767
      %v1784 = vmul.f32 %v1748, %v1767
      %v1785 = vmul.f32 %v1749, %v1767
      %v1786 = vmul.f32 %v1750, %v1767
      %v1787 = vmul.f32 %v1751, %v1767
      %v1788 = vmul.f32 %v1752, %v1767
      %v1789 = vmul.f32 %v1753, %v1767
      %v1790 = vmul.f32 %v1754, %v1767
      %v1791 = vmul.f32 %v1755, %v1767
      %v1792 = vmul.f32 %v1756, %v1767
      %v1793 = vmul.f32 %v1757, %v1767
      %v1794 = vmul.f32 %v1758, %v1767
      %v1795 = vmul.f32 %v1759, %v1767
      %v1796 = vmul.f32 %v1760, %v1767
      %v1797 = vmul.f32 %v1761, %v1767
      %v1798 = vmul.f32 %v1762, %v1767
      %v1799 = vmul.f32 %v1763, %v1767
      %v1800 = vadd.f32 %v1700, %v1768
      %v1801 = vadd.f32 %v1701, %v1769
      %v1802 = vadd.f32 %v1702, %v1770
      %v1803 = vadd.f32 %v1703, %v1771
      %v1804 = vadd.f32 %v1704, %v1772
      %v1805 = vadd.f32 %v1705, %v1773
      %v1806 = vadd.f32 %v1706, %v1774
      %v1807 = vadd.f32 %v1707, %v1775
      %v1808 = vadd.f32 %v1708, %v1776
      %v1809 = vadd.f32 %v1709, %v1777
      %v1810 = vadd.f32 %v1710, %v1778
      %v1811 = vadd.f32 %v1711, %v1779
      %v1812 = vadd.f32 %v1712, %v1780
      %v1813 = vadd.f32 %v1713, %v1781
      %v1814 = vadd.f32 %v1714, %v1782
      %v1815 = vadd.f32 %v1715, %v1783
      %v1816 = vadd.f32 %v1716, %v1784
      %v1817 = vadd.f32 %v1717, %v1785
      %v1818 = vadd.f32 %v1718, %v1786
      %v1819 = vadd.f32 %v1719, %v1787
      %v1820 = vadd.f32 %v1720, %v1788
      %v1821 = vadd.f32 %v1721, %v1789
      %v1822 = vadd.f32 %v1722, %v1790
      %v1823 = vadd.f32 %v1723, %v1791
      %v1824 = vadd.f32 %v1724, %v1792
      %v1825 = vadd.f32 %v1725, %v1793
      %v1826 = vadd.f32 %v1726, %v1794
      %v1827 = vadd.f32 %v1727, %v1795
      %v1828 = vadd.f32 %v1728, %v1796
      %v1829 = vadd.f32 %v1729, %v1797
      %v1830 = vadd.f32 %v1730, %v1798
      %v1831 = vadd.f32 %v1731, %v1799
      %s1832 = scalar_lea.vmem [#allocation2], 160
      %v1833 = vld [vmem:[%s1832] sm:$0xff]
      %v1834 = vld [vmem:[%s1832 + $0x10] sm:$0xff]
      %v1835 = vld [vmem:[%s1832 + $0x20] sm:$0xff]
      %v1836 = vld [vmem:[%s1832 + $0x30] sm:$0xff]
      %v1837 = vld [vmem:[%s1832 + $0x40] sm:$0xff]
      %v1838 = vld [vmem:[%s1832 + $0x50] sm:$0xff]
      %v1839 = vld [vmem:[%s1832 + $0x60] sm:$0xff]
      %v1840 = vld [vmem:[%s1832 + $0x70] sm:$0xff]
      %v1841 = vld [vmem:[%s1832 + $0xa0] sm:$0xff]
      %v1842 = vld [vmem:[%s1832 + $0xb0] sm:$0xff]
      %v1843 = vld [vmem:[%s1832 + $0xc0] sm:$0xff]
      %v1844 = vld [vmem:[%s1832 + $0xd0] sm:$0xff]
      %v1845 = vld [vmem:[%s1832 + $0xe0] sm:$0xff]
      %v1846 = vld [vmem:[%s1832 + $0xf0] sm:$0xff]
      %v1847 = vld [vmem:[%s1832 + $0x100] sm:$0xff]
      %v1848 = vld [vmem:[%s1832 + $0x110] sm:$0xff]
      %v1849 = vld [vmem:[%s1832 + $0x140] sm:$0xff]
      %v1850 = vld [vmem:[%s1832 + $0x150] sm:$0xff]
      %v1851 = vld [vmem:[%s1832 + $0x160] sm:$0xff]
      %v1852 = vld [vmem:[%s1832 + $0x170] sm:$0xff]
      %v1853 = vld [vmem:[%s1832 + $0x180] sm:$0xff]
      %v1854 = vld [vmem:[%s1832 + $0x190] sm:$0xff]
      %v1855 = vld [vmem:[%s1832 + $0x1a0] sm:$0xff]
      %v1856 = vld [vmem:[%s1832 + $0x1b0] sm:$0xff]
      %v1857 = vld [vmem:[%s1832 + $0x1e0] sm:$0xff]
      %v1858 = vld [vmem:[%s1832 + $0x1f0] sm:$0xff]
      %v1859 = vld [vmem:[%s1832 + $0x200] sm:$0xff]
      %v1860 = vld [vmem:[%s1832 + $0x210] sm:$0xff]
      %v1861 = vld [vmem:[%s1832 + $0x220] sm:$0xff]
      %v1862 = vld [vmem:[%s1832 + $0x230] sm:$0xff]
      %v1863 = vld [vmem:[%s1832 + $0x240] sm:$0xff]
      %v1864 = vld [vmem:[%s1832 + $0x250] sm:$0xff]
      %v1865 = vlaneseq
      %v1866 = vshrl.u32 %v1865, 7
      %v1867 = vsub.s32 0, %v1866
      %v1868 = vrot.slane %v924, %v1867
      %v1869 = vmul.f32 %v1833, %v1868
      %v1870 = vmul.f32 %v1834, %v1868
      %v1871 = vmul.f32 %v1835, %v1868
      %v1872 = vmul.f32 %v1836, %v1868
      %v1873 = vmul.f32 %v1837, %v1868
      %v1874 = vmul.f32 %v1838, %v1868
      %v1875 = vmul.f32 %v1839, %v1868
      %v1876 = vmul.f32 %v1840, %v1868
      %v1877 = vmul.f32 %v1841, %v1868
      %v1878 = vmul.f32 %v1842, %v1868
      %v1879 = vmul.f32 %v1843, %v1868
      %v1880 = vmul.f32 %v1844, %v1868
      %v1881 = vmul.f32 %v1845, %v1868
      %v1882 = vmul.f32 %v1846, %v1868
      %v1883 = vmul.f32 %v1847, %v1868
      %v1884 = vmul.f32 %v1848, %v1868
      %v1885 = vmul.f32 %v1849, %v1868
      %v1886 = vmul.f32 %v1850, %v1868
      %v1887 = vmul.f32 %v1851, %v1868
      %v1888 = vmul.f32 %v1852, %v1868
      %v1889 = vmul.f32 %v1853, %v1868
      %v1890 = vmul.f32 %v1854, %v1868
      %v1891 = vmul.f32 %v1855, %v1868
      %v1892 = vmul.f32 %v1856, %v1868
      %v1893 = vmul.f32 %v1857, %v1868
      %v1894 = vmul.f32 %v1858, %v1868
      %v1895 = vmul.f32 %v1859, %v1868
      %v1896 = vmul.f32 %v1860, %v1868
      %v1897 = vmul.f32 %v1861, %v1868
      %v1898 = vmul.f32 %v1862, %v1868
      %v1899 = vmul.f32 %v1863, %v1868
      %v1900 = vmul.f32 %v1864, %v1868
      %v1901 = vadd.f32 %v1800, %v1869
      %v1902 = vadd.f32 %v1801, %v1870
      %v1903 = vadd.f32 %v1802, %v1871
      %v1904 = vadd.f32 %v1803, %v1872
      %v1905 = vadd.f32 %v1804, %v1873
      %v1906 = vadd.f32 %v1805, %v1874
      %v1907 = vadd.f32 %v1806, %v1875
      %v1908 = vadd.f32 %v1807, %v1876
      %v1909 = vadd.f32 %v1808, %v1877
      %v1910 = vadd.f32 %v1809, %v1878
      %v1911 = vadd.f32 %v1810, %v1879
      %v1912 = vadd.f32 %v1811, %v1880
      %v1913 = vadd.f32 %v1812, %v1881
      %v1914 = vadd.f32 %v1813, %v1882
      %v1915 = vadd.f32 %v1814, %v1883
      %v1916 = vadd.f32 %v1815, %v1884
      %v1917 = vadd.f32 %v1816, %v1885
      %v1918 = vadd.f32 %v1817, %v1886
      %v1919 = vadd.f32 %v1818, %v1887
      %v1920 = vadd.f32 %v1819, %v1888
      %v1921 = vadd.f32 %v1820, %v1889
      %v1922 = vadd.f32 %v1821, %v1890
      %v1923 = vadd.f32 %v1822, %v1891
      %v1924 = vadd.f32 %v1823, %v1892
      %v1925 = vadd.f32 %v1824, %v1893
      %v1926 = vadd.f32 %v1825, %v1894
      %v1927 = vadd.f32 %v1826, %v1895
      %v1928 = vadd.f32 %v1827, %v1896
      %v1929 = vadd.f32 %v1828, %v1897
      %v1930 = vadd.f32 %v1829, %v1898
      %v1931 = vadd.f32 %v1830, %v1899
      %v1932 = vadd.f32 %v1831, %v1900
      %v1933 = vld [vmem:[%s1832 + $0x1] sm:$0xff]
      %v1934 = vld [vmem:[%s1832 + $0x11] sm:$0xff]
      %v1935 = vld [vmem:[%s1832 + $0x21] sm:$0xff]
      %v1936 = vld [vmem:[%s1832 + $0x31] sm:$0xff]
      %v1937 = vld [vmem:[%s1832 + $0x41] sm:$0xff]
      %v1938 = vld [vmem:[%s1832 + $0x51] sm:$0xff]
      %v1939 = vld [vmem:[%s1832 + $0x61] sm:$0xff]
      %v1940 = vld [vmem:[%s1832 + $0x71] sm:$0xff]
      %v1941 = vld [vmem:[%s1832 + $0xa1] sm:$0xff]
      %v1942 = vld [vmem:[%s1832 + $0xb1] sm:$0xff]
      %v1943 = vld [vmem:[%s1832 + $0xc1] sm:$0xff]
      %v1944 = vld [vmem:[%s1832 + $0xd1] sm:$0xff]
      %v1945 = vld [vmem:[%s1832 + $0xe1] sm:$0xff]
      %v1946 = vld [vmem:[%s1832 + $0xf1] sm:$0xff]
      %v1947 = vld [vmem:[%s1832 + $0x101] sm:$0xff]
      %v1948 = vld [vmem:[%s1832 + $0x111] sm:$0xff]
      %v1949 = vld [vmem:[%s1832 + $0x141] sm:$0xff]
      %v1950 = vld [vmem:[%s1832 + $0x151] sm:$0xff]
      %v1951 = vld [vmem:[%s1832 + $0x161] sm:$0xff]
      %v1952 = vld [vmem:[%s1832 + $0x171] sm:$0xff]
      %v1953 = vld [vmem:[%s1832 + $0x181] sm:$0xff]
      %v1954 = vld [vmem:[%s1832 + $0x191] sm:$0xff]
      %v1955 = vld [vmem:[%s1832 + $0x1a1] sm:$0xff]
      %v1956 = vld [vmem:[%s1832 + $0x1b1] sm:$0xff]
      %v1957 = vld [vmem:[%s1832 + $0x1e1] sm:$0xff]
      %v1958 = vld [vmem:[%s1832 + $0x1f1] sm:$0xff]
      %v1959 = vld [vmem:[%s1832 + $0x201] sm:$0xff]
      %v1960 = vld [vmem:[%s1832 + $0x211] sm:$0xff]
      %v1961 = vld [vmem:[%s1832 + $0x221] sm:$0xff]
      %v1962 = vld [vmem:[%s1832 + $0x231] sm:$0xff]
      %v1963 = vld [vmem:[%s1832 + $0x241] sm:$0xff]
      %v1964 = vld [vmem:[%s1832 + $0x251] sm:$0xff]
      %v1965 = vlaneseq
      %v1966 = vshrl.u32 %v1965, 7
      %v1967 = vsub.s32 1, %v1966
      %v1968 = vrot.slane %v924, %v1967
      %v1969 = vmul.f32 %v1933, %v1968
      %v1970 = vmul.f32 %v1934, %v1968
      %v1971 = vmul.f32 %v1935, %v1968
      %v1972 = vmul.f32 %v1936, %v1968
      %v1973 = vmul.f32 %v1937, %v1968
      %v1974 = vmul.f32 %v1938, %v1968
      %v1975 = vmul.f32 %v1939, %v1968
      %v1976 = vmul.f32 %v1940, %v1968
      %v1977 = vmul.f32 %v1941, %v1968
      %v1978 = vmul.f32 %v1942, %v1968
      %v1979 = vmul.f32 %v1943, %v1968
      %v1980 = vmul.f32 %v1944, %v1968
      %v1981 = vmul.f32 %v1945, %v1968
      %v1982 = vmul.f32 %v1946, %v1968
      %v1983 = vmul.f32 %v1947, %v1968
      %v1984 = vmul.f32 %v1948, %v1968
      %v1985 = vmul.f32 %v1949, %v1968
      %v1986 = vmul.f32 %v1950, %v1968
      %v1987 = vmul.f32 %v1951, %v1968
      %v1988 = vmul.f32 %v1952, %v1968
      %v1989 = vmul.f32 %v1953, %v1968
      %v1990 = vmul.f32 %v1954, %v1968
      %v1991 = vmul.f32 %v1955, %v1968
      %v1992 = vmul.f32 %v1956, %v1968
      %v1993 = vmul.f32 %v1957, %v1968
      %v1994 = vmul.f32 %v1958, %v1968
      %v1995 = vmul.f32 %v1959, %v1968
      %v1996 = vmul.f32 %v1960, %v1968
      %v1997 = vmul.f32 %v1961, %v1968
      %v1998 = vmul.f32 %v1962, %v1968
      %v1999 = vmul.f32 %v1963, %v1968
      %v2000 = vmul.f32 %v1964, %v1968
      %v2001 = vadd.f32 %v1901, %v1969
      %v2002 = vadd.f32 %v1902, %v1970
      %v2003 = vadd.f32 %v1903, %v1971
      %v2004 = vadd.f32 %v1904, %v1972
      %v2005 = vadd.f32 %v1905, %v1973
      %v2006 = vadd.f32 %v1906, %v1974
      %v2007 = vadd.f32 %v1907, %v1975
      %v2008 = vadd.f32 %v1908, %v1976
      %v2009 = vadd.f32 %v1909, %v1977
      %v2010 = vadd.f32 %v1910, %v1978
      %v2011 = vadd.f32 %v1911, %v1979
      %v2012 = vadd.f32 %v1912, %v1980
      %v2013 = vadd.f32 %v1913, %v1981
      %v2014 = vadd.f32 %v1914, %v1982
      %v2015 = vadd.f32 %v1915, %v1983
      %v2016 = vadd.f32 %v1916, %v1984
      %v2017 = vadd.f32 %v1917, %v1985
      %v2018 = vadd.f32 %v1918, %v1986
      %v2019 = vadd.f32 %v1919, %v1987
      %v2020 = vadd.f32 %v1920, %v1988
      %v2021 = vadd.f32 %v1921, %v1989
      %v2022 = vadd.f32 %v1922, %v1990
      %v2023 = vadd.f32 %v1923, %v1991
      %v2024 = vadd.f32 %v1924, %v1992
      %v2025 = vadd.f32 %v1925, %v1993
      %v2026 = vadd.f32 %v1926, %v1994
      %v2027 = vadd.f32 %v1927, %v1995
      %v2028 = vadd.f32 %v1928, %v1996
      %v2029 = vadd.f32 %v1929, %v1997
      %v2030 = vadd.f32 %v1930, %v1998
      %v2031 = vadd.f32 %v1931, %v1999
      %v2032 = vadd.f32 %v1932, %v2000
      %v2033 = vld [vmem:[%s1832 + $0x2] sm:$0xff]
      %v2034 = vld [vmem:[%s1832 + $0x12] sm:$0xff]
      %v2035 = vld [vmem:[%s1832 + $0x22] sm:$0xff]
      %v2036 = vld [vmem:[%s1832 + $0x32] sm:$0xff]
      %v2037 = vld [vmem:[%s1832 + $0x42] sm:$0xff]
      %v2038 = vld [vmem:[%s1832 + $0x52] sm:$0xff]
      %v2039 = vld [vmem:[%s1832 + $0x62] sm:$0xff]
      %v2040 = vld [vmem:[%s1832 + $0x72] sm:$0xff]
      %v2041 = vld [vmem:[%s1832 + $0xa2] sm:$0xff]
      %v2042 = vld [vmem:[%s1832 + $0xb2] sm:$0xff]
      %v2043 = vld [vmem:[%s1832 + $0xc2] sm:$0xff]
      %v2044 = vld [vmem:[%s1832 + $0xd2] sm:$0xff]
      %v2045 = vld [vmem:[%s1832 + $0xe2] sm:$0xff]
      %v2046 = vld [vmem:[%s1832 + $0xf2] sm:$0xff]
      %v2047 = vld [vmem:[%s1832 + $0x102] sm:$0xff]
      %v2048 = vld [vmem:[%s1832 + $0x112] sm:$0xff]
      %v2049 = vld [vmem:[%s1832 + $0x142] sm:$0xff]
      %v2050 = vld [vmem:[%s1832 + $0x152] sm:$0xff]
      %v2051 = vld [vmem:[%s1832 + $0x162] sm:$0xff]
      %v2052 = vld [vmem:[%s1832 + $0x172] sm:$0xff]
      %v2053 = vld [vmem:[%s1832 + $0x182] sm:$0xff]
      %v2054 = vld [vmem:[%s1832 + $0x192] sm:$0xff]
      %v2055 = vld [vmem:[%s1832 + $0x1a2] sm:$0xff]
      %v2056 = vld [vmem:[%s1832 + $0x1b2] sm:$0xff]
      %v2057 = vld [vmem:[%s1832 + $0x1e2] sm:$0xff]
      %v2058 = vld [vmem:[%s1832 + $0x1f2] sm:$0xff]
      %v2059 = vld [vmem:[%s1832 + $0x202] sm:$0xff]
      %v2060 = vld [vmem:[%s1832 + $0x212] sm:$0xff]
      %v2061 = vld [vmem:[%s1832 + $0x222] sm:$0xff]
      %v2062 = vld [vmem:[%s1832 + $0x232] sm:$0xff]
      %v2063 = vld [vmem:[%s1832 + $0x242] sm:$0xff]
      %v2064 = vld [vmem:[%s1832 + $0x252] sm:$0xff]
      %v2065 = vlaneseq
      %v2066 = vshrl.u32 %v2065, 7
      %v2067 = vsub.s32 2, %v2066
      %v2068 = vrot.slane %v924, %v2067
      %v2069 = vmul.f32 %v2033, %v2068
      %v2070 = vmul.f32 %v2034, %v2068
      %v2071 = vmul.f32 %v2035, %v2068
      %v2072 = vmul.f32 %v2036, %v2068
      %v2073 = vmul.f32 %v2037, %v2068
      %v2074 = vmul.f32 %v2038, %v2068
      %v2075 = vmul.f32 %v2039, %v2068
      %v2076 = vmul.f32 %v2040, %v2068
      %v2077 = vmul.f32 %v2041, %v2068
      %v2078 = vmul.f32 %v2042, %v2068
      %v2079 = vmul.f32 %v2043, %v2068
      %v2080 = vmul.f32 %v2044, %v2068
      %v2081 = vmul.f32 %v2045, %v2068
      %v2082 = vmul.f32 %v2046, %v2068
      %v2083 = vmul.f32 %v2047, %v2068
      %v2084 = vmul.f32 %v2048, %v2068
      %v2085 = vmul.f32 %v2049, %v2068
      %v2086 = vmul.f32 %v2050, %v2068
      %v2087 = vmul.f32 %v2051, %v2068
      %v2088 = vmul.f32 %v2052, %v2068
      %v2089 = vmul.f32 %v2053, %v2068
      %v2090 = vmul.f32 %v2054, %v2068
      %v2091 = vmul.f32 %v2055, %v2068
      %v2092 = vmul.f32 %v2056, %v2068
      %v2093 = vmul.f32 %v2057, %v2068
      %v2094 = vmul.f32 %v2058, %v2068
      %v2095 = vmul.f32 %v2059, %v2068
      %v2096 = vmul.f32 %v2060, %v2068
      %v2097 = vmul.f32 %v2061, %v2068
      %v2098 = vmul.f32 %v2062, %v2068
      %v2099 = vmul.f32 %v2063, %v2068
      %v2100 = vmul.f32 %v2064, %v2068
      %v2101 = vadd.f32 %v2001, %v2069
      %v2102 = vadd.f32 %v2002, %v2070
      %v2103 = vadd.f32 %v2003, %v2071
      %v2104 = vadd.f32 %v2004, %v2072
      %v2105 = vadd.f32 %v2005, %v2073
      %v2106 = vadd.f32 %v2006, %v2074
      %v2107 = vadd.f32 %v2007, %v2075
      %v2108 = vadd.f32 %v2008, %v2076
      %v2109 = vadd.f32 %v2009, %v2077
      %v2110 = vadd.f32 %v2010, %v2078
      %v2111 = vadd.f32 %v2011, %v2079
      %v2112 = vadd.f32 %v2012, %v2080
      %v2113 = vadd.f32 %v2013, %v2081
      %v2114 = vadd.f32 %v2014, %v2082
      %v2115 = vadd.f32 %v2015, %v2083
      %v2116 = vadd.f32 %v2016, %v2084
      %v2117 = vadd.f32 %v2017, %v2085
      %v2118 = vadd.f32 %v2018, %v2086
      %v2119 = vadd.f32 %v2019, %v2087
      %v2120 = vadd.f32 %v2020, %v2088
      %v2121 = vadd.f32 %v2021, %v2089
      %v2122 = vadd.f32 %v2022, %v2090
      %v2123 = vadd.f32 %v2023, %v2091
      %v2124 = vadd.f32 %v2024, %v2092
      %v2125 = vadd.f32 %v2025, %v2093
      %v2126 = vadd.f32 %v2026, %v2094
      %v2127 = vadd.f32 %v2027, %v2095
      %v2128 = vadd.f32 %v2028, %v2096
      %v2129 = vadd.f32 %v2029, %v2097
      %v2130 = vadd.f32 %v2030, %v2098
      %v2131 = vadd.f32 %v2031, %v2099
      %v2132 = vadd.f32 %v2032, %v2100
      %v2133 = vld [vmem:[%s888] sm:$0xff]
      %v2134 = vld [vmem:[%s888 + $0x10] sm:$0xff]
      %v2135 = vld [vmem:[%s888 + $0x20] sm:$0xff]
      %v2136 = vld [vmem:[%s888 + $0x30] sm:$0xff]
      %v2137 = vld [vmem:[%s888 + $0x40] sm:$0xff]
      %v2138 = vld [vmem:[%s888 + $0x50] sm:$0xff]
      %v2139 = vld [vmem:[%s888 + $0x60] sm:$0xff]
      %v2140 = vld [vmem:[%s888 + $0x70] sm:$0xff]
      %v2141 = vld [vmem:[%s888 + $0xa0] sm:$0xff]
      %v2142 = vld [vmem:[%s888 + $0xb0] sm:$0xff]
      %v2143 = vld [vmem:[%s888 + $0xc0] sm:$0xff]
      %v2144 = vld [vmem:[%s888 + $0xd0] sm:$0xff]
      %v2145 = vld [vmem:[%s888 + $0xe0] sm:$0xff]
      %v2146 = vld [vmem:[%s888 + $0xf0] sm:$0xff]
      %v2147 = vld [vmem:[%s888 + $0x100] sm:$0xff]
      %v2148 = vld [vmem:[%s888 + $0x110] sm:$0xff]
      %v2149 = vld [vmem:[%s888 + $0x140] sm:$0xff]
      %v2150 = vld [vmem:[%s888 + $0x150] sm:$0xff]
      %v2151 = vld [vmem:[%s888 + $0x160] sm:$0xff]
      %v2152 = vld [vmem:[%s888 + $0x170] sm:$0xff]
      %v2153 = vld [vmem:[%s888 + $0x180] sm:$0xff]
      %v2154 = vld [vmem:[%s888 + $0x190] sm:$0xff]
      %v2155 = vld [vmem:[%s888 + $0x1a0] sm:$0xff]
      %v2156 = vld [vmem:[%s888 + $0x1b0] sm:$0xff]
      %v2157 = vld [vmem:[%s888 + $0x1e0] sm:$0xff]
      %v2158 = vld [vmem:[%s888 + $0x1f0] sm:$0xff]
      %v2159 = vld [vmem:[%s888 + $0x200] sm:$0xff]
      %v2160 = vld [vmem:[%s888 + $0x210] sm:$0xff]
      %v2161 = vld [vmem:[%s888 + $0x220] sm:$0xff]
      %v2162 = vld [vmem:[%s888 + $0x230] sm:$0xff]
      %v2163 = vld [vmem:[%s888 + $0x240] sm:$0xff]
      %v2164 = vld [vmem:[%s888 + $0x250] sm:$0xff]
      %v2165 = vlaneseq
      %v2166 = vshrl.u32 %v2165, 7
      %v2167 = vsub.s32 0, %v2166
      %v2168 = vrot.slane %v925, %v2167
      %v2169 = vmul.f32 %v2133, %v2168
      %v2170 = vmul.f32 %v2134, %v2168
      %v2171 = vmul.f32 %v2135, %v2168
      %v2172 = vmul.f32 %v2136, %v2168
      %v2173 = vmul.f32 %v2137, %v2168
      %v2174 = vmul.f32 %v2138, %v2168
      %v2175 = vmul.f32 %v2139, %v2168
      %v2176 = vmul.f32 %v2140, %v2168
      %v2177 = vmul.f32 %v2141, %v2168
      %v2178 = vmul.f32 %v2142, %v2168
      %v2179 = vmul.f32 %v2143, %v2168
      %v2180 = vmul.f32 %v2144, %v2168
      %v2181 = vmul.f32 %v2145, %v2168
      %v2182 = vmul.f32 %v2146, %v2168
      %v2183 = vmul.f32 %v2147, %v2168
      %v2184 = vmul.f32 %v2148, %v2168
      %v2185 = vmul.f32 %v2149, %v2168
      %v2186 = vmul.f32 %v2150, %v2168
      %v2187 = vmul.f32 %v2151, %v2168
      %v2188 = vmul.f32 %v2152, %v2168
      %v2189 = vmul.f32 %v2153, %v2168
      %v2190 = vmul.f32 %v2154, %v2168
      %v2191 = vmul.f32 %v2155, %v2168
      %v2192 = vmul.f32 %v2156, %v2168
      %v2193 = vmul.f32 %v2157, %v2168
      %v2194 = vmul.f32 %v2158, %v2168
      %v2195 = vmul.f32 %v2159, %v2168
      %v2196 = vmul.f32 %v2160, %v2168
      %v2197 = vmul.f32 %v2161, %v2168
      %v2198 = vmul.f32 %v2162, %v2168
      %v2199 = vmul.f32 %v2163, %v2168
      %v2200 = vmul.f32 %v2164, %v2168
      %v2201 = vadd.f32 %v2101, %v2169
      %v2202 = vadd.f32 %v2102, %v2170
      %v2203 = vadd.f32 %v2103, %v2171
      %v2204 = vadd.f32 %v2104, %v2172
      %v2205 = vadd.f32 %v2105, %v2173
      %v2206 = vadd.f32 %v2106, %v2174
      %v2207 = vadd.f32 %v2107, %v2175
      %v2208 = vadd.f32 %v2108, %v2176
      %v2209 = vadd.f32 %v2109, %v2177
      %v2210 = vadd.f32 %v2110, %v2178
      %v2211 = vadd.f32 %v2111, %v2179
      %v2212 = vadd.f32 %v2112, %v2180
      %v2213 = vadd.f32 %v2113, %v2181
      %v2214 = vadd.f32 %v2114, %v2182
      %v2215 = vadd.f32 %v2115, %v2183
      %v2216 = vadd.f32 %v2116, %v2184
      %v2217 = vadd.f32 %v2117, %v2185
      %v2218 = vadd.f32 %v2118, %v2186
      %v2219 = vadd.f32 %v2119, %v2187
      %v2220 = vadd.f32 %v2120, %v2188
      %v2221 = vadd.f32 %v2121, %v2189
      %v2222 = vadd.f32 %v2122, %v2190
      %v2223 = vadd.f32 %v2123, %v2191
      %v2224 = vadd.f32 %v2124, %v2192
      %v2225 = vadd.f32 %v2125, %v2193
      %v2226 = vadd.f32 %v2126, %v2194
      %v2227 = vadd.f32 %v2127, %v2195
      %v2228 = vadd.f32 %v2128, %v2196
      %v2229 = vadd.f32 %v2129, %v2197
      %v2230 = vadd.f32 %v2130, %v2198
      %v2231 = vadd.f32 %v2131, %v2199
      %v2232 = vadd.f32 %v2132, %v2200
      %v2233 = vld [vmem:[%s888 + $0x1] sm:$0xff]
      %v2234 = vld [vmem:[%s888 + $0x11] sm:$0xff]
      %v2235 = vld [vmem:[%s888 + $0x21] sm:$0xff]
      %v2236 = vld [vmem:[%s888 + $0x31] sm:$0xff]
      %v2237 = vld [vmem:[%s888 + $0x41] sm:$0xff]
      %v2238 = vld [vmem:[%s888 + $0x51] sm:$0xff]
      %v2239 = vld [vmem:[%s888 + $0x61] sm:$0xff]
      %v2240 = vld [vmem:[%s888 + $0x71] sm:$0xff]
      %v2241 = vld [vmem:[%s888 + $0xa1] sm:$0xff]
      %v2242 = vld [vmem:[%s888 + $0xb1] sm:$0xff]
      %v2243 = vld [vmem:[%s888 + $0xc1] sm:$0xff]
      %v2244 = vld [vmem:[%s888 + $0xd1] sm:$0xff]
      %v2245 = vld [vmem:[%s888 + $0xe1] sm:$0xff]
      %v2246 = vld [vmem:[%s888 + $0xf1] sm:$0xff]
      %v2247 = vld [vmem:[%s888 + $0x101] sm:$0xff]
      %v2248 = vld [vmem:[%s888 + $0x111] sm:$0xff]
      %v2249 = vld [vmem:[%s888 + $0x141] sm:$0xff]
      %v2250 = vld [vmem:[%s888 + $0x151] sm:$0xff]
      %v2251 = vld [vmem:[%s888 + $0x161] sm:$0xff]
      %v2252 = vld [vmem:[%s888 + $0x171] sm:$0xff]
      %v2253 = vld [vmem:[%s888 + $0x181] sm:$0xff]
      %v2254 = vld [vmem:[%s888 + $0x191] sm:$0xff]
      %v2255 = vld [vmem:[%s888 + $0x1a1] sm:$0xff]
      %v2256 = vld [vmem:[%s888 + $0x1b1] sm:$0xff]
      %v2257 = vld [vmem:[%s888 + $0x1e1] sm:$0xff]
      %v2258 = vld [vmem:[%s888 + $0x1f1] sm:$0xff]
      %v2259 = vld [vmem:[%s888 + $0x201] sm:$0xff]
      %v2260 = vld [vmem:[%s888 + $0x211] sm:$0xff]
      %v2261 = vld [vmem:[%s888 + $0x221] sm:$0xff]
      %v2262 = vld [vmem:[%s888 + $0x231] sm:$0xff]
      %v2263 = vld [vmem:[%s888 + $0x241] sm:$0xff]
      %v2264 = vld [vmem:[%s888 + $0x251] sm:$0xff]
      %v2265 = vlaneseq
      %v2266 = vshrl.u32 %v2265, 7
      %v2267 = vsub.s32 1, %v2266
      %v2268 = vrot.slane %v925, %v2267
      %v2269 = vmul.f32 %v2233, %v2268
      %v2270 = vmul.f32 %v2234, %v2268
      %v2271 = vmul.f32 %v2235, %v2268
      %v2272 = vmul.f32 %v2236, %v2268
      %v2273 = vmul.f32 %v2237, %v2268
      %v2274 = vmul.f32 %v2238, %v2268
      %v2275 = vmul.f32 %v2239, %v2268
      %v2276 = vmul.f32 %v2240, %v2268
      %v2277 = vmul.f32 %v2241, %v2268
      %v2278 = vmul.f32 %v2242, %v2268
      %v2279 = vmul.f32 %v2243, %v2268
      %v2280 = vmul.f32 %v2244, %v2268
      %v2281 = vmul.f32 %v2245, %v2268
      %v2282 = vmul.f32 %v2246, %v2268
      %v2283 = vmul.f32 %v2247, %v2268
      %v2284 = vmul.f32 %v2248, %v2268
      %v2285 = vmul.f32 %v2249, %v2268
      %v2286 = vmul.f32 %v2250, %v2268
      %v2287 = vmul.f32 %v2251, %v2268
      %v2288 = vmul.f32 %v2252, %v2268
      %v2289 = vmul.f32 %v2253, %v2268
      %v2290 = vmul.f32 %v2254, %v2268
      %v2291 = vmul.f32 %v2255, %v2268
      %v2292 = vmul.f32 %v2256, %v2268
      %v2293 = vmul.f32 %v2257, %v2268
      %v2294 = vmul.f32 %v2258, %v2268
      %v2295 = vmul.f32 %v2259, %v2268
      %v2296 = vmul.f32 %v2260, %v2268
      %v2297 = vmul.f32 %v2261, %v2268
      %v2298 = vmul.f32 %v2262, %v2268
      %v2299 = vmul.f32 %v2263, %v2268
      %v2300 = vmul.f32 %v2264, %v2268
      %v2301 = vadd.f32 %v2201, %v2269
      %v2302 = vadd.f32 %v2202, %v2270
      %v2303 = vadd.f32 %v2203, %v2271
      %v2304 = vadd.f32 %v2204, %v2272
      %v2305 = vadd.f32 %v2205, %v2273
      %v2306 = vadd.f32 %v2206, %v2274
      %v2307 = vadd.f32 %v2207, %v2275
      %v2308 = vadd.f32 %v2208, %v2276
      %v2309 = vadd.f32 %v2209, %v2277
      %v2310 = vadd.f32 %v2210, %v2278
      %v2311 = vadd.f32 %v2211, %v2279
      %v2312 = vadd.f32 %v2212, %v2280
      %v2313 = vadd.f32 %v2213, %v2281
      %v2314 = vadd.f32 %v2214, %v2282
      %v2315 = vadd.f32 %v2215, %v2283
      %v2316 = vadd.f32 %v2216, %v2284
      %v2317 = vadd.f32 %v2217, %v2285
      %v2318 = vadd.f32 %v2218, %v2286
      %v2319 = vadd.f32 %v2219, %v2287
      %v2320 = vadd.f32 %v2220, %v2288
      %v2321 = vadd.f32 %v2221, %v2289
      %v2322 = vadd.f32 %v2222, %v2290
      %v2323 = vadd.f32 %v2223, %v2291
      %v2324 = vadd.f32 %v2224, %v2292
      %v2325 = vadd.f32 %v2225, %v2293
      %v2326 = vadd.f32 %v2226, %v2294
      %v2327 = vadd.f32 %v2227, %v2295
      %v2328 = vadd.f32 %v2228, %v2296
      %v2329 = vadd.f32 %v2229, %v2297
      %v2330 = vadd.f32 %v2230, %v2298
      %v2331 = vadd.f32 %v2231, %v2299
      %v2332 = vadd.f32 %v2232, %v2300
      %v2333 = vld [vmem:[%s888 + $0x2] sm:$0xff]
      %v2334 = vld [vmem:[%s888 + $0x12] sm:$0xff]
      %v2335 = vld [vmem:[%s888 + $0x22] sm:$0xff]
      %v2336 = vld [vmem:[%s888 + $0x32] sm:$0xff]
      %v2337 = vld [vmem:[%s888 + $0x42] sm:$0xff]
      %v2338 = vld [vmem:[%s888 + $0x52] sm:$0xff]
      %v2339 = vld [vmem:[%s888 + $0x62] sm:$0xff]
      %v2340 = vld [vmem:[%s888 + $0x72] sm:$0xff]
      %v2341 = vld [vmem:[%s888 + $0xa2] sm:$0xff]
      %v2342 = vld [vmem:[%s888 + $0xb2] sm:$0xff]
      %v2343 = vld [vmem:[%s888 + $0xc2] sm:$0xff]
      %v2344 = vld [vmem:[%s888 + $0xd2] sm:$0xff]
      %v2345 = vld [vmem:[%s888 + $0xe2] sm:$0xff]
      %v2346 = vld [vmem:[%s888 + $0xf2] sm:$0xff]
      %v2347 = vld [vmem:[%s888 + $0x102] sm:$0xff]
      %v2348 = vld [vmem:[%s888 + $0x112] sm:$0xff]
      %v2349 = vld [vmem:[%s888 + $0x142] sm:$0xff]
      %v2350 = vld [vmem:[%s888 + $0x152] sm:$0xff]
      %v2351 = vld [vmem:[%s888 + $0x162] sm:$0xff]
      %v2352 = vld [vmem:[%s888 + $0x172] sm:$0xff]
      %v2353 = vld [vmem:[%s888 + $0x182] sm:$0xff]
      %v2354 = vld [vmem:[%s888 + $0x192] sm:$0xff]
      %v2355 = vld [vmem:[%s888 + $0x1a2] sm:$0xff]
      %v2356 = vld [vmem:[%s888 + $0x1b2] sm:$0xff]
      %v2357 = vld [vmem:[%s888 + $0x1e2] sm:$0xff]
      %v2358 = vld [vmem:[%s888 + $0x1f2] sm:$0xff]
      %v2359 = vld [vmem:[%s888 + $0x202] sm:$0xff]
      %v2360 = vld [vmem:[%s888 + $0x212] sm:$0xff]
      %v2361 = vld [vmem:[%s888 + $0x222] sm:$0xff]
      %v2362 = vld [vmem:[%s888 + $0x232] sm:$0xff]
      %v2363 = vld [vmem:[%s888 + $0x242] sm:$0xff]
      %v2364 = vld [vmem:[%s888 + $0x252] sm:$0xff]
      %v2365 = vlaneseq
      %v2366 = vshrl.u32 %v2365, 7
      %v2367 = vsub.s32 2, %v2366
      %v2368 = vrot.slane %v925, %v2367
      %v2369 = vmul.f32 %v2333, %v2368
      %v2370 = vmul.f32 %v2334, %v2368
      %v2371 = vmul.f32 %v2335, %v2368
      %v2372 = vmul.f32 %v2336, %v2368
      %v2373 = vmul.f32 %v2337, %v2368
      %v2374 = vmul.f32 %v2338, %v2368
      %v2375 = vmul.f32 %v2339, %v2368
      %v2376 = vmul.f32 %v2340, %v2368
      %v2377 = vmul.f32 %v2341, %v2368
      %v2378 = vmul.f32 %v2342, %v2368
      %v2379 = vmul.f32 %v2343, %v2368
      %v2380 = vmul.f32 %v2344, %v2368
      %v2381 = vmul.f32 %v2345, %v2368
      %v2382 = vmul.f32 %v2346, %v2368
      %v2383 = vmul.f32 %v2347, %v2368
      %v2384 = vmul.f32 %v2348, %v2368
      %v2385 = vmul.f32 %v2349, %v2368
      %v2386 = vmul.f32 %v2350, %v2368
      %v2387 = vmul.f32 %v2351, %v2368
      %v2388 = vmul.f32 %v2352, %v2368
      %v2389 = vmul.f32 %v2353, %v2368
      %v2390 = vmul.f32 %v2354, %v2368
      %v2391 = vmul.f32 %v2355, %v2368
      %v2392 = vmul.f32 %v2356, %v2368
      %v2393 = vmul.f32 %v2357, %v2368
      %v2394 = vmul.f32 %v2358, %v2368
      %v2395 = vmul.f32 %v2359, %v2368
      %v2396 = vmul.f32 %v2360, %v2368
      %v2397 = vmul.f32 %v2361, %v2368
      %v2398 = vmul.f32 %v2362, %v2368
      %v2399 = vmul.f32 %v2363, %v2368
      %v2400 = vmul.f32 %v2364, %v2368
      %v2401 = vadd.f32 %v2301, %v2369
      %v2402 = vadd.f32 %v2302, %v2370
      %v2403 = vadd.f32 %v2303, %v2371
      %v2404 = vadd.f32 %v2304, %v2372
      %v2405 = vadd.f32 %v2305, %v2373
      %v2406 = vadd.f32 %v2306, %v2374
      %v2407 = vadd.f32 %v2307, %v2375
      %v2408 = vadd.f32 %v2308, %v2376
      %v2409 = vadd.f32 %v2309, %v2377
      %v2410 = vadd.f32 %v2310, %v2378
      %v2411 = vadd.f32 %v2311, %v2379
      %v2412 = vadd.f32 %v2312, %v2380
      %v2413 = vadd.f32 %v2313, %v2381
      %v2414 = vadd.f32 %v2314, %v2382
      %v2415 = vadd.f32 %v2315, %v2383
      %v2416 = vadd.f32 %v2316, %v2384
      %v2417 = vadd.f32 %v2317, %v2385
      %v2418 = vadd.f32 %v2318, %v2386
      %v2419 = vadd.f32 %v2319, %v2387
      %v2420 = vadd.f32 %v2320, %v2388
      %v2421 = vadd.f32 %v2321, %v2389
      %v2422 = vadd.f32 %v2322, %v2390
      %v2423 = vadd.f32 %v2323, %v2391
      %v2424 = vadd.f32 %v2324, %v2392
      %v2425 = vadd.f32 %v2325, %v2393
      %v2426 = vadd.f32 %v2326, %v2394
      %v2427 = vadd.f32 %v2327, %v2395
      %v2428 = vadd.f32 %v2328, %v2396
      %v2429 = vadd.f32 %v2329, %v2397
      %v2430 = vadd.f32 %v2330, %v2398
      %v2431 = vadd.f32 %v2331, %v2399
      %v2432 = vadd.f32 %v2332, %v2400
      %s2433 = scalar_lea.vmem [#allocation2], 192
      %v2434 = vld [vmem:[%s2433] sm:$0xff]
      %v2435 = vld [vmem:[%s2433 + $0x10] sm:$0xff]
      %v2436 = vld [vmem:[%s2433 + $0x20] sm:$0xff]
      %v2437 = vld [vmem:[%s2433 + $0x30] sm:$0xff]
      %v2438 = vld [vmem:[%s2433 + $0x40] sm:$0xff]
      %v2439 = vld [vmem:[%s2433 + $0x50] sm:$0xff]
      %v2440 = vld [vmem:[%s2433 + $0x60] sm:$0xff]
      %v2441 = vld [vmem:[%s2433 + $0x70] sm:$0xff]
      %v2442 = vld [vmem:[%s2433 + $0xa0] sm:$0xff]
      %v2443 = vld [vmem:[%s2433 + $0xb0] sm:$0xff]
      %v2444 = vld [vmem:[%s2433 + $0xc0] sm:$0xff]
      %v2445 = vld [vmem:[%s2433 + $0xd0] sm:$0xff]
      %v2446 = vld [vmem:[%s2433 + $0xe0] sm:$0xff]
      %v2447 = vld [vmem:[%s2433 + $0xf0] sm:$0xff]
      %v2448 = vld [vmem:[%s2433 + $0x100] sm:$0xff]
      %v2449 = vld [vmem:[%s2433 + $0x110] sm:$0xff]
      %v2450 = vld [vmem:[%s2433 + $0x140] sm:$0xff]
      %v2451 = vld [vmem:[%s2433 + $0x150] sm:$0xff]
      %v2452 = vld [vmem:[%s2433 + $0x160] sm:$0xff]
      %v2453 = vld [vmem:[%s2433 + $0x170] sm:$0xff]
      %v2454 = vld [vmem:[%s2433 + $0x180] sm:$0xff]
      %v2455 = vld [vmem:[%s2433 + $0x190] sm:$0xff]
      %v2456 = vld [vmem:[%s2433 + $0x1a0] sm:$0xff]
      %v2457 = vld [vmem:[%s2433 + $0x1b0] sm:$0xff]
      %v2458 = vld [vmem:[%s2433 + $0x1e0] sm:$0xff]
      %v2459 = vld [vmem:[%s2433 + $0x1f0] sm:$0xff]
      %v2460 = vld [vmem:[%s2433 + $0x200] sm:$0xff]
      %v2461 = vld [vmem:[%s2433 + $0x210] sm:$0xff]
      %v2462 = vld [vmem:[%s2433 + $0x220] sm:$0xff]
      %v2463 = vld [vmem:[%s2433 + $0x230] sm:$0xff]
      %v2464 = vld [vmem:[%s2433 + $0x240] sm:$0xff]
      %v2465 = vld [vmem:[%s2433 + $0x250] sm:$0xff]
      %v2466 = vlaneseq
      %v2467 = vshrl.u32 %v2466, 7
      %v2468 = vsub.s32 0, %v2467
      %v2469 = vrot.slane %v926, %v2468
      %v2470 = vmul.f32 %v2434, %v2469
      %v2471 = vmul.f32 %v2435, %v2469
      %v2472 = vmul.f32 %v2436, %v2469
      %v2473 = vmul.f32 %v2437, %v2469
      %v2474 = vmul.f32 %v2438, %v2469
      %v2475 = vmul.f32 %v2439, %v2469
      %v2476 = vmul.f32 %v2440, %v2469
      %v2477 = vmul.f32 %v2441, %v2469
      %v2478 = vmul.f32 %v2442, %v2469
      %v2479 = vmul.f32 %v2443, %v2469
      %v2480 = vmul.f32 %v2444, %v2469
      %v2481 = vmul.f32 %v2445, %v2469
      %v2482 = vmul.f32 %v2446, %v2469
      %v2483 = vmul.f32 %v2447, %v2469
      %v2484 = vmul.f32 %v2448, %v2469
      %v2485 = vmul.f32 %v2449, %v2469
      %v2486 = vmul.f32 %v2450, %v2469
      %v2487 = vmul.f32 %v2451, %v2469
      %v2488 = vmul.f32 %v2452, %v2469
      %v2489 = vmul.f32 %v2453, %v2469
      %v2490 = vmul.f32 %v2454, %v2469
      %v2491 = vmul.f32 %v2455, %v2469
      %v2492 = vmul.f32 %v2456, %v2469
      %v2493 = vmul.f32 %v2457, %v2469
      %v2494 = vmul.f32 %v2458, %v2469
      %v2495 = vmul.f32 %v2459, %v2469
      %v2496 = vmul.f32 %v2460, %v2469
      %v2497 = vmul.f32 %v2461, %v2469
      %v2498 = vmul.f32 %v2462, %v2469
      %v2499 = vmul.f32 %v2463, %v2469
      %v2500 = vmul.f32 %v2464, %v2469
      %v2501 = vmul.f32 %v2465, %v2469
      %v2502 = vadd.f32 %v2401, %v2470
      %v2503 = vadd.f32 %v2402, %v2471
      %v2504 = vadd.f32 %v2403, %v2472
      %v2505 = vadd.f32 %v2404, %v2473
      %v2506 = vadd.f32 %v2405, %v2474
      %v2507 = vadd.f32 %v2406, %v2475
      %v2508 = vadd.f32 %v2407, %v2476
      %v2509 = vadd.f32 %v2408, %v2477
      %v2510 = vadd.f32 %v2409, %v2478
      %v2511 = vadd.f32 %v2410, %v2479
      %v2512 = vadd.f32 %v2411, %v2480
      %v2513 = vadd.f32 %v2412, %v2481
      %v2514 = vadd.f32 %v2413, %v2482
      %v2515 = vadd.f32 %v2414, %v2483
      %v2516 = vadd.f32 %v2415, %v2484
      %v2517 = vadd.f32 %v2416, %v2485
      %v2518 = vadd.f32 %v2417, %v2486
      %v2519 = vadd.f32 %v2418, %v2487
      %v2520 = vadd.f32 %v2419, %v2488
      %v2521 = vadd.f32 %v2420, %v2489
      %v2522 = vadd.f32 %v2421, %v2490
      %v2523 = vadd.f32 %v2422, %v2491
      %v2524 = vadd.f32 %v2423, %v2492
      %v2525 = vadd.f32 %v2424, %v2493
      %v2526 = vadd.f32 %v2425, %v2494
      %v2527 = vadd.f32 %v2426, %v2495
      %v2528 = vadd.f32 %v2427, %v2496
      %v2529 = vadd.f32 %v2428, %v2497
      %v2530 = vadd.f32 %v2429, %v2498
      %v2531 = vadd.f32 %v2430, %v2499
      %v2532 = vadd.f32 %v2431, %v2500
      %v2533 = vadd.f32 %v2432, %v2501
      %v2534 = vld [vmem:[%s2433 + $0x1] sm:$0xff]
      %v2535 = vld [vmem:[%s2433 + $0x11] sm:$0xff]
      %v2536 = vld [vmem:[%s2433 + $0x21] sm:$0xff]
      %v2537 = vld [vmem:[%s2433 + $0x31] sm:$0xff]
      %v2538 = vld [vmem:[%s2433 + $0x41] sm:$0xff]
      %v2539 = vld [vmem:[%s2433 + $0x51] sm:$0xff]
      %v2540 = vld [vmem:[%s2433 + $0x61] sm:$0xff]
      %v2541 = vld [vmem:[%s2433 + $0x71] sm:$0xff]
      %v2542 = vld [vmem:[%s2433 + $0xa1] sm:$0xff]
      %v2543 = vld [vmem:[%s2433 + $0xb1] sm:$0xff]
      %v2544 = vld [vmem:[%s2433 + $0xc1] sm:$0xff]
      %v2545 = vld [vmem:[%s2433 + $0xd1] sm:$0xff]
      %v2546 = vld [vmem:[%s2433 + $0xe1] sm:$0xff]
      %v2547 = vld [vmem:[%s2433 + $0xf1] sm:$0xff]
      %v2548 = vld [vmem:[%s2433 + $0x101] sm:$0xff]
      %v2549 = vld [vmem:[%s2433 + $0x111] sm:$0xff]
      %v2550 = vld [vmem:[%s2433 + $0x141] sm:$0xff]
      %v2551 = vld [vmem:[%s2433 + $0x151] sm:$0xff]
      %v2552 = vld [vmem:[%s2433 + $0x161] sm:$0xff]
      %v2553 = vld [vmem:[%s2433 + $0x171] sm:$0xff]
      %v2554 = vld [vmem:[%s2433 + $0x181] sm:$0xff]
      %v2555 = vld [vmem:[%s2433 + $0x191] sm:$0xff]
      %v2556 = vld [vmem:[%s2433 + $0x1a1] sm:$0xff]
      %v2557 = vld [vmem:[%s2433 + $0x1b1] sm:$0xff]
      %v2558 = vld [vmem:[%s2433 + $0x1e1] sm:$0xff]
      %v2559 = vld [vmem:[%s2433 + $0x1f1] sm:$0xff]
      %v2560 = vld [vmem:[%s2433 + $0x201] sm:$0xff]
      %v2561 = vld [vmem:[%s2433 + $0x211] sm:$0xff]
      %v2562 = vld [vmem:[%s2433 + $0x221] sm:$0xff]
      %v2563 = vld [vmem:[%s2433 + $0x231] sm:$0xff]
      %v2564 = vld [vmem:[%s2433 + $0x241] sm:$0xff]
      %v2565 = vld [vmem:[%s2433 + $0x251] sm:$0xff]
      %v2566 = vlaneseq
      %v2567 = vshrl.u32 %v2566, 7
      %v2568 = vsub.s32 1, %v2567
      %v2569 = vrot.slane %v926, %v2568
      %v2570 = vmul.f32 %v2534, %v2569
      %v2571 = vmul.f32 %v2535, %v2569
      %v2572 = vmul.f32 %v2536, %v2569
      %v2573 = vmul.f32 %v2537, %v2569
      %v2574 = vmul.f32 %v2538, %v2569
      %v2575 = vmul.f32 %v2539, %v2569
      %v2576 = vmul.f32 %v2540, %v2569
      %v2577 = vmul.f32 %v2541, %v2569
      %v2578 = vmul.f32 %v2542, %v2569
      %v2579 = vmul.f32 %v2543, %v2569
      %v2580 = vmul.f32 %v2544, %v2569
      %v2581 = vmul.f32 %v2545, %v2569
      %v2582 = vmul.f32 %v2546, %v2569
      %v2583 = vmul.f32 %v2547, %v2569
      %v2584 = vmul.f32 %v2548, %v2569
      %v2585 = vmul.f32 %v2549, %v2569
      %v2586 = vmul.f32 %v2550, %v2569
      %v2587 = vmul.f32 %v2551, %v2569
      %v2588 = vmul.f32 %v2552, %v2569
      %v2589 = vmul.f32 %v2553, %v2569
      %v2590 = vmul.f32 %v2554, %v2569
      %v2591 = vmul.f32 %v2555, %v2569
      %v2592 = vmul.f32 %v2556, %v2569
      %v2593 = vmul.f32 %v2557, %v2569
      %v2594 = vmul.f32 %v2558, %v2569
      %v2595 = vmul.f32 %v2559, %v2569
      %v2596 = vmul.f32 %v2560, %v2569
      %v2597 = vmul.f32 %v2561, %v2569
      %v2598 = vmul.f32 %v2562, %v2569
      %v2599 = vmul.f32 %v2563, %v2569
      %v2600 = vmul.f32 %v2564, %v2569
      %v2601 = vmul.f32 %v2565, %v2569
      %v2602 = vadd.f32 %v2502, %v2570
      %v2603 = vadd.f32 %v2503, %v2571
      %v2604 = vadd.f32 %v2504, %v2572
      %v2605 = vadd.f32 %v2505, %v2573
      %v2606 = vadd.f32 %v2506, %v2574
      %v2607 = vadd.f32 %v2507, %v2575
      %v2608 = vadd.f32 %v2508, %v2576
      %v2609 = vadd.f32 %v2509, %v2577
      %v2610 = vadd.f32 %v2510, %v2578
      %v2611 = vadd.f32 %v2511, %v2579
      %v2612 = vadd.f32 %v2512, %v2580
      %v2613 = vadd.f32 %v2513, %v2581
      %v2614 = vadd.f32 %v2514, %v2582
      %v2615 = vadd.f32 %v2515, %v2583
      %v2616 = vadd.f32 %v2516, %v2584
      %v2617 = vadd.f32 %v2517, %v2585
      %v2618 = vadd.f32 %v2518, %v2586
      %v2619 = vadd.f32 %v2519, %v2587
      %v2620 = vadd.f32 %v2520, %v2588
      %v2621 = vadd.f32 %v2521, %v2589
      %v2622 = vadd.f32 %v2522, %v2590
      %v2623 = vadd.f32 %v2523, %v2591
      %v2624 = vadd.f32 %v2524, %v2592
      %v2625 = vadd.f32 %v2525, %v2593
      %v2626 = vadd.f32 %v2526, %v2594
      %v2627 = vadd.f32 %v2527, %v2595
      %v2628 = vadd.f32 %v2528, %v2596
      %v2629 = vadd.f32 %v2529, %v2597
      %v2630 = vadd.f32 %v2530, %v2598
      %v2631 = vadd.f32 %v2531, %v2599
      %v2632 = vadd.f32 %v2532, %v2600
      %v2633 = vadd.f32 %v2533, %v2601
      %v2634 = vld [vmem:[%s2433 + $0x2] sm:$0xff]
      %v2635 = vld [vmem:[%s2433 + $0x12] sm:$0xff]
      %v2636 = vld [vmem:[%s2433 + $0x22] sm:$0xff]
      %v2637 = vld [vmem:[%s2433 + $0x32] sm:$0xff]
      %v2638 = vld [vmem:[%s2433 + $0x42] sm:$0xff]
      %v2639 = vld [vmem:[%s2433 + $0x52] sm:$0xff]
      %v2640 = vld [vmem:[%s2433 + $0x62] sm:$0xff]
      %v2641 = vld [vmem:[%s2433 + $0x72] sm:$0xff]
      %v2642 = vld [vmem:[%s2433 + $0xa2] sm:$0xff]
      %v2643 = vld [vmem:[%s2433 + $0xb2] sm:$0xff]
      %v2644 = vld [vmem:[%s2433 + $0xc2] sm:$0xff]
      %v2645 = vld [vmem:[%s2433 + $0xd2] sm:$0xff]
      %v2646 = vld [vmem:[%s2433 + $0xe2] sm:$0xff]
      %v2647 = vld [vmem:[%s2433 + $0xf2] sm:$0xff]
      %v2648 = vld [vmem:[%s2433 + $0x102] sm:$0xff]
      %v2649 = vld [vmem:[%s2433 + $0x112] sm:$0xff]
      %v2650 = vld [vmem:[%s2433 + $0x142] sm:$0xff]
      %v2651 = vld [vmem:[%s2433 + $0x152] sm:$0xff]
      %v2652 = vld [vmem:[%s2433 + $0x162] sm:$0xff]
      %v2653 = vld [vmem:[%s2433 + $0x172] sm:$0xff]
      %v2654 = vld [vmem:[%s2433 + $0x182] sm:$0xff]
      %v2655 = vld [vmem:[%s2433 + $0x192] sm:$0xff]
      %v2656 = vld [vmem:[%s2433 + $0x1a2] sm:$0xff]
      %v2657 = vld [vmem:[%s2433 + $0x1b2] sm:$0xff]
      %v2658 = vld [vmem:[%s2433 + $0x1e2] sm:$0xff]
      %v2659 = vld [vmem:[%s2433 + $0x1f2] sm:$0xff]
      %v2660 = vld [vmem:[%s2433 + $0x202] sm:$0xff]
      %v2661 = vld [vmem:[%s2433 + $0x212] sm:$0xff]
      %v2662 = vld [vmem:[%s2433 + $0x222] sm:$0xff]
      %v2663 = vld [vmem:[%s2433 + $0x232] sm:$0xff]
      %v2664 = vld [vmem:[%s2433 + $0x242] sm:$0xff]
      %v2665 = vld [vmem:[%s2433 + $0x252] sm:$0xff]
      %v2666 = vlaneseq
      %v2667 = vshrl.u32 %v2666, 7
      %v2668 = vsub.s32 2, %v2667
      %v2669 = vrot.slane %v926, %v2668
      %v2670 = vmul.f32 %v2634, %v2669
      %v2671 = vmul.f32 %v2635, %v2669
      %v2672 = vmul.f32 %v2636, %v2669
      %v2673 = vmul.f32 %v2637, %v2669
      %v2674 = vmul.f32 %v2638, %v2669
      %v2675 = vmul.f32 %v2639, %v2669
      %v2676 = vmul.f32 %v2640, %v2669
      %v2677 = vmul.f32 %v2641, %v2669
      %v2678 = vmul.f32 %v2642, %v2669
      %v2679 = vmul.f32 %v2643, %v2669
      %v2680 = vmul.f32 %v2644, %v2669
      %v2681 = vmul.f32 %v2645, %v2669
      %v2682 = vmul.f32 %v2646, %v2669
      %v2683 = vmul.f32 %v2647, %v2669
      %v2684 = vmul.f32 %v2648, %v2669
      %v2685 = vmul.f32 %v2649, %v2669
      %v2686 = vmul.f32 %v2650, %v2669
      %v2687 = vmul.f32 %v2651, %v2669
      %v2688 = vmul.f32 %v2652, %v2669
      %v2689 = vmul.f32 %v2653, %v2669
      %v2690 = vmul.f32 %v2654, %v2669
      %v2691 = vmul.f32 %v2655, %v2669
      %v2692 = vmul.f32 %v2656, %v2669
      %v2693 = vmul.f32 %v2657, %v2669
      %v2694 = vmul.f32 %v2658, %v2669
      %v2695 = vmul.f32 %v2659, %v2669
      %v2696 = vmul.f32 %v2660, %v2669
      %v2697 = vmul.f32 %v2661, %v2669
      %v2698 = vmul.f32 %v2662, %v2669
      %v2699 = vmul.f32 %v2663, %v2669
      %v2700 = vmul.f32 %v2664, %v2669
      %v2701 = vmul.f32 %v2665, %v2669
      %v2702 = vadd.f32 %v2602, %v2670
      %v2703 = vadd.f32 %v2603, %v2671
      %v2704 = vadd.f32 %v2604, %v2672
      %v2705 = vadd.f32 %v2605, %v2673
      %v2706 = vadd.f32 %v2606, %v2674
      %v2707 = vadd.f32 %v2607, %v2675
      %v2708 = vadd.f32 %v2608, %v2676
      %v2709 = vadd.f32 %v2609, %v2677
      %v2710 = vadd.f32 %v2610, %v2678
      %v2711 = vadd.f32 %v2611, %v2679
      %v2712 = vadd.f32 %v2612, %v2680
      %v2713 = vadd.f32 %v2613, %v2681
      %v2714 = vadd.f32 %v2614, %v2682
      %v2715 = vadd.f32 %v2615, %v2683
      %v2716 = vadd.f32 %v2616, %v2684
      %v2717 = vadd.f32 %v2617, %v2685
      %v2718 = vadd.f32 %v2618, %v2686
      %v2719 = vadd.f32 %v2619, %v2687
      %v2720 = vadd.f32 %v2620, %v2688
      %v2721 = vadd.f32 %v2621, %v2689
      %v2722 = vadd.f32 %v2622, %v2690
      %v2723 = vadd.f32 %v2623, %v2691
      %v2724 = vadd.f32 %v2624, %v2692
      %v2725 = vadd.f32 %v2625, %v2693
      %v2726 = vadd.f32 %v2626, %v2694
      %v2727 = vadd.f32 %v2627, %v2695
      %v2728 = vadd.f32 %v2628, %v2696
      %v2729 = vadd.f32 %v2629, %v2697
      %v2730 = vadd.f32 %v2630, %v2698
      %v2731 = vadd.f32 %v2631, %v2699
      %v2732 = vadd.f32 %v2632, %v2700
      %v2733 = vadd.f32 %v2633, %v2701
      %s2734 = scalar_lea.vmem [#allocation2], 320
      %v2735 = vld [vmem:[%s2734] sm:$0xff]
      %v2736 = vld [vmem:[%s2734 + $0x10] sm:$0xff]
      %v2737 = vld [vmem:[%s2734 + $0x20] sm:$0xff]
      %v2738 = vld [vmem:[%s2734 + $0x30] sm:$0xff]
      %v2739 = vld [vmem:[%s2734 + $0x40] sm:$0xff]
      %v2740 = vld [vmem:[%s2734 + $0x50] sm:$0xff]
      %v2741 = vld [vmem:[%s2734 + $0x60] sm:$0xff]
      %v2742 = vld [vmem:[%s2734 + $0x70] sm:$0xff]
      %v2743 = vld [vmem:[%s2734 + $0xa0] sm:$0xff]
      %v2744 = vld [vmem:[%s2734 + $0xb0] sm:$0xff]
      %v2745 = vld [vmem:[%s2734 + $0xc0] sm:$0xff]
      %v2746 = vld [vmem:[%s2734 + $0xd0] sm:$0xff]
      %v2747 = vld [vmem:[%s2734 + $0xe0] sm:$0xff]
      %v2748 = vld [vmem:[%s2734 + $0xf0] sm:$0xff]
      %v2749 = vld [vmem:[%s2734 + $0x100] sm:$0xff]
      %v2750 = vld [vmem:[%s2734 + $0x110] sm:$0xff]
      %v2751 = vld [vmem:[%s2734 + $0x140] sm:$0xff]
      %v2752 = vld [vmem:[%s2734 + $0x150] sm:$0xff]
      %v2753 = vld [vmem:[%s2734 + $0x160] sm:$0xff]
      %v2754 = vld [vmem:[%s2734 + $0x170] sm:$0xff]
      %v2755 = vld [vmem:[%s2734 + $0x180] sm:$0xff]
      %v2756 = vld [vmem:[%s2734 + $0x190] sm:$0xff]
      %v2757 = vld [vmem:[%s2734 + $0x1a0] sm:$0xff]
      %v2758 = vld [vmem:[%s2734 + $0x1b0] sm:$0xff]
      %v2759 = vld [vmem:[%s2734 + $0x1e0] sm:$0xff]
      %v2760 = vld [vmem:[%s2734 + $0x1f0] sm:$0xff]
      %v2761 = vld [vmem:[%s2734 + $0x200] sm:$0xff]
      %v2762 = vld [vmem:[%s2734 + $0x210] sm:$0xff]
      %v2763 = vld [vmem:[%s2734 + $0x220] sm:$0xff]
      %v2764 = vld [vmem:[%s2734 + $0x230] sm:$0xff]
      %v2765 = vld [vmem:[%s2734 + $0x240] sm:$0xff]
      %v2766 = vld [vmem:[%s2734 + $0x250] sm:$0xff]
      %v2767 = vlaneseq
      %v2768 = vshrl.u32 %v2767, 7
      %v2769 = vsub.s32 0, %v2768
      %v2770 = vrot.slane %v927, %v2769
      %v2771 = vmul.f32 %v2735, %v2770
      %v2772 = vmul.f32 %v2736, %v2770
      %v2773 = vmul.f32 %v2737, %v2770
      %v2774 = vmul.f32 %v2738, %v2770
      %v2775 = vmul.f32 %v2739, %v2770
      %v2776 = vmul.f32 %v2740, %v2770
      %v2777 = vmul.f32 %v2741, %v2770
      %v2778 = vmul.f32 %v2742, %v2770
      %v2779 = vmul.f32 %v2743, %v2770
      %v2780 = vmul.f32 %v2744, %v2770
      %v2781 = vmul.f32 %v2745, %v2770
      %v2782 = vmul.f32 %v2746, %v2770
      %v2783 = vmul.f32 %v2747, %v2770
      %v2784 = vmul.f32 %v2748, %v2770
      %v2785 = vmul.f32 %v2749, %v2770
      %v2786 = vmul.f32 %v2750, %v2770
      %v2787 = vmul.f32 %v2751, %v2770
      %v2788 = vmul.f32 %v2752, %v2770
      %v2789 = vmul.f32 %v2753, %v2770
      %v2790 = vmul.f32 %v2754, %v2770
      %v2791 = vmul.f32 %v2755, %v2770
      %v2792 = vmul.f32 %v2756, %v2770
      %v2793 = vmul.f32 %v2757, %v2770
      %v2794 = vmul.f32 %v2758, %v2770
      %v2795 = vmul.f32 %v2759, %v2770
      %v2796 = vmul.f32 %v2760, %v2770
      %v2797 = vmul.f32 %v2761, %v2770
      %v2798 = vmul.f32 %v2762, %v2770
      %v2799 = vmul.f32 %v2763, %v2770
      %v2800 = vmul.f32 %v2764, %v2770
      %v2801 = vmul.f32 %v2765, %v2770
      %v2802 = vmul.f32 %v2766, %v2770
      %v2803 = vadd.f32 %v2702, %v2771
      %v2804 = vadd.f32 %v2703, %v2772
      %v2805 = vadd.f32 %v2704, %v2773
      %v2806 = vadd.f32 %v2705, %v2774
      %v2807 = vadd.f32 %v2706, %v2775
      %v2808 = vadd.f32 %v2707, %v2776
      %v2809 = vadd.f32 %v2708, %v2777
      %v2810 = vadd.f32 %v2709, %v2778
      %v2811 = vadd.f32 %v2710, %v2779
      %v2812 = vadd.f32 %v2711, %v2780
      %v2813 = vadd.f32 %v2712, %v2781
      %v2814 = vadd.f32 %v2713, %v2782
      %v2815 = vadd.f32 %v2714, %v2783
      %v2816 = vadd.f32 %v2715, %v2784
      %v2817 = vadd.f32 %v2716, %v2785
      %v2818 = vadd.f32 %v2717, %v2786
      %v2819 = vadd.f32 %v2718, %v2787
      %v2820 = vadd.f32 %v2719, %v2788
      %v2821 = vadd.f32 %v2720, %v2789
      %v2822 = vadd.f32 %v2721, %v2790
      %v2823 = vadd.f32 %v2722, %v2791
      %v2824 = vadd.f32 %v2723, %v2792
      %v2825 = vadd.f32 %v2724, %v2793
      %v2826 = vadd.f32 %v2725, %v2794
      %v2827 = vadd.f32 %v2726, %v2795
      %v2828 = vadd.f32 %v2727, %v2796
      %v2829 = vadd.f32 %v2728, %v2797
      %v2830 = vadd.f32 %v2729, %v2798
      %v2831 = vadd.f32 %v2730, %v2799
      %v2832 = vadd.f32 %v2731, %v2800
      %v2833 = vadd.f32 %v2732, %v2801
      %v2834 = vadd.f32 %v2733, %v2802
      %v2835 = vld [vmem:[%s2734 + $0x1] sm:$0xff]
      %v2836 = vld [vmem:[%s2734 + $0x11] sm:$0xff]
      %v2837 = vld [vmem:[%s2734 + $0x21] sm:$0xff]
      %v2838 = vld [vmem:[%s2734 + $0x31] sm:$0xff]
      %v2839 = vld [vmem:[%s2734 + $0x41] sm:$0xff]
      %v2840 = vld [vmem:[%s2734 + $0x51] sm:$0xff]
      %v2841 = vld [vmem:[%s2734 + $0x61] sm:$0xff]
      %v2842 = vld [vmem:[%s2734 + $0x71] sm:$0xff]
      %v2843 = vld [vmem:[%s2734 + $0xa1] sm:$0xff]
      %v2844 = vld [vmem:[%s2734 + $0xb1] sm:$0xff]
      %v2845 = vld [vmem:[%s2734 + $0xc1] sm:$0xff]
      %v2846 = vld [vmem:[%s2734 + $0xd1] sm:$0xff]
      %v2847 = vld [vmem:[%s2734 + $0xe1] sm:$0xff]
      %v2848 = vld [vmem:[%s2734 + $0xf1] sm:$0xff]
      %v2849 = vld [vmem:[%s2734 + $0x101] sm:$0xff]
      %v2850 = vld [vmem:[%s2734 + $0x111] sm:$0xff]
      %v2851 = vld [vmem:[%s2734 + $0x141] sm:$0xff]
      %v2852 = vld [vmem:[%s2734 + $0x151] sm:$0xff]
      %v2853 = vld [vmem:[%s2734 + $0x161] sm:$0xff]
      %v2854 = vld [vmem:[%s2734 + $0x171] sm:$0xff]
      %v2855 = vld [vmem:[%s2734 + $0x181] sm:$0xff]
      %v2856 = vld [vmem:[%s2734 + $0x191] sm:$0xff]
      %v2857 = vld [vmem:[%s2734 + $0x1a1] sm:$0xff]
      %v2858 = vld [vmem:[%s2734 + $0x1b1] sm:$0xff]
      %v2859 = vld [vmem:[%s2734 + $0x1e1] sm:$0xff]
      %v2860 = vld [vmem:[%s2734 + $0x1f1] sm:$0xff]
      %v2861 = vld [vmem:[%s2734 + $0x201] sm:$0xff]
      %v2862 = vld [vmem:[%s2734 + $0x211] sm:$0xff]
      %v2863 = vld [vmem:[%s2734 + $0x221] sm:$0xff]
      %v2864 = vld [vmem:[%s2734 + $0x231] sm:$0xff]
      %v2865 = vld [vmem:[%s2734 + $0x241] sm:$0xff]
      %v2866 = vld [vmem:[%s2734 + $0x251] sm:$0xff]
      %v2867 = vlaneseq
      %v2868 = vshrl.u32 %v2867, 7
      %v2869 = vsub.s32 1, %v2868
      %v2870 = vrot.slane %v927, %v2869
      %v2871 = vmul.f32 %v2835, %v2870
      %v2872 = vmul.f32 %v2836, %v2870
      %v2873 = vmul.f32 %v2837, %v2870
      %v2874 = vmul.f32 %v2838, %v2870
      %v2875 = vmul.f32 %v2839, %v2870
      %v2876 = vmul.f32 %v2840, %v2870
      %v2877 = vmul.f32 %v2841, %v2870
      %v2878 = vmul.f32 %v2842, %v2870
      %v2879 = vmul.f32 %v2843, %v2870
      %v2880 = vmul.f32 %v2844, %v2870
      %v2881 = vmul.f32 %v2845, %v2870
      %v2882 = vmul.f32 %v2846, %v2870
      %v2883 = vmul.f32 %v2847, %v2870
      %v2884 = vmul.f32 %v2848, %v2870
      %v2885 = vmul.f32 %v2849, %v2870
      %v2886 = vmul.f32 %v2850, %v2870
      %v2887 = vmul.f32 %v2851, %v2870
      %v2888 = vmul.f32 %v2852, %v2870
      %v2889 = vmul.f32 %v2853, %v2870
      %v2890 = vmul.f32 %v2854, %v2870
      %v2891 = vmul.f32 %v2855, %v2870
      %v2892 = vmul.f32 %v2856, %v2870
      %v2893 = vmul.f32 %v2857, %v2870
      %v2894 = vmul.f32 %v2858, %v2870
      %v2895 = vmul.f32 %v2859, %v2870
      %v2896 = vmul.f32 %v2860, %v2870
      %v2897 = vmul.f32 %v2861, %v2870
      %v2898 = vmul.f32 %v2862, %v2870
      %v2899 = vmul.f32 %v2863, %v2870
      %v2900 = vmul.f32 %v2864, %v2870
      %v2901 = vmul.f32 %v2865, %v2870
      %v2902 = vmul.f32 %v2866, %v2870
      %v2903 = vadd.f32 %v2803, %v2871
      %v2904 = vadd.f32 %v2804, %v2872
      %v2905 = vadd.f32 %v2805, %v2873
      %v2906 = vadd.f32 %v2806, %v2874
      %v2907 = vadd.f32 %v2807, %v2875
      %v2908 = vadd.f32 %v2808, %v2876
      %v2909 = vadd.f32 %v2809, %v2877
      %v2910 = vadd.f32 %v2810, %v2878
      %v2911 = vadd.f32 %v2811, %v2879
      %v2912 = vadd.f32 %v2812, %v2880
      %v2913 = vadd.f32 %v2813, %v2881
      %v2914 = vadd.f32 %v2814, %v2882
      %v2915 = vadd.f32 %v2815, %v2883
      %v2916 = vadd.f32 %v2816, %v2884
      %v2917 = vadd.f32 %v2817, %v2885
      %v2918 = vadd.f32 %v2818, %v2886
      %v2919 = vadd.f32 %v2819, %v2887
      %v2920 = vadd.f32 %v2820, %v2888
      %v2921 = vadd.f32 %v2821, %v2889
      %v2922 = vadd.f32 %v2822, %v2890
      %v2923 = vadd.f32 %v2823, %v2891
      %v2924 = vadd.f32 %v2824, %v2892
      %v2925 = vadd.f32 %v2825, %v2893
      %v2926 = vadd.f32 %v2826, %v2894
      %v2927 = vadd.f32 %v2827, %v2895
      %v2928 = vadd.f32 %v2828, %v2896
      %v2929 = vadd.f32 %v2829, %v2897
      %v2930 = vadd.f32 %v2830, %v2898
      %v2931 = vadd.f32 %v2831, %v2899
      %v2932 = vadd.f32 %v2832, %v2900
      %v2933 = vadd.f32 %v2833, %v2901
      %v2934 = vadd.f32 %v2834, %v2902
      %v2935 = vld [vmem:[%s2734 + $0x2] sm:$0xff]
      %v2936 = vld [vmem:[%s2734 + $0x12] sm:$0xff]
      %v2937 = vld [vmem:[%s2734 + $0x22] sm:$0xff]
      %v2938 = vld [vmem:[%s2734 + $0x32] sm:$0xff]
      %v2939 = vld [vmem:[%s2734 + $0x42] sm:$0xff]
      %v2940 = vld [vmem:[%s2734 + $0x52] sm:$0xff]
      %v2941 = vld [vmem:[%s2734 + $0x62] sm:$0xff]
      %v2942 = vld [vmem:[%s2734 + $0x72] sm:$0xff]
      %v2943 = vld [vmem:[%s2734 + $0xa2] sm:$0xff]
      %v2944 = vld [vmem:[%s2734 + $0xb2] sm:$0xff]
      %v2945 = vld [vmem:[%s2734 + $0xc2] sm:$0xff]
      %v2946 = vld [vmem:[%s2734 + $0xd2] sm:$0xff]
      %v2947 = vld [vmem:[%s2734 + $0xe2] sm:$0xff]
      %v2948 = vld [vmem:[%s2734 + $0xf2] sm:$0xff]
      %v2949 = vld [vmem:[%s2734 + $0x102] sm:$0xff]
      %v2950 = vld [vmem:[%s2734 + $0x112] sm:$0xff]
      %v2951 = vld [vmem:[%s2734 + $0x142] sm:$0xff]
      %v2952 = vld [vmem:[%s2734 + $0x152] sm:$0xff]
      %v2953 = vld [vmem:[%s2734 + $0x162] sm:$0xff]
      %v2954 = vld [vmem:[%s2734 + $0x172] sm:$0xff]
      %v2955 = vld [vmem:[%s2734 + $0x182] sm:$0xff]
      %v2956 = vld [vmem:[%s2734 + $0x192] sm:$0xff]
      %v2957 = vld [vmem:[%s2734 + $0x1a2] sm:$0xff]
      %v2958 = vld [vmem:[%s2734 + $0x1b2] sm:$0xff]
      %v2959 = vld [vmem:[%s2734 + $0x1e2] sm:$0xff]
      %v2960 = vld [vmem:[%s2734 + $0x1f2] sm:$0xff]
      %v2961 = vld [vmem:[%s2734 + $0x202] sm:$0xff]
      %v2962 = vld [vmem:[%s2734 + $0x212] sm:$0xff]
      %v2963 = vld [vmem:[%s2734 + $0x222] sm:$0xff]
      %v2964 = vld [vmem:[%s2734 + $0x232] sm:$0xff]
      %v2965 = vld [vmem:[%s2734 + $0x242] sm:$0xff]
      %v2966 = vld [vmem:[%s2734 + $0x252] sm:$0xff]
      %v2967 = vlaneseq
      %v2968 = vshrl.u32 %v2967, 7
      %v2969 = vsub.s32 2, %v2968
      %v2970 = vrot.slane %v927, %v2969
      %v2971 = vmul.f32 %v2935, %v2970
      %v2972 = vmul.f32 %v2936, %v2970
      %v2973 = vmul.f32 %v2937, %v2970
      %v2974 = vmul.f32 %v2938, %v2970
      %v2975 = vmul.f32 %v2939, %v2970
      %v2976 = vmul.f32 %v2940, %v2970
      %v2977 = vmul.f32 %v2941, %v2970
      %v2978 = vmul.f32 %v2942, %v2970
      %v2979 = vmul.f32 %v2943, %v2970
      %v2980 = vmul.f32 %v2944, %v2970
      %v2981 = vmul.f32 %v2945, %v2970
      %v2982 = vmul.f32 %v2946, %v2970
      %v2983 = vmul.f32 %v2947, %v2970
      %v2984 = vmul.f32 %v2948, %v2970
      %v2985 = vmul.f32 %v2949, %v2970
      %v2986 = vmul.f32 %v2950, %v2970
      %v2987 = vmul.f32 %v2951, %v2970
      %v2988 = vmul.f32 %v2952, %v2970
      %v2989 = vmul.f32 %v2953, %v2970
      %v2990 = vmul.f32 %v2954, %v2970
      %v2991 = vmul.f32 %v2955, %v2970
      %v2992 = vmul.f32 %v2956, %v2970
      %v2993 = vmul.f32 %v2957, %v2970
      %v2994 = vmul.f32 %v2958, %v2970
      %v2995 = vmul.f32 %v2959, %v2970
      %v2996 = vmul.f32 %v2960, %v2970
      %v2997 = vmul.f32 %v2961, %v2970
      %v2998 = vmul.f32 %v2962, %v2970
      %v2999 = vmul.f32 %v2963, %v2970
      %v3000 = vmul.f32 %v2964, %v2970
      %v3001 = vmul.f32 %v2965, %v2970
      %v3002 = vmul.f32 %v2966, %v2970
      %v3003 = vadd.f32 %v2903, %v2971
      %v3004 = vadd.f32 %v2904, %v2972
      %v3005 = vadd.f32 %v2905, %v2973
      %v3006 = vadd.f32 %v2906, %v2974
      %v3007 = vadd.f32 %v2907, %v2975
      %v3008 = vadd.f32 %v2908, %v2976
      %v3009 = vadd.f32 %v2909, %v2977
      %v3010 = vadd.f32 %v2910, %v2978
      %v3011 = vadd.f32 %v2911, %v2979
      %v3012 = vadd.f32 %v2912, %v2980
      %v3013 = vadd.f32 %v2913, %v2981
      %v3014 = vadd.f32 %v2914, %v2982
      %v3015 = vadd.f32 %v2915, %v2983
      %v3016 = vadd.f32 %v2916, %v2984
      %v3017 = vadd.f32 %v2917, %v2985
      %v3018 = vadd.f32 %v2918, %v2986
      %v3019 = vadd.f32 %v2919, %v2987
      %v3020 = vadd.f32 %v2920, %v2988
      %v3021 = vadd.f32 %v2921, %v2989
      %v3022 = vadd.f32 %v2922, %v2990
      %v3023 = vadd.f32 %v2923, %v2991
      %v3024 = vadd.f32 %v2924, %v2992
      %v3025 = vadd.f32 %v2925, %v2993
      %v3026 = vadd.f32 %v2926, %v2994
      %v3027 = vadd.f32 %v2927, %v2995
      %v3028 = vadd.f32 %v2928, %v2996
      %v3029 = vadd.f32 %v2929, %v2997
      %v3030 = vadd.f32 %v2930, %v2998
      %v3031 = vadd.f32 %v2931, %v2999
      %v3032 = vadd.f32 %v2932, %v3000
      %v3033 = vadd.f32 %v2933, %v3001
      %v3034 = vadd.f32 %v2934, %v3002
      %s3035 = scalar_lea.vmem [#allocation2], 336
      %v3036 = vld [vmem:[%s3035] sm:$0xff]
      %v3037 = vld [vmem:[%s3035 + $0x10] sm:$0xff]
      %v3038 = vld [vmem:[%s3035 + $0x20] sm:$0xff]
      %v3039 = vld [vmem:[%s3035 + $0x30] sm:$0xff]
      %v3040 = vld [vmem:[%s3035 + $0x40] sm:$0xff]
      %v3041 = vld [vmem:[%s3035 + $0x50] sm:$0xff]
      %v3042 = vld [vmem:[%s3035 + $0x60] sm:$0xff]
      %v3043 = vld [vmem:[%s3035 + $0x70] sm:$0xff]
      %v3044 = vld [vmem:[%s3035 + $0xa0] sm:$0xff]
      %v3045 = vld [vmem:[%s3035 + $0xb0] sm:$0xff]
      %v3046 = vld [vmem:[%s3035 + $0xc0] sm:$0xff]
      %v3047 = vld [vmem:[%s3035 + $0xd0] sm:$0xff]
      %v3048 = vld [vmem:[%s3035 + $0xe0] sm:$0xff]
      %v3049 = vld [vmem:[%s3035 + $0xf0] sm:$0xff]
      %v3050 = vld [vmem:[%s3035 + $0x100] sm:$0xff]
      %v3051 = vld [vmem:[%s3035 + $0x110] sm:$0xff]
      %v3052 = vld [vmem:[%s3035 + $0x140] sm:$0xff]
      %v3053 = vld [vmem:[%s3035 + $0x150] sm:$0xff]
      %v3054 = vld [vmem:[%s3035 + $0x160] sm:$0xff]
      %v3055 = vld [vmem:[%s3035 + $0x170] sm:$0xff]
      %v3056 = vld [vmem:[%s3035 + $0x180] sm:$0xff]
      %v3057 = vld [vmem:[%s3035 + $0x190] sm:$0xff]
      %v3058 = vld [vmem:[%s3035 + $0x1a0] sm:$0xff]
      %v3059 = vld [vmem:[%s3035 + $0x1b0] sm:$0xff]
      %v3060 = vld [vmem:[%s3035 + $0x1e0] sm:$0xff]
      %v3061 = vld [vmem:[%s3035 + $0x1f0] sm:$0xff]
      %v3062 = vld [vmem:[%s3035 + $0x200] sm:$0xff]
      %v3063 = vld [vmem:[%s3035 + $0x210] sm:$0xff]
      %v3064 = vld [vmem:[%s3035 + $0x220] sm:$0xff]
      %v3065 = vld [vmem:[%s3035 + $0x230] sm:$0xff]
      %v3066 = vld [vmem:[%s3035 + $0x240] sm:$0xff]
      %v3067 = vld [vmem:[%s3035 + $0x250] sm:$0xff]
      %v3068 = vlaneseq
      %v3069 = vshrl.u32 %v3068, 7
      %v3070 = vsub.s32 0, %v3069
      %v3071 = vrot.slane %v928, %v3070
      %v3072 = vmul.f32 %v3036, %v3071
      %v3073 = vmul.f32 %v3037, %v3071
      %v3074 = vmul.f32 %v3038, %v3071
      %v3075 = vmul.f32 %v3039, %v3071
      %v3076 = vmul.f32 %v3040, %v3071
      %v3077 = vmul.f32 %v3041, %v3071
      %v3078 = vmul.f32 %v3042, %v3071
      %v3079 = vmul.f32 %v3043, %v3071
      %v3080 = vmul.f32 %v3044, %v3071
      %v3081 = vmul.f32 %v3045, %v3071
      %v3082 = vmul.f32 %v3046, %v3071
      %v3083 = vmul.f32 %v3047, %v3071
      %v3084 = vmul.f32 %v3048, %v3071
      %v3085 = vmul.f32 %v3049, %v3071
      %v3086 = vmul.f32 %v3050, %v3071
      %v3087 = vmul.f32 %v3051, %v3071
      %v3088 = vmul.f32 %v3052, %v3071
      %v3089 = vmul.f32 %v3053, %v3071
      %v3090 = vmul.f32 %v3054, %v3071
      %v3091 = vmul.f32 %v3055, %v3071
      %v3092 = vmul.f32 %v3056, %v3071
      %v3093 = vmul.f32 %v3057, %v3071
      %v3094 = vmul.f32 %v3058, %v3071
      %v3095 = vmul.f32 %v3059, %v3071
      %v3096 = vmul.f32 %v3060, %v3071
      %v3097 = vmul.f32 %v3061, %v3071
      %v3098 = vmul.f32 %v3062, %v3071
      %v3099 = vmul.f32 %v3063, %v3071
      %v3100 = vmul.f32 %v3064, %v3071
      %v3101 = vmul.f32 %v3065, %v3071
      %v3102 = vmul.f32 %v3066, %v3071
      %v3103 = vmul.f32 %v3067, %v3071
      %v3104 = vadd.f32 %v3003, %v3072
      %v3105 = vadd.f32 %v3004, %v3073
      %v3106 = vadd.f32 %v3005, %v3074
      %v3107 = vadd.f32 %v3006, %v3075
      %v3108 = vadd.f32 %v3007, %v3076
      %v3109 = vadd.f32 %v3008, %v3077
      %v3110 = vadd.f32 %v3009, %v3078
      %v3111 = vadd.f32 %v3010, %v3079
      %v3112 = vadd.f32 %v3011, %v3080
      %v3113 = vadd.f32 %v3012, %v3081
      %v3114 = vadd.f32 %v3013, %v3082
      %v3115 = vadd.f32 %v3014, %v3083
      %v3116 = vadd.f32 %v3015, %v3084
      %v3117 = vadd.f32 %v3016, %v3085
      %v3118 = vadd.f32 %v3017, %v3086
      %v3119 = vadd.f32 %v3018, %v3087
      %v3120 = vadd.f32 %v3019, %v3088
      %v3121 = vadd.f32 %v3020, %v3089
      %v3122 = vadd.f32 %v3021, %v3090
      %v3123 = vadd.f32 %v3022, %v3091
      %v3124 = vadd.f32 %v3023, %v3092
      %v3125 = vadd.f32 %v3024, %v3093
      %v3126 = vadd.f32 %v3025, %v3094
      %v3127 = vadd.f32 %v3026, %v3095
      %v3128 = vadd.f32 %v3027, %v3096
      %v3129 = vadd.f32 %v3028, %v3097
      %v3130 = vadd.f32 %v3029, %v3098
      %v3131 = vadd.f32 %v3030, %v3099
      %v3132 = vadd.f32 %v3031, %v3100
      %v3133 = vadd.f32 %v3032, %v3101
      %v3134 = vadd.f32 %v3033, %v3102
      %v3135 = vadd.f32 %v3034, %v3103
      %v3136 = vld [vmem:[%s3035 + $0x1] sm:$0xff]
      %v3137 = vld [vmem:[%s3035 + $0x11] sm:$0xff]
      %v3138 = vld [vmem:[%s3035 + $0x21] sm:$0xff]
      %v3139 = vld [vmem:[%s3035 + $0x31] sm:$0xff]
      %v3140 = vld [vmem:[%s3035 + $0x41] sm:$0xff]
      %v3141 = vld [vmem:[%s3035 + $0x51] sm:$0xff]
      %v3142 = vld [vmem:[%s3035 + $0x61] sm:$0xff]
      %v3143 = vld [vmem:[%s3035 + $0x71] sm:$0xff]
      %v3144 = vld [vmem:[%s3035 + $0xa1] sm:$0xff]
      %v3145 = vld [vmem:[%s3035 + $0xb1] sm:$0xff]
      %v3146 = vld [vmem:[%s3035 + $0xc1] sm:$0xff]
      %v3147 = vld [vmem:[%s3035 + $0xd1] sm:$0xff]
      %v3148 = vld [vmem:[%s3035 + $0xe1] sm:$0xff]
      %v3149 = vld [vmem:[%s3035 + $0xf1] sm:$0xff]
      %v3150 = vld [vmem:[%s3035 + $0x101] sm:$0xff]
      %v3151 = vld [vmem:[%s3035 + $0x111] sm:$0xff]
      %v3152 = vld [vmem:[%s3035 + $0x141] sm:$0xff]
      %v3153 = vld [vmem:[%s3035 + $0x151] sm:$0xff]
      %v3154 = vld [vmem:[%s3035 + $0x161] sm:$0xff]
      %v3155 = vld [vmem:[%s3035 + $0x171] sm:$0xff]
      %v3156 = vld [vmem:[%s3035 + $0x181] sm:$0xff]
      %v3157 = vld [vmem:[%s3035 + $0x191] sm:$0xff]
      %v3158 = vld [vmem:[%s3035 + $0x1a1] sm:$0xff]
      %v3159 = vld [vmem:[%s3035 + $0x1b1] sm:$0xff]
      %v3160 = vld [vmem:[%s3035 + $0x1e1] sm:$0xff]
      %v3161 = vld [vmem:[%s3035 + $0x1f1] sm:$0xff]
      %v3162 = vld [vmem:[%s3035 + $0x201] sm:$0xff]
      %v3163 = vld [vmem:[%s3035 + $0x211] sm:$0xff]
      %v3164 = vld [vmem:[%s3035 + $0x221] sm:$0xff]
      %v3165 = vld [vmem:[%s3035 + $0x231] sm:$0xff]
      %v3166 = vld [vmem:[%s3035 + $0x241] sm:$0xff]
      %v3167 = vld [vmem:[%s3035 + $0x251] sm:$0xff]
      %v3168 = vlaneseq
      %v3169 = vshrl.u32 %v3168, 7
      %v3170 = vsub.s32 1, %v3169
      %v3171 = vrot.slane %v928, %v3170
      %v3172 = vmul.f32 %v3136, %v3171
      %v3173 = vmul.f32 %v3137, %v3171
      %v3174 = vmul.f32 %v3138, %v3171
      %v3175 = vmul.f32 %v3139, %v3171
      %v3176 = vmul.f32 %v3140, %v3171
      %v3177 = vmul.f32 %v3141, %v3171
      %v3178 = vmul.f32 %v3142, %v3171
      %v3179 = vmul.f32 %v3143, %v3171
      %v3180 = vmul.f32 %v3144, %v3171
      %v3181 = vmul.f32 %v3145, %v3171
      %v3182 = vmul.f32 %v3146, %v3171
      %v3183 = vmul.f32 %v3147, %v3171
      %v3184 = vmul.f32 %v3148, %v3171
      %v3185 = vmul.f32 %v3149, %v3171
      %v3186 = vmul.f32 %v3150, %v3171
      %v3187 = vmul.f32 %v3151, %v3171
      %v3188 = vmul.f32 %v3152, %v3171
      %v3189 = vmul.f32 %v3153, %v3171
      %v3190 = vmul.f32 %v3154, %v3171
      %v3191 = vmul.f32 %v3155, %v3171
      %v3192 = vmul.f32 %v3156, %v3171
      %v3193 = vmul.f32 %v3157, %v3171
      %v3194 = vmul.f32 %v3158, %v3171
      %v3195 = vmul.f32 %v3159, %v3171
      %v3196 = vmul.f32 %v3160, %v3171
      %v3197 = vmul.f32 %v3161, %v3171
      %v3198 = vmul.f32 %v3162, %v3171
      %v3199 = vmul.f32 %v3163, %v3171
      %v3200 = vmul.f32 %v3164, %v3171
      %v3201 = vmul.f32 %v3165, %v3171
      %v3202 = vmul.f32 %v3166, %v3171
      %v3203 = vmul.f32 %v3167, %v3171
      %v3204 = vadd.f32 %v3104, %v3172
      %v3205 = vadd.f32 %v3105, %v3173
      %v3206 = vadd.f32 %v3106, %v3174
      %v3207 = vadd.f32 %v3107, %v3175
      %v3208 = vadd.f32 %v3108, %v3176
      %v3209 = vadd.f32 %v3109, %v3177
      %v3210 = vadd.f32 %v3110, %v3178
      %v3211 = vadd.f32 %v3111, %v3179
      %v3212 = vadd.f32 %v3112, %v3180
      %v3213 = vadd.f32 %v3113, %v3181
      %v3214 = vadd.f32 %v3114, %v3182
      %v3215 = vadd.f32 %v3115, %v3183
      %v3216 = vadd.f32 %v3116, %v3184
      %v3217 = vadd.f32 %v3117, %v3185
      %v3218 = vadd.f32 %v3118, %v3186
      %v3219 = vadd.f32 %v3119, %v3187
      %v3220 = vadd.f32 %v3120, %v3188
      %v3221 = vadd.f32 %v3121, %v3189
      %v3222 = vadd.f32 %v3122, %v3190
      %v3223 = vadd.f32 %v3123, %v3191
      %v3224 = vadd.f32 %v3124, %v3192
      %v3225 = vadd.f32 %v3125, %v3193
      %v3226 = vadd.f32 %v3126, %v3194
      %v3227 = vadd.f32 %v3127, %v3195
      %v3228 = vadd.f32 %v3128, %v3196
      %v3229 = vadd.f32 %v3129, %v3197
      %v3230 = vadd.f32 %v3130, %v3198
      %v3231 = vadd.f32 %v3131, %v3199
      %v3232 = vadd.f32 %v3132, %v3200
      %v3233 = vadd.f32 %v3133, %v3201
      %v3234 = vadd.f32 %v3134, %v3202
      %v3235 = vadd.f32 %v3135, %v3203
      %v3236 = vld [vmem:[%s3035 + $0x2] sm:$0xff]
      %v3237 = vld [vmem:[%s3035 + $0x12] sm:$0xff]
      %v3238 = vld [vmem:[%s3035 + $0x22] sm:$0xff]
      %v3239 = vld [vmem:[%s3035 + $0x32] sm:$0xff]
      %v3240 = vld [vmem:[%s3035 + $0x42] sm:$0xff]
      %v3241 = vld [vmem:[%s3035 + $0x52] sm:$0xff]
      %v3242 = vld [vmem:[%s3035 + $0x62] sm:$0xff]
      %v3243 = vld [vmem:[%s3035 + $0x72] sm:$0xff]
      %v3244 = vld [vmem:[%s3035 + $0xa2] sm:$0xff]
      %v3245 = vld [vmem:[%s3035 + $0xb2] sm:$0xff]
      %v3246 = vld [vmem:[%s3035 + $0xc2] sm:$0xff]
      %v3247 = vld [vmem:[%s3035 + $0xd2] sm:$0xff]
      %v3248 = vld [vmem:[%s3035 + $0xe2] sm:$0xff]
      %v3249 = vld [vmem:[%s3035 + $0xf2] sm:$0xff]
      %v3250 = vld [vmem:[%s3035 + $0x102] sm:$0xff]
      %v3251 = vld [vmem:[%s3035 + $0x112] sm:$0xff]
      %v3252 = vld [vmem:[%s3035 + $0x142] sm:$0xff]
      %v3253 = vld [vmem:[%s3035 + $0x152] sm:$0xff]
      %v3254 = vld [vmem:[%s3035 + $0x162] sm:$0xff]
      %v3255 = vld [vmem:[%s3035 + $0x172] sm:$0xff]
      %v3256 = vld [vmem:[%s3035 + $0x182] sm:$0xff]
      %v3257 = vld [vmem:[%s3035 + $0x192] sm:$0xff]
      %v3258 = vld [vmem:[%s3035 + $0x1a2] sm:$0xff]
      %v3259 = vld [vmem:[%s3035 + $0x1b2] sm:$0xff]
      %v3260 = vld [vmem:[%s3035 + $0x1e2] sm:$0xff]
      %v3261 = vld [vmem:[%s3035 + $0x1f2] sm:$0xff]
      %v3262 = vld [vmem:[%s3035 + $0x202] sm:$0xff]
      %v3263 = vld [vmem:[%s3035 + $0x212] sm:$0xff]
      %v3264 = vld [vmem:[%s3035 + $0x222] sm:$0xff]
      %v3265 = vld [vmem:[%s3035 + $0x232] sm:$0xff]
      %v3266 = vld [vmem:[%s3035 + $0x242] sm:$0xff]
      %v3267 = vld [vmem:[%s3035 + $0x252] sm:$0xff]
      %v3268 = vlaneseq
      %v3269 = vshrl.u32 %v3268, 7
      %v3270 = vsub.s32 2, %v3269
      %v3271 = vrot.slane %v928, %v3270
      %v3272 = vmul.f32 %v3236, %v3271
      %v3273 = vmul.f32 %v3237, %v3271
      %v3274 = vmul.f32 %v3238, %v3271
      %v3275 = vmul.f32 %v3239, %v3271
      %v3276 = vmul.f32 %v3240, %v3271
      %v3277 = vmul.f32 %v3241, %v3271
      %v3278 = vmul.f32 %v3242, %v3271
      %v3279 = vmul.f32 %v3243, %v3271
      %v3280 = vmul.f32 %v3244, %v3271
      %v3281 = vmul.f32 %v3245, %v3271
      %v3282 = vmul.f32 %v3246, %v3271
      %v3283 = vmul.f32 %v3247, %v3271
      %v3284 = vmul.f32 %v3248, %v3271
      %v3285 = vmul.f32 %v3249, %v3271
      %v3286 = vmul.f32 %v3250, %v3271
      %v3287 = vmul.f32 %v3251, %v3271
      %v3288 = vmul.f32 %v3252, %v3271
      %v3289 = vmul.f32 %v3253, %v3271
      %v3290 = vmul.f32 %v3254, %v3271
      %v3291 = vmul.f32 %v3255, %v3271
      %v3292 = vmul.f32 %v3256, %v3271
      %v3293 = vmul.f32 %v3257, %v3271
      %v3294 = vmul.f32 %v3258, %v3271
      %v3295 = vmul.f32 %v3259, %v3271
      %v3296 = vmul.f32 %v3260, %v3271
      %v3297 = vmul.f32 %v3261, %v3271
      %v3298 = vmul.f32 %v3262, %v3271
      %v3299 = vmul.f32 %v3263, %v3271
      %v3300 = vmul.f32 %v3264, %v3271
      %v3301 = vmul.f32 %v3265, %v3271
      %v3302 = vmul.f32 %v3266, %v3271
      %v3303 = vmul.f32 %v3267, %v3271
      %v3304 = vadd.f32 %v3204, %v3272
      %v3305 = vadd.f32 %v3205, %v3273
      %v3306 = vadd.f32 %v3206, %v3274
      %v3307 = vadd.f32 %v3207, %v3275
      %v3308 = vadd.f32 %v3208, %v3276
      %v3309 = vadd.f32 %v3209, %v3277
      %v3310 = vadd.f32 %v3210, %v3278
      %v3311 = vadd.f32 %v3211, %v3279
      %v3312 = vadd.f32 %v3212, %v3280
      %v3313 = vadd.f32 %v3213, %v3281
      %v3314 = vadd.f32 %v3214, %v3282
      %v3315 = vadd.f32 %v3215, %v3283
      %v3316 = vadd.f32 %v3216, %v3284
      %v3317 = vadd.f32 %v3217, %v3285
      %v3318 = vadd.f32 %v3218, %v3286
      %v3319 = vadd.f32 %v3219, %v3287
      %v3320 = vadd.f32 %v3220, %v3288
      %v3321 = vadd.f32 %v3221, %v3289
      %v3322 = vadd.f32 %v3222, %v3290
      %v3323 = vadd.f32 %v3223, %v3291
      %v3324 = vadd.f32 %v3224, %v3292
      %v3325 = vadd.f32 %v3225, %v3293
      %v3326 = vadd.f32 %v3226, %v3294
      %v3327 = vadd.f32 %v3227, %v3295
      %v3328 = vadd.f32 %v3228, %v3296
      %v3329 = vadd.f32 %v3229, %v3297
      %v3330 = vadd.f32 %v3230, %v3298
      %v3331 = vadd.f32 %v3231, %v3299
      %v3332 = vadd.f32 %v3232, %v3300
      %v3333 = vadd.f32 %v3233, %v3301
      %v3334 = vadd.f32 %v3234, %v3302
      %v3335 = vadd.f32 %v3235, %v3303
      %s3336 = scalar_lea.vmem [#allocation2], 352
      %v3337 = vld [vmem:[%s3336] sm:$0xff]
      %v3338 = vld [vmem:[%s3336 + $0x10] sm:$0xff]
      %v3339 = vld [vmem:[%s3336 + $0x20] sm:$0xff]
      %v3340 = vld [vmem:[%s3336 + $0x30] sm:$0xff]
      %v3341 = vld [vmem:[%s3336 + $0x40] sm:$0xff]
      %v3342 = vld [vmem:[%s3336 + $0x50] sm:$0xff]
      %v3343 = vld [vmem:[%s3336 + $0x60] sm:$0xff]
      %v3344 = vld [vmem:[%s3336 + $0x70] sm:$0xff]
      %v3345 = vld [vmem:[%s3336 + $0xa0] sm:$0xff]
      %v3346 = vld [vmem:[%s3336 + $0xb0] sm:$0xff]
      %v3347 = vld [vmem:[%s3336 + $0xc0] sm:$0xff]
      %v3348 = vld [vmem:[%s3336 + $0xd0] sm:$0xff]
      %v3349 = vld [vmem:[%s3336 + $0xe0] sm:$0xff]
      %v3350 = vld [vmem:[%s3336 + $0xf0] sm:$0xff]
      %v3351 = vld [vmem:[%s3336 + $0x100] sm:$0xff]
      %v3352 = vld [vmem:[%s3336 + $0x110] sm:$0xff]
      %v3353 = vld [vmem:[%s3336 + $0x140] sm:$0xff]
      %v3354 = vld [vmem:[%s3336 + $0x150] sm:$0xff]
      %v3355 = vld [vmem:[%s3336 + $0x160] sm:$0xff]
      %v3356 = vld [vmem:[%s3336 + $0x170] sm:$0xff]
      %v3357 = vld [vmem:[%s3336 + $0x180] sm:$0xff]
      %v3358 = vld [vmem:[%s3336 + $0x190] sm:$0xff]
      %v3359 = vld [vmem:[%s3336 + $0x1a0] sm:$0xff]
      %v3360 = vld [vmem:[%s3336 + $0x1b0] sm:$0xff]
      %v3361 = vld [vmem:[%s3336 + $0x1e0] sm:$0xff]
      %v3362 = vld [vmem:[%s3336 + $0x1f0] sm:$0xff]
      %v3363 = vld [vmem:[%s3336 + $0x200] sm:$0xff]
      %v3364 = vld [vmem:[%s3336 + $0x210] sm:$0xff]
      %v3365 = vld [vmem:[%s3336 + $0x220] sm:$0xff]
      %v3366 = vld [vmem:[%s3336 + $0x230] sm:$0xff]
      %v3367 = vld [vmem:[%s3336 + $0x240] sm:$0xff]
      %v3368 = vld [vmem:[%s3336 + $0x250] sm:$0xff]
      %v3369 = vlaneseq
      %v3370 = vshrl.u32 %v3369, 7
      %v3371 = vsub.s32 0, %v3370
      %v3372 = vrot.slane %v929, %v3371
      %v3373 = vmul.f32 %v3337, %v3372
      %v3374 = vmul.f32 %v3338, %v3372
      %v3375 = vmul.f32 %v3339, %v3372
      %v3376 = vmul.f32 %v3340, %v3372
      %v3377 = vmul.f32 %v3341, %v3372
      %v3378 = vmul.f32 %v3342, %v3372
      %v3379 = vmul.f32 %v3343, %v3372
      %v3380 = vmul.f32 %v3344, %v3372
      %v3381 = vmul.f32 %v3345, %v3372
      %v3382 = vmul.f32 %v3346, %v3372
      %v3383 = vmul.f32 %v3347, %v3372
      %v3384 = vmul.f32 %v3348, %v3372
      %v3385 = vmul.f32 %v3349, %v3372
      %v3386 = vmul.f32 %v3350, %v3372
      %v3387 = vmul.f32 %v3351, %v3372
      %v3388 = vmul.f32 %v3352, %v3372
      %v3389 = vmul.f32 %v3353, %v3372
      %v3390 = vmul.f32 %v3354, %v3372
      %v3391 = vmul.f32 %v3355, %v3372
      %v3392 = vmul.f32 %v3356, %v3372
      %v3393 = vmul.f32 %v3357, %v3372
      %v3394 = vmul.f32 %v3358, %v3372
      %v3395 = vmul.f32 %v3359, %v3372
      %v3396 = vmul.f32 %v3360, %v3372
      %v3397 = vmul.f32 %v3361, %v3372
      %v3398 = vmul.f32 %v3362, %v3372
      %v3399 = vmul.f32 %v3363, %v3372
      %v3400 = vmul.f32 %v3364, %v3372
      %v3401 = vmul.f32 %v3365, %v3372
      %v3402 = vmul.f32 %v3366, %v3372
      %v3403 = vmul.f32 %v3367, %v3372
      %v3404 = vmul.f32 %v3368, %v3372
      %v3405 = vadd.f32 %v3304, %v3373
      %v3406 = vadd.f32 %v3305, %v3374
      %v3407 = vadd.f32 %v3306, %v3375
      %v3408 = vadd.f32 %v3307, %v3376
      %v3409 = vadd.f32 %v3308, %v3377
      %v3410 = vadd.f32 %v3309, %v3378
      %v3411 = vadd.f32 %v3310, %v3379
      %v3412 = vadd.f32 %v3311, %v3380
      %v3413 = vadd.f32 %v3312, %v3381
      %v3414 = vadd.f32 %v3313, %v3382
      %v3415 = vadd.f32 %v3314, %v3383
      %v3416 = vadd.f32 %v3315, %v3384
      %v3417 = vadd.f32 %v3316, %v3385
      %v3418 = vadd.f32 %v3317, %v3386
      %v3419 = vadd.f32 %v3318, %v3387
      %v3420 = vadd.f32 %v3319, %v3388
      %v3421 = vadd.f32 %v3320, %v3389
      %v3422 = vadd.f32 %v3321, %v3390
      %v3423 = vadd.f32 %v3322, %v3391
      %v3424 = vadd.f32 %v3323, %v3392
      %v3425 = vadd.f32 %v3324, %v3393
      %v3426 = vadd.f32 %v3325, %v3394
      %v3427 = vadd.f32 %v3326, %v3395
      %v3428 = vadd.f32 %v3327, %v3396
      %v3429 = vadd.f32 %v3328, %v3397
      %v3430 = vadd.f32 %v3329, %v3398
      %v3431 = vadd.f32 %v3330, %v3399
      %v3432 = vadd.f32 %v3331, %v3400
      %v3433 = vadd.f32 %v3332, %v3401
      %v3434 = vadd.f32 %v3333, %v3402
      %v3435 = vadd.f32 %v3334, %v3403
      %v3436 = vadd.f32 %v3335, %v3404
      %v3437 = vld [vmem:[%s3336 + $0x1] sm:$0xff]
      %v3438 = vld [vmem:[%s3336 + $0x11] sm:$0xff]
      %v3439 = vld [vmem:[%s3336 + $0x21] sm:$0xff]
      %v3440 = vld [vmem:[%s3336 + $0x31] sm:$0xff]
      %v3441 = vld [vmem:[%s3336 + $0x41] sm:$0xff]
      %v3442 = vld [vmem:[%s3336 + $0x51] sm:$0xff]
      %v3443 = vld [vmem:[%s3336 + $0x61] sm:$0xff]
      %v3444 = vld [vmem:[%s3336 + $0x71] sm:$0xff]
      %v3445 = vld [vmem:[%s3336 + $0xa1] sm:$0xff]
      %v3446 = vld [vmem:[%s3336 + $0xb1] sm:$0xff]
      %v3447 = vld [vmem:[%s3336 + $0xc1] sm:$0xff]
      %v3448 = vld [vmem:[%s3336 + $0xd1] sm:$0xff]
      %v3449 = vld [vmem:[%s3336 + $0xe1] sm:$0xff]
      %v3450 = vld [vmem:[%s3336 + $0xf1] sm:$0xff]
      %v3451 = vld [vmem:[%s3336 + $0x101] sm:$0xff]
      %v3452 = vld [vmem:[%s3336 + $0x111] sm:$0xff]
      %v3453 = vld [vmem:[%s3336 + $0x141] sm:$0xff]
      %v3454 = vld [vmem:[%s3336 + $0x151] sm:$0xff]
      %v3455 = vld [vmem:[%s3336 + $0x161] sm:$0xff]
      %v3456 = vld [vmem:[%s3336 + $0x171] sm:$0xff]
      %v3457 = vld [vmem:[%s3336 + $0x181] sm:$0xff]
      %v3458 = vld [vmem:[%s3336 + $0x191] sm:$0xff]
      %v3459 = vld [vmem:[%s3336 + $0x1a1] sm:$0xff]
      %v3460 = vld [vmem:[%s3336 + $0x1b1] sm:$0xff]
      %v3461 = vld [vmem:[%s3336 + $0x1e1] sm:$0xff]
      %v3462 = vld [vmem:[%s3336 + $0x1f1] sm:$0xff]
      %v3463 = vld [vmem:[%s3336 + $0x201] sm:$0xff]
      %v3464 = vld [vmem:[%s3336 + $0x211] sm:$0xff]
      %v3465 = vld [vmem:[%s3336 + $0x221] sm:$0xff]
      %v3466 = vld [vmem:[%s3336 + $0x231] sm:$0xff]
      %v3467 = vld [vmem:[%s3336 + $0x241] sm:$0xff]
      %v3468 = vld [vmem:[%s3336 + $0x251] sm:$0xff]
      %v3469 = vlaneseq
      %v3470 = vshrl.u32 %v3469, 7
      %v3471 = vsub.s32 1, %v3470
      %v3472 = vrot.slane %v929, %v3471
      %v3473 = vmul.f32 %v3437, %v3472
      %v3474 = vmul.f32 %v3438, %v3472
      %v3475 = vmul.f32 %v3439, %v3472
      %v3476 = vmul.f32 %v3440, %v3472
      %v3477 = vmul.f32 %v3441, %v3472
      %v3478 = vmul.f32 %v3442, %v3472
      %v3479 = vmul.f32 %v3443, %v3472
      %v3480 = vmul.f32 %v3444, %v3472
      %v3481 = vmul.f32 %v3445, %v3472
      %v3482 = vmul.f32 %v3446, %v3472
      %v3483 = vmul.f32 %v3447, %v3472
      %v3484 = vmul.f32 %v3448, %v3472
      %v3485 = vmul.f32 %v3449, %v3472
      %v3486 = vmul.f32 %v3450, %v3472
      %v3487 = vmul.f32 %v3451, %v3472
      %v3488 = vmul.f32 %v3452, %v3472
      %v3489 = vmul.f32 %v3453, %v3472
      %v3490 = vmul.f32 %v3454, %v3472
      %v3491 = vmul.f32 %v3455, %v3472
      %v3492 = vmul.f32 %v3456, %v3472
      %v3493 = vmul.f32 %v3457, %v3472
      %v3494 = vmul.f32 %v3458, %v3472
      %v3495 = vmul.f32 %v3459, %v3472
      %v3496 = vmul.f32 %v3460, %v3472
      %v3497 = vmul.f32 %v3461, %v3472
      %v3498 = vmul.f32 %v3462, %v3472
      %v3499 = vmul.f32 %v3463, %v3472
      %v3500 = vmul.f32 %v3464, %v3472
      %v3501 = vmul.f32 %v3465, %v3472
      %v3502 = vmul.f32 %v3466, %v3472
      %v3503 = vmul.f32 %v3467, %v3472
      %v3504 = vmul.f32 %v3468, %v3472
      %v3505 = vadd.f32 %v3405, %v3473
      %v3506 = vadd.f32 %v3406, %v3474
      %v3507 = vadd.f32 %v3407, %v3475
      %v3508 = vadd.f32 %v3408, %v3476
      %v3509 = vadd.f32 %v3409, %v3477
      %v3510 = vadd.f32 %v3410, %v3478
      %v3511 = vadd.f32 %v3411, %v3479
      %v3512 = vadd.f32 %v3412, %v3480
      %v3513 = vadd.f32 %v3413, %v3481
      %v3514 = vadd.f32 %v3414, %v3482
      %v3515 = vadd.f32 %v3415, %v3483
      %v3516 = vadd.f32 %v3416, %v3484
      %v3517 = vadd.f32 %v3417, %v3485
      %v3518 = vadd.f32 %v3418, %v3486
      %v3519 = vadd.f32 %v3419, %v3487
      %v3520 = vadd.f32 %v3420, %v3488
      %v3521 = vadd.f32 %v3421, %v3489
      %v3522 = vadd.f32 %v3422, %v3490
      %v3523 = vadd.f32 %v3423, %v3491
      %v3524 = vadd.f32 %v3424, %v3492
      %v3525 = vadd.f32 %v3425, %v3493
      %v3526 = vadd.f32 %v3426, %v3494
      %v3527 = vadd.f32 %v3427, %v3495
      %v3528 = vadd.f32 %v3428, %v3496
      %v3529 = vadd.f32 %v3429, %v3497
      %v3530 = vadd.f32 %v3430, %v3498
      %v3531 = vadd.f32 %v3431, %v3499
      %v3532 = vadd.f32 %v3432, %v3500
      %v3533 = vadd.f32 %v3433, %v3501
      %v3534 = vadd.f32 %v3434, %v3502
      %v3535 = vadd.f32 %v3435, %v3503
      %v3536 = vadd.f32 %v3436, %v3504
      %v3537 = vld [vmem:[%s3336 + $0x2] sm:$0xff]
      %v3538 = vld [vmem:[%s3336 + $0x12] sm:$0xff]
      %v3539 = vld [vmem:[%s3336 + $0x22] sm:$0xff]
      %v3540 = vld [vmem:[%s3336 + $0x32] sm:$0xff]
      %v3541 = vld [vmem:[%s3336 + $0x42] sm:$0xff]
      %v3542 = vld [vmem:[%s3336 + $0x52] sm:$0xff]
      %v3543 = vld [vmem:[%s3336 + $0x62] sm:$0xff]
      %v3544 = vld [vmem:[%s3336 + $0x72] sm:$0xff]
      %v3545 = vld [vmem:[%s3336 + $0xa2] sm:$0xff]
      %v3546 = vld [vmem:[%s3336 + $0xb2] sm:$0xff]
      %v3547 = vld [vmem:[%s3336 + $0xc2] sm:$0xff]
      %v3548 = vld [vmem:[%s3336 + $0xd2] sm:$0xff]
      %v3549 = vld [vmem:[%s3336 + $0xe2] sm:$0xff]
      %v3550 = vld [vmem:[%s3336 + $0xf2] sm:$0xff]
      %v3551 = vld [vmem:[%s3336 + $0x102] sm:$0xff]
      %v3552 = vld [vmem:[%s3336 + $0x112] sm:$0xff]
      %v3553 = vld [vmem:[%s3336 + $0x142] sm:$0xff]
      %v3554 = vld [vmem:[%s3336 + $0x152] sm:$0xff]
      %v3555 = vld [vmem:[%s3336 + $0x162] sm:$0xff]
      %v3556 = vld [vmem:[%s3336 + $0x172] sm:$0xff]
      %v3557 = vld [vmem:[%s3336 + $0x182] sm:$0xff]
      %v3558 = vld [vmem:[%s3336 + $0x192] sm:$0xff]
      %v3559 = vld [vmem:[%s3336 + $0x1a2] sm:$0xff]
      %v3560 = vld [vmem:[%s3336 + $0x1b2] sm:$0xff]
      %v3561 = vld [vmem:[%s3336 + $0x1e2] sm:$0xff]
      %v3562 = vld [vmem:[%s3336 + $0x1f2] sm:$0xff]
      %v3563 = vld [vmem:[%s3336 + $0x202] sm:$0xff]
      %v3564 = vld [vmem:[%s3336 + $0x212] sm:$0xff]
      %v3565 = vld [vmem:[%s3336 + $0x222] sm:$0xff]
      %v3566 = vld [vmem:[%s3336 + $0x232] sm:$0xff]
      %v3567 = vld [vmem:[%s3336 + $0x242] sm:$0xff]
      %v3568 = vld [vmem:[%s3336 + $0x252] sm:$0xff]
      %v3569 = vlaneseq
      %v3570 = vshrl.u32 %v3569, 7
      %v3571 = vsub.s32 2, %v3570
      %v3572 = vrot.slane %v929, %v3571
      %v3573 = vmul.f32 %v3537, %v3572
      %v3574 = vmul.f32 %v3538, %v3572
      %v3575 = vmul.f32 %v3539, %v3572
      %v3576 = vmul.f32 %v3540, %v3572
      %v3577 = vmul.f32 %v3541, %v3572
      %v3578 = vmul.f32 %v3542, %v3572
      %v3579 = vmul.f32 %v3543, %v3572
      %v3580 = vmul.f32 %v3544, %v3572
      %v3581 = vmul.f32 %v3545, %v3572
      %v3582 = vmul.f32 %v3546, %v3572
      %v3583 = vmul.f32 %v3547, %v3572
      %v3584 = vmul.f32 %v3548, %v3572
      %v3585 = vmul.f32 %v3549, %v3572
      %v3586 = vmul.f32 %v3550, %v3572
      %v3587 = vmul.f32 %v3551, %v3572
      %v3588 = vmul.f32 %v3552, %v3572
      %v3589 = vmul.f32 %v3553, %v3572
      %v3590 = vmul.f32 %v3554, %v3572
      %v3591 = vmul.f32 %v3555, %v3572
      %v3592 = vmul.f32 %v3556, %v3572
      %v3593 = vmul.f32 %v3557, %v3572
      %v3594 = vmul.f32 %v3558, %v3572
      %v3595 = vmul.f32 %v3559, %v3572
      %v3596 = vmul.f32 %v3560, %v3572
      %v3597 = vmul.f32 %v3561, %v3572
      %v3598 = vmul.f32 %v3562, %v3572
      %v3599 = vmul.f32 %v3563, %v3572
      %v3600 = vmul.f32 %v3564, %v3572
      %v3601 = vmul.f32 %v3565, %v3572
      %v3602 = vmul.f32 %v3566, %v3572
      %v3603 = vmul.f32 %v3567, %v3572
      %v3604 = vmul.f32 %v3568, %v3572
      %v3605 = vadd.f32 %v3505, %v3573
      %v3606 = vadd.f32 %v3506, %v3574
      %v3607 = vadd.f32 %v3507, %v3575
      %v3608 = vadd.f32 %v3508, %v3576
      %v3609 = vadd.f32 %v3509, %v3577
      %v3610 = vadd.f32 %v3510, %v3578
      %v3611 = vadd.f32 %v3511, %v3579
      %v3612 = vadd.f32 %v3512, %v3580
      %v3613 = vadd.f32 %v3513, %v3581
      %v3614 = vadd.f32 %v3514, %v3582
      %v3615 = vadd.f32 %v3515, %v3583
      %v3616 = vadd.f32 %v3516, %v3584
      %v3617 = vadd.f32 %v3517, %v3585
      %v3618 = vadd.f32 %v3518, %v3586
      %v3619 = vadd.f32 %v3519, %v3587
      %v3620 = vadd.f32 %v3520, %v3588
      %v3621 = vadd.f32 %v3521, %v3589
      %v3622 = vadd.f32 %v3522, %v3590
      %v3623 = vadd.f32 %v3523, %v3591
      %v3624 = vadd.f32 %v3524, %v3592
      %v3625 = vadd.f32 %v3525, %v3593
      %v3626 = vadd.f32 %v3526, %v3594
      %v3627 = vadd.f32 %v3527, %v3595
      %v3628 = vadd.f32 %v3528, %v3596
      %v3629 = vadd.f32 %v3529, %v3597
      %v3630 = vadd.f32 %v3530, %v3598
      %v3631 = vadd.f32 %v3531, %v3599
      %v3632 = vadd.f32 %v3532, %v3600
      %v3633 = vadd.f32 %v3533, %v3601
      %v3634 = vadd.f32 %v3534, %v3602
      %v3635 = vadd.f32 %v3535, %v3603
      %v3636 = vadd.f32 %v3536, %v3604
      %v3637 = vld [vmem:[%s5] sm:$0x1]
      %v3639 = vlaneseq
      %v3640 = vshrl.u32 %v3639, 7
      %v3641 = vsub.s32 0, %v3640
      %v3642 = vrot.slane %v3637, %v3641
      %v3644 = vmul.f32 %v3605, %v3642
      %v3645 = vmul.f32 %v3606, %v3642
      %v3646 = vmul.f32 %v3607, %v3642
      %v3647 = vmul.f32 %v3608, %v3642
      %v3648 = vmul.f32 %v3609, %v3642
      %v3649 = vmul.f32 %v3610, %v3642
      %v3650 = vmul.f32 %v3611, %v3642
      %v3651 = vmul.f32 %v3612, %v3642
      %v3652 = vmul.f32 %v3613, %v3642
      %v3653 = vmul.f32 %v3614, %v3642
      %v3654 = vmul.f32 %v3615, %v3642
      %v3655 = vmul.f32 %v3616, %v3642
      %v3656 = vmul.f32 %v3617, %v3642
      %v3657 = vmul.f32 %v3618, %v3642
      %v3658 = vmul.f32 %v3619, %v3642
      %v3659 = vmul.f32 %v3620, %v3642
      %v3660 = vmul.f32 %v3621, %v3642
      %v3661 = vmul.f32 %v3622, %v3642
      %v3662 = vmul.f32 %v3623, %v3642
      %v3663 = vmul.f32 %v3624, %v3642
      %v3664 = vmul.f32 %v3625, %v3642
      %v3665 = vmul.f32 %v3626, %v3642
      %v3666 = vmul.f32 %v3627, %v3642
      %v3667 = vmul.f32 %v3628, %v3642
      %v3668 = vmul.f32 %v3629, %v3642
      %v3669 = vmul.f32 %v3630, %v3642
      %v3670 = vmul.f32 %v3631, %v3642
      %v3671 = vmul.f32 %v3632, %v3642
      %v3672 = vmul.f32 %v3633, %v3642
      %v3673 = vmul.f32 %v3634, %v3642
      %v3674 = vmul.f32 %v3635, %v3642
      %v3675 = vmul.f32 %v3636, %v3642
      %v3676 = vld [vmem:[%s6] sm:$0x1]
      %v3678 = vlaneseq
      %v3679 = vshrl.u32 %v3678, 7
      %v3680 = vsub.s32 0, %v3679
      %v3681 = vrot.slane %v3676, %v3680
      %v3683 = vadd.f32 %v3644, %v3681
      %v3684 = vadd.f32 %v3645, %v3681
      %v3685 = vadd.f32 %v3646, %v3681
      %v3686 = vadd.f32 %v3647, %v3681
      %v3687 = vadd.f32 %v3648, %v3681
      %v3688 = vadd.f32 %v3649, %v3681
      %v3689 = vadd.f32 %v3650, %v3681
      %v3690 = vadd.f32 %v3651, %v3681
      %v3691 = vadd.f32 %v3652, %v3681
      %v3692 = vadd.f32 %v3653, %v3681
      %v3693 = vadd.f32 %v3654, %v3681
      %v3694 = vadd.f32 %v3655, %v3681
      %v3695 = vadd.f32 %v3656, %v3681
      %v3696 = vadd.f32 %v3657, %v3681
      %v3697 = vadd.f32 %v3658, %v3681
      %v3698 = vadd.f32 %v3659, %v3681
      %v3699 = vadd.f32 %v3660, %v3681
      %v3700 = vadd.f32 %v3661, %v3681
      %v3701 = vadd.f32 %v3662, %v3681
      %v3702 = vadd.f32 %v3663, %v3681
      %v3703 = vadd.f32 %v3664, %v3681
      %v3704 = vadd.f32 %v3665, %v3681
      %v3705 = vadd.f32 %v3666, %v3681
      %v3706 = vadd.f32 %v3667, %v3681
      %v3707 = vadd.f32 %v3668, %v3681
      %v3708 = vadd.f32 %v3669, %v3681
      %v3709 = vadd.f32 %v3670, %v3681
      %v3710 = vadd.f32 %v3671, %v3681
      %v3711 = vadd.f32 %v3672, %v3681
      %v3712 = vadd.f32 %v3673, %v3681
      %v3713 = vadd.f32 %v3674, %v3681
      %v3714 = vadd.f32 %v3675, %v3681
      %v3715 = vmax.f32 %v3683, 0.0
      %v3716 = vmax.f32 %v3684, 0.0
      %v3717 = vmax.f32 %v3685, 0.0
      %v3718 = vmax.f32 %v3686, 0.0
      %v3719 = vmax.f32 %v3687, 0.0
      %v3720 = vmax.f32 %v3688, 0.0
      %v3721 = vmax.f32 %v3689, 0.0
      %v3722 = vmax.f32 %v3690, 0.0
      %v3723 = vmax.f32 %v3691, 0.0
      %v3724 = vmax.f32 %v3692, 0.0
      %v3725 = vmax.f32 %v3693, 0.0
      %v3726 = vmax.f32 %v3694, 0.0
      %v3727 = vmax.f32 %v3695, 0.0
      %v3728 = vmax.f32 %v3696, 0.0
      %v3729 = vmax.f32 %v3697, 0.0
      %v3730 = vmax.f32 %v3698, 0.0
      %v3731 = vmax.f32 %v3699, 0.0
      %v3732 = vmax.f32 %v3700, 0.0
      %v3733 = vmax.f32 %v3701, 0.0
      %v3734 = vmax.f32 %v3702, 0.0
      %v3735 = vmax.f32 %v3703, 0.0
      %v3736 = vmax.f32 %v3704, 0.0
      %v3737 = vmax.f32 %v3705, 0.0
      %v3738 = vmax.f32 %v3706, 0.0
      %v3739 = vmax.f32 %v3707, 0.0
      %v3740 = vmax.f32 %v3708, 0.0
      %v3741 = vmax.f32 %v3709, 0.0
      %v3742 = vmax.f32 %v3710, 0.0
      %v3743 = vmax.f32 %v3711, 0.0
      %v3744 = vmax.f32 %v3712, 0.0
      %v3745 = vmax.f32 %v3713, 0.0
      %v3746 = vmax.f32 %v3714, 0.0
      %v3747 = vmin.f32 %v3715, 6.0
      %v3748 = vmin.f32 %v3716, 6.0
      %v3749 = vmin.f32 %v3717, 6.0
      %v3750 = vmin.f32 %v3718, 6.0
      %v3751 = vmin.f32 %v3719, 6.0
      %v3752 = vmin.f32 %v3720, 6.0
      %v3753 = vmin.f32 %v3721, 6.0
      %v3754 = vmin.f32 %v3722, 6.0
      %v3755 = vmin.f32 %v3723, 6.0
      %v3756 = vmin.f32 %v3724, 6.0
      %v3757 = vmin.f32 %v3725, 6.0
      %v3758 = vmin.f32 %v3726, 6.0
      %v3759 = vmin.f32 %v3727, 6.0
      %v3760 = vmin.f32 %v3728, 6.0
      %v3761 = vmin.f32 %v3729, 6.0
      %v3762 = vmin.f32 %v3730, 6.0
      %v3763 = vmin.f32 %v3731, 6.0
      %v3764 = vmin.f32 %v3732, 6.0
      %v3765 = vmin.f32 %v3733, 6.0
      %v3766 = vmin.f32 %v3734, 6.0
      %v3767 = vmin.f32 %v3735, 6.0
      %v3768 = vmin.f32 %v3736, 6.0
      %v3769 = vmin.f32 %v3737, 6.0
      %v3770 = vmin.f32 %v3738, 6.0
      %v3771 = vmin.f32 %v3739, 6.0
      %v3772 = vmin.f32 %v3740, 6.0
      %v3773 = vmin.f32 %v3741, 6.0
      %v3774 = vmin.f32 %v3742, 6.0
      %v3775 = vmin.f32 %v3743, 6.0
      %v3776 = vmin.f32 %v3744, 6.0
      %v3777 = vmin.f32 %v3745, 6.0
      %v3778 = vmin.f32 %v3746, 6.0
      %v3779 = vpack.c.bf16 %v3748, %v3747
      %v3780 = vpack.c.bf16 %v3750, %v3749
      %v3781 = vpack.c.bf16 %v3752, %v3751
      %v3782 = vpack.c.bf16 %v3754, %v3753
      %v3783 = vpack.c.bf16 %v3756, %v3755
      %v3784 = vpack.c.bf16 %v3758, %v3757
      %v3785 = vpack.c.bf16 %v3760, %v3759
      %v3786 = vpack.c.bf16 %v3762, %v3761
      %v3787 = vpack.c.bf16 %v3764, %v3763
      %v3788 = vpack.c.bf16 %v3766, %v3765
      %v3789 = vpack.c.bf16 %v3768, %v3767
      %v3790 = vpack.c.bf16 %v3770, %v3769
      %v3791 = vpack.c.bf16 %v3772, %v3771
      %v3792 = vpack.c.bf16 %v3774, %v3773
      %v3793 = vpack.c.bf16 %v3776, %v3775
      %v3794 = vpack.c.bf16 %v3778, %v3777
      %v3795 = vld [vmem:[%s7] sm:$0xf]
      %v3797 = vsel %vm361, %v3779, 0
      %v3800 = vsel %vm361, %v3780, 0
      %v3803 = vsel %vm361, %v3781, 0
      %v3806 = vsel %vm361, %v3782, 0
      %v3809 = vsel %vm361, %v3783, 0
      %v3812 = vsel %vm361, %v3784, 0
      %v3815 = vsel %vm361, %v3785, 0
      %v3818 = vsel %vm361, %v3786, 0
      %v3821 = vsel %vm361, %v3787, 0
      %v3824 = vsel %vm361, %v3788, 0
      %v3827 = vsel %vm361, %v3789, 0
      %v3830 = vsel %vm361, %v3790, 0
      %v3833 = vsel %vm361, %v3791, 0
      %v3836 = vsel %vm361, %v3792, 0
      %v3839 = vsel %vm361, %v3793, 0
      %v3842 = vsel %vm361, %v3794, 0
      %vm3844 = vcmask 1043456
      %v3846 = vsel %vm3844, %v3795, 0
      %3848 = vmatprep.subr.bf16.mxu0 0
      %3849 = vmatpush1.bf16.msra.mxu0 %v3846
      %3850 = vmatprep.subr.bf16.mxu0 0
      %3851 = vmatpush1.bf16.msra.mxu0 0
      %3852 = vmatprep.subr.bf16.mxu0 0
      %3853 = vmatpush1.bf16.msra.mxu0 0
      %3854 = vmatprep.subr.bf16.mxu0 0
      %3855 = vmatpush1.bf16.msra.mxu0 0
      %3856 = vmatprep.subr.bf16.mxu0 0
      %3857 = vmatpush1.bf16.msra.mxu0 0
      %3858 = vmatprep.subr.bf16.mxu0 0
      %3859 = vmatpush1.bf16.msra.mxu0 0
      %3860 = vmatprep.subr.bf16.mxu0 0
      %3861 = vmatpush1.bf16.msra.mxu0 0
      %3862 = vmatprep.subr.bf16.mxu0 0
      %3863 = vmatpush1.bf16.msra.mxu0 0
      %3864 = vmatprep.subr.bf16.mxu0 0
      %3865 = vmatpush1.bf16.msra.mxu0 0
      %3866 = vmatprep.subr.bf16.mxu0 0
      %3867 = vmatpush1.bf16.msra.mxu0 0
      %3868 = vmatprep.subr.bf16.mxu0 0
      %3869 = vmatpush1.bf16.msra.mxu0 0
      %3870 = vmatprep.subr.bf16.mxu0 0
      %3871 = vmatpush1.bf16.msra.mxu0 0
      %3872 = vmatprep.subr.bf16.mxu0 0
      %3873 = vmatpush1.bf16.msra.mxu0 0
      %3874 = vmatprep.subr.bf16.mxu0 0
      %3875 = vmatpush1.bf16.msra.mxu0 0
      %3876 = vmatprep.subr.bf16.mxu0 0
      %3877 = vmatpush1.bf16.msra.mxu0 0
      %3878 = vmatprep.subr.bf16.mxu0 0
      %3879 = vmatpush1.bf16.msra.mxu0 0
      %3880 = vmatprep.mubr.bf16.mxu0 0
      %3881 = vmatmul.mubr.bf16.gmra.mrb[0].mxu0 %v3797
      %v3882 = vpop.f32.mrb[0].mxu0
      %v3883 = vadd.f32 0.0, %v3882
      %v3884 = vpop.f32.mrb[0].mxu0
      %v3885 = vpop.f32.mrb[0].mxu0
      %v3886 = vadd.f32 0.0, %v3885
      %v3887 = vpop.f32.mrb[0].mxu0
      %3888 = vmatprep.mubr.bf16.mxu0 0
      %3889 = vmatmul.mubr.bf16.gmra.mrb[0].mxu0 %v3800
      %v3890 = vpop.f32.mrb[0].mxu0
      %v3891 = vadd.f32 0.0, %v3890
      %v3892 = vpop.f32.mrb[0].mxu0
      %v3893 = vpop.f32.mrb[0].mxu0
      %v3894 = vadd.f32 0.0, %v3893
      %v3895 = vpop.f32.mrb[0].mxu0
      %3896 = vmatprep.mubr.bf16.mxu0 0
      %3897 = vmatmul.mubr.bf16.gmra.mrb[0].mxu0 %v3803
      %v3898 = vpop.f32.mrb[0].mxu0
      %v3899 = vadd.f32 0.0, %v3898
      %v3900 = vpop.f32.mrb[0].mxu0
      %v3901 = vpop.f32.mrb[0].mxu0
      %v3902 = vadd.f32 0.0, %v3901
      %v3903 = vpop.f32.mrb[0].mxu0
      %3904 = vmatprep.mubr.bf16.mxu0 0
      %3905 = vmatmul.mubr.bf16.gmra.mrb[0].mxu0 %v3806
      %v3906 = vpop.f32.mrb[0].mxu0
      %v3907 = vadd.f32 0.0, %v3906
      %v3908 = vpop.f32.mrb[0].mxu0
      %v3909 = vpop.f32.mrb[0].mxu0
      %v3910 = vadd.f32 0.0, %v3909
      %v3911 = vpop.f32.mrb[0].mxu0
      %3912 = vmatprep.mubr.bf16.mxu0 0
      %3913 = vmatmul.mubr.bf16.gmra.mrb[0].mxu0 %v3809
      %v3914 = vpop.f32.mrb[0].mxu0
      %v3915 = vadd.f32 0.0, %v3914
      %v3916 = vpop.f32.mrb[0].mxu0
      %v3917 = vpop.f32.mrb[0].mxu0
      %v3918 = vadd.f32 0.0, %v3917
      %v3919 = vpop.f32.mrb[0].mxu0
      %3920 = vmatprep.mubr.bf16.mxu0 0
      %3921 = vmatmul.mubr.bf16.gmra.mrb[0].mxu0 %v3812
      %v3922 = vpop.f32.mrb[0].mxu0
      %v3923 = vadd.f32 0.0, %v3922
      %v3924 = vpop.f32.mrb[0].mxu0
      %v3925 = vpop.f32.mrb[0].mxu0
      %v3926 = vadd.f32 0.0, %v3925
      %v3927 = vpop.f32.mrb[0].mxu0
      %3928 = vmatprep.mubr.bf16.mxu0 0
      %3929 = vmatmul.mubr.bf16.gmra.mrb[0].mxu0 %v3815
      %v3930 = vpop.f32.mrb[0].mxu0
      %v3931 = vadd.f32 0.0, %v3930
      %v3932 = vpop.f32.mrb[0].mxu0
      %v3933 = vpop.f32.mrb[0].mxu0
      %v3934 = vadd.f32 0.0, %v3933
      %v3935 = vpop.f32.mrb[0].mxu0
      %3936 = vmatprep.mubr.bf16.mxu0 0
      %3937 = vmatmul.mubr.bf16.gmra.mrb[0].mxu0 %v3818
      %v3938 = vpop.f32.mrb[0].mxu0
      %v3939 = vadd.f32 0.0, %v3938
      %v3940 = vpop.f32.mrb[0].mxu0
      %v3941 = vpop.f32.mrb[0].mxu0
      %v3942 = vadd.f32 0.0, %v3941
      %v3943 = vpop.f32.mrb[0].mxu0
      %3944 = vmatprep.mubr.bf16.mxu0 0
      %3945 = vmatmul.mubr.bf16.gmra.mrb[0].mxu0 %v3821
      %v3946 = vpop.f32.mrb[0].mxu0
      %v3947 = vadd.f32 0.0, %v3946
      %v3948 = vpop.f32.mrb[0].mxu0
      %v3949 = vpop.f32.mrb[0].mxu0
      %v3950 = vadd.f32 0.0, %v3949
      %v3951 = vpop.f32.mrb[0].mxu0
      %3952 = vmatprep.mubr.bf16.mxu0 0
      %3953 = vmatmul.mubr.bf16.gmra.mrb[0].mxu0 %v3824
      %v3954 = vpop.f32.mrb[0].mxu0
      %v3955 = vadd.f32 0.0, %v3954
      %v3956 = vpop.f32.mrb[0].mxu0
      %v3957 = vpop.f32.mrb[0].mxu0
      %v3958 = vadd.f32 0.0, %v3957
      %v3959 = vpop.f32.mrb[0].mxu0
      %3960 = vmatprep.mubr.bf16.mxu0 0
      %3961 = vmatmul.mubr.bf16.gmra.mrb[0].mxu0 %v3827
      %v3962 = vpop.f32.mrb[0].mxu0
      %v3963 = vadd.f32 0.0, %v3962
      %v3964 = vpop.f32.mrb[0].mxu0
      %v3965 = vpop.f32.mrb[0].mxu0
      %v3966 = vadd.f32 0.0, %v3965
      %v3967 = vpop.f32.mrb[0].mxu0
      %3968 = vmatprep.mubr.bf16.mxu0 0
      %3969 = vmatmul.mubr.bf16.gmra.mrb[0].mxu0 %v3830
      %v3970 = vpop.f32.mrb[0].mxu0
      %v3971 = vadd.f32 0.0, %v3970
      %v3972 = vpop.f32.mrb[0].mxu0
      %v3973 = vpop.f32.mrb[0].mxu0
      %v3974 = vadd.f32 0.0, %v3973
      %v3975 = vpop.f32.mrb[0].mxu0
      %3976 = vmatprep.mubr.bf16.mxu0 0
      %3977 = vmatmul.mubr.bf16.gmra.mrb[0].mxu0 %v3833
      %v3978 = vpop.f32.mrb[0].mxu0
      %v3979 = vadd.f32 0.0, %v3978
      %v3980 = vpop.f32.mrb[0].mxu0
      %v3981 = vpop.f32.mrb[0].mxu0
      %v3982 = vadd.f32 0.0, %v3981
      %v3983 = vpop.f32.mrb[0].mxu0
      %3984 = vmatprep.mubr.bf16.mxu0 0
      %3985 = vmatmul.mubr.bf16.gmra.mrb[0].mxu0 %v3836
      %v3986 = vpop.f32.mrb[0].mxu0
      %v3987 = vadd.f32 0.0, %v3986
      %v3988 = vpop.f32.mrb[0].mxu0
      %v3989 = vpop.f32.mrb[0].mxu0
      %v3990 = vadd.f32 0.0, %v3989
      %v3991 = vpop.f32.mrb[0].mxu0
      %3992 = vmatprep.mubr.bf16.mxu0 0
      %3993 = vmatmul.mubr.bf16.gmra.mrb[0].mxu0 %v3839
      %v3994 = vpop.f32.mrb[0].mxu0
      %v3995 = vadd.f32 0.0, %v3994
      %v3996 = vpop.f32.mrb[0].mxu0
      %v3997 = vpop.f32.mrb[0].mxu0
      %v3998 = vadd.f32 0.0, %v3997
      %v3999 = vpop.f32.mrb[0].mxu0
      %4000 = vmatprep.mubr.bf16.mxu0 0
      %4001 = vmatmul.mubr.bf16.gmra.mrb[0].mxu0 %v3842
      %v4002 = vpop.f32.mrb[0].mxu0
      %v4003 = vadd.f32 0.0, %v4002
      %v4004 = vpop.f32.mrb[0].mxu0
      %v4005 = vpop.f32.mrb[0].mxu0
      %v4006 = vadd.f32 0.0, %v4005
      %v4007 = vpop.f32.mrb[0].mxu0
      %4008 = vdwg.mxu0
      %v4009 = vld [vmem:[%s8] sm:$0x1]
      %v4011 = vlaneseq
      %v4012 = vshrl.u32 %v4011, 7
      %v4013 = vsub.s32 0, %v4012
      %v4014 = vrot.slane %v4009, %v4013
      %v4016 = vmul.f32 %v3883, %v4014
      %v4017 = vmul.f32 %v3886, %v4014
      %v4018 = vmul.f32 %v3891, %v4014
      %v4019 = vmul.f32 %v3894, %v4014
      %v4020 = vmul.f32 %v3899, %v4014
      %v4021 = vmul.f32 %v3902, %v4014
      %v4022 = vmul.f32 %v3907, %v4014
      %v4023 = vmul.f32 %v3910, %v4014
      %v4024 = vmul.f32 %v3915, %v4014
      %v4025 = vmul.f32 %v3918, %v4014
      %v4026 = vmul.f32 %v3923, %v4014
      %v4027 = vmul.f32 %v3926, %v4014
      %v4028 = vmul.f32 %v3931, %v4014
      %v4029 = vmul.f32 %v3934, %v4014
      %v4030 = vmul.f32 %v3939, %v4014
      %v4031 = vmul.f32 %v3942, %v4014
      %v4032 = vmul.f32 %v3947, %v4014
      %v4033 = vmul.f32 %v3950, %v4014
      %v4034 = vmul.f32 %v3955, %v4014
      %v4035 = vmul.f32 %v3958, %v4014
      %v4036 = vmul.f32 %v3963, %v4014
      %v4037 = vmul.f32 %v3966, %v4014
      %v4038 = vmul.f32 %v3971, %v4014
      %v4039 = vmul.f32 %v3974, %v4014
      %v4040 = vmul.f32 %v3979, %v4014
      %v4041 = vmul.f32 %v3982, %v4014
      %v4042 = vmul.f32 %v3987, %v4014
      %v4043 = vmul.f32 %v3990, %v4014
      %v4044 = vmul.f32 %v3995, %v4014
      %v4045 = vmul.f32 %v3998, %v4014
      %v4046 = vmul.f32 %v4003, %v4014
      %v4047 = vmul.f32 %v4006, %v4014
      %v4048 = vld [vmem:[%s9] sm:$0x1]
      %v4050 = vlaneseq
      %v4051 = vshrl.u32 %v4050, 7
      %v4052 = vsub.s32 0, %v4051
      %v4053 = vrot.slane %v4048, %v4052
      %v4055 = vadd.f32 %v4016, %v4053
      %v4056 = vadd.f32 %v4017, %v4053
      %v4057 = vadd.f32 %v4018, %v4053
      %v4058 = vadd.f32 %v4019, %v4053
      %v4059 = vadd.f32 %v4020, %v4053
      %v4060 = vadd.f32 %v4021, %v4053
      %v4061 = vadd.f32 %v4022, %v4053
      %v4062 = vadd.f32 %v4023, %v4053
      %v4063 = vadd.f32 %v4024, %v4053
      %v4064 = vadd.f32 %v4025, %v4053
      %v4065 = vadd.f32 %v4026, %v4053
      %v4066 = vadd.f32 %v4027, %v4053
      %v4067 = vadd.f32 %v4028, %v4053
      %v4068 = vadd.f32 %v4029, %v4053
      %v4069 = vadd.f32 %v4030, %v4053
      %v4070 = vadd.f32 %v4031, %v4053
      %v4071 = vadd.f32 %v4032, %v4053
      %v4072 = vadd.f32 %v4033, %v4053
      %v4073 = vadd.f32 %v4034, %v4053
      %v4074 = vadd.f32 %v4035, %v4053
      %v4075 = vadd.f32 %v4036, %v4053
      %v4076 = vadd.f32 %v4037, %v4053
      %v4077 = vadd.f32 %v4038, %v4053
      %v4078 = vadd.f32 %v4039, %v4053
      %v4079 = vadd.f32 %v4040, %v4053
      %v4080 = vadd.f32 %v4041, %v4053
      %v4081 = vadd.f32 %v4042, %v4053
      %v4082 = vadd.f32 %v4043, %v4053
      %v4083 = vadd.f32 %v4044, %v4053
      %v4084 = vadd.f32 %v4045, %v4053
      %v4085 = vadd.f32 %v4046, %v4053
      %v4086 = vadd.f32 %v4047, %v4053
      %v4087 = vld [vmem:[%s354] sm:$0xff]
      %v4088 = vld [vmem:[%s354 + $0x8] sm:$0xff]
      %v4089 = vld [vmem:[%s354 + $0x10] sm:$0xff]
      %v4090 = vld [vmem:[%s354 + $0x18] sm:$0xff]
      %v4091 = vld [vmem:[%s354 + $0x20] sm:$0xff]
      %v4092 = vld [vmem:[%s354 + $0x28] sm:$0xff]
      %v4093 = vld [vmem:[%s354 + $0x30] sm:$0xff]
      %v4094 = vld [vmem:[%s354 + $0x38] sm:$0xff]
      %v4095 = vld [vmem:[%s354 + $0x40] sm:$0xff]
      %v4096 = vld [vmem:[%s354 + $0x48] sm:$0xff]
      %v4097 = vld [vmem:[%s354 + $0x50] sm:$0xff]
      %v4098 = vld [vmem:[%s354 + $0x58] sm:$0xff]
      %v4099 = vld [vmem:[%s354 + $0x60] sm:$0xff]
      %v4100 = vld [vmem:[%s354 + $0x68] sm:$0xff]
      %v4101 = vld [vmem:[%s354 + $0x70] sm:$0xff]
      %v4102 = vld [vmem:[%s354 + $0x78] sm:$0xff]
      %v4103 = vld [vmem:[%s354 + $0x80] sm:$0xff]
      %v4104 = vld [vmem:[%s354 + $0x88] sm:$0xff]
      %v4105 = vld [vmem:[%s354 + $0x90] sm:$0xff]
      %v4106 = vld [vmem:[%s354 + $0x98] sm:$0xff]
      %v4107 = vld [vmem:[%s354 + $0xa0] sm:$0xff]
      %v4108 = vld [vmem:[%s354 + $0xa8] sm:$0xff]
      %v4109 = vld [vmem:[%s354 + $0xb0] sm:$0xff]
      %v4110 = vld [vmem:[%s354 + $0xb8] sm:$0xff]
      %v4111 = vld [vmem:[%s354 + $0xc0] sm:$0xff]
      %v4112 = vld [vmem:[%s354 + $0xc8] sm:$0xff]
      %v4113 = vld [vmem:[%s354 + $0xd0] sm:$0xff]
      %v4114 = vld [vmem:[%s354 + $0xd8] sm:$0xff]
      %v4115 = vld [vmem:[%s354 + $0xe0] sm:$0xff]
      %v4116 = vld [vmem:[%s354 + $0xe8] sm:$0xff]
      %v4117 = vld [vmem:[%s354 + $0xf0] sm:$0xff]
      %v4118 = vld [vmem:[%s354 + $0xf8] sm:$0xff]
      %v4119 = vadd.f32 %v4055, %v4087
      %v4120 = vadd.f32 %v4056, %v4088
      %v4121 = vadd.f32 %v4057, %v4089
      %v4122 = vadd.f32 %v4058, %v4090
      %v4123 = vadd.f32 %v4059, %v4091
      %v4124 = vadd.f32 %v4060, %v4092
      %v4125 = vadd.f32 %v4061, %v4093
      %v4126 = vadd.f32 %v4062, %v4094
      %v4127 = vadd.f32 %v4063, %v4095
      %v4128 = vadd.f32 %v4064, %v4096
      %v4129 = vadd.f32 %v4065, %v4097
      %v4130 = vadd.f32 %v4066, %v4098
      %v4131 = vadd.f32 %v4067, %v4099
      %v4132 = vadd.f32 %v4068, %v4100
      %v4133 = vadd.f32 %v4069, %v4101
      %v4134 = vadd.f32 %v4070, %v4102
      %v4135 = vadd.f32 %v4071, %v4103
      %v4136 = vadd.f32 %v4072, %v4104
      %v4137 = vadd.f32 %v4073, %v4105
      %v4138 = vadd.f32 %v4074, %v4106
      %v4139 = vadd.f32 %v4075, %v4107
      %v4140 = vadd.f32 %v4076, %v4108
      %v4141 = vadd.f32 %v4077, %v4109
      %v4142 = vadd.f32 %v4078, %v4110
      %v4143 = vadd.f32 %v4079, %v4111
      %v4144 = vadd.f32 %v4080, %v4112
      %v4145 = vadd.f32 %v4081, %v4113
      %v4146 = vadd.f32 %v4082, %v4114
      %v4147 = vadd.f32 %v4083, %v4115
      %v4148 = vadd.f32 %v4084, %v4116
      %v4149 = vadd.f32 %v4085, %v4117
      %v4150 = vadd.f32 %v4086, %v4118
      %4151 = vst.msk [vmem:[%s359] sm:$0xff] %vm532, %v4119
      %4152 = vst.msk [vmem:[%s359 + $0x8] sm:$0xff] %vm532, %v4120
      %4153 = vst.msk [vmem:[%s359 + $0x10] sm:$0xff] %vm532, %v4121
      %4154 = vst.msk [vmem:[%s359 + $0x18] sm:$0xff] %vm532, %v4122
      %4155 = vst.msk [vmem:[%s359 + $0x20] sm:$0xff] %vm532, %v4123
      %4156 = vst.msk [vmem:[%s359 + $0x28] sm:$0xff] %vm532, %v4124
      %4157 = vst.msk [vmem:[%s359 + $0x30] sm:$0xff] %vm532, %v4125
      %4158 = vst.msk [vmem:[%s359 + $0x38] sm:$0xff] %vm532, %v4126
      %4159 = vst.msk [vmem:[%s359 + $0x40] sm:$0xff] %vm532, %v4127
      %4160 = vst.msk [vmem:[%s359 + $0x48] sm:$0xff] %vm532, %v4128
      %4161 = vst.msk [vmem:[%s359 + $0x50] sm:$0xff] %vm532, %v4129
      %4162 = vst.msk [vmem:[%s359 + $0x58] sm:$0xff] %vm532, %v4130
      %4163 = vst.msk [vmem:[%s359 + $0x60] sm:$0xff] %vm532, %v4131
      %4164 = vst.msk [vmem:[%s359 + $0x68] sm:$0xff] %vm532, %v4132
      %4165 = vst.msk [vmem:[%s359 + $0x70] sm:$0xff] %vm532, %v4133
      %4166 = vst.msk [vmem:[%s359 + $0x78] sm:$0xff] %vm532, %v4134
      %4167 = vst.msk [vmem:[%s359 + $0x80] sm:$0xff] %vm532, %v4135
      %4168 = vst.msk [vmem:[%s359 + $0x88] sm:$0xff] %vm532, %v4136
      %4169 = vst.msk [vmem:[%s359 + $0x90] sm:$0xff] %vm532, %v4137
      %4170 = vst.msk [vmem:[%s359 + $0x98] sm:$0xff] %vm532, %v4138
      %4171 = vst.msk [vmem:[%s359 + $0xa0] sm:$0xff] %vm532, %v4139
      %4172 = vst.msk [vmem:[%s359 + $0xa8] sm:$0xff] %vm532, %v4140
      %4173 = vst.msk [vmem:[%s359 + $0xb0] sm:$0xff] %vm532, %v4141
      %4174 = vst.msk [vmem:[%s359 + $0xb8] sm:$0xff] %vm532, %v4142
      %4175 = vst.msk [vmem:[%s359 + $0xc0] sm:$0xff] %vm532, %v4143
      %4176 = vst.msk [vmem:[%s359 + $0xc8] sm:$0xff] %vm532, %v4144
      %4177 = vst.msk [vmem:[%s359 + $0xd0] sm:$0xff] %vm532, %v4145
      %4178 = vst.msk [vmem:[%s359 + $0xd8] sm:$0xff] %vm532, %v4146
      %4179 = vst.msk [vmem:[%s359 + $0xe0] sm:$0xff] %vm532, %v4147
      %4180 = vst.msk [vmem:[%s359 + $0xe8] sm:$0xff] %vm532, %v4148
      %4181 = vst.msk [vmem:[%s359 + $0xf0] sm:$0xff] %vm532, %v4149
      %4182 = vst.msk [vmem:[%s359 + $0xf8] sm:$0xff] %vm532, %v4150
      %p4183 = scmp.lt.s32.totalorder %s21, 1
      %s4184 = scalar_select %p4183, %s21, 1
      %s4185 = smul.addr %s4184, 32
      %s4186 = smul.addr %s4185, 8
      %s4187 = scalar_lea.vmem %s10, %s4186
      // Predicated region
      $region61: #{tpu_custom_call.1} parent=59 // pred_check
        %p4188 = pneg %p254
      $region62: #{tpu_custom_call.1} parent=59 // pred_check_branch
        %4190 = sbr.rel (%p4188) target = $region64
      $region63: #{tpu_custom_call.1} parent=59 // pred_region
        _
      $region64: #{tpu_custom_call.1} parent=59 // pred_fallthru
        _
    $region60: #{tpu_custom_call.1} parent=5 // pred_fallthru
      _
    %p4191 = scmp.le.s32.totalorder 2, %s16
    // Predicated region
    $region65: #{tpu_custom_call.1} parent=5 // pred_check
      %p4192 = pneg %p4191
    $region66: #{tpu_custom_call.1} parent=5 // pred_check_branch
      %4194 = sbr.rel (%p4192) target = $region68
    $region67: #{tpu_custom_call.1} parent=5 // pred_region
      %s4195 = ssub.s32 %s16, 2
      // Predicated region
      $region69: #{tpu_custom_call.1} parent=67 // pred_check
        %p4196 = pneg %p260
      $region70: #{tpu_custom_call.1} parent=67 // pred_check_branch
        %4198 = sbr.rel (%p4196) target = $region72
      $region71: #{tpu_custom_call.1} parent=67 // pred_region
        %p4199 = scmp.lt.s32.totalorder %s22, 1
        %s4200 = scalar_select %p4199, %s22, 1
        %s4201 = smul.addr %s4200, 32
        %s4202 = smul.addr %s4201, 8
        %s4203 = scalar_lea.vmem %s10, %s4202
      $region72: #{tpu_custom_call.1} parent=67 // pred_fallthru
        _
    $region68: #{tpu_custom_call.1} parent=5 // pred_fallthru
      _
  $region6: #{tpu_custom_call.1} parent=0 // loop_footer
    %s20 = sadd.s32 1, %s16
  $region7: #{tpu_custom_call.1} parent=0 // loop_footer_branch
    %15 = sbr.rel target = $region3
  $region8: #{tpu_custom_call.1} parent=0 // loop_exit
    _

</llo_original>
